<compile_context>
chip_gen: v6e
topology: v6e:2x2x1
jax: 0.10.0
libtpu: 0.0.40
codegen_flags: <defaults>
</compile_context>

<pallas_src>
import jax
import jax.numpy as jnp
from jax import lax
from jax.experimental import pallas as pl
from jax.experimental.pallas import tpu as pltpu


def _phi_gru_att_kernel(
    x_ref,                                   # (T, Bp, n_mel) f32, time-major
    wcat_ref, bconv_ref,                     # (3*n_mel, C) bf16, (1, C) f32
    wskip_ref, bskip_ref,                    # (n_mel, C) bf16, (1, C) f32
    wih_ref, bi_ref,                         # (C, 3H) bf16, (1, 3H) f32 (b_ih + folded b_hr/b_hz)
    whh_ref, bhn_ref,                        # (H, 3H) bf16, (1, H) f32
    wp_ref, bp_ref,                          # (H, H) bf16, (1, H) f32
    wa_ref, ba_ref,                          # (1, H) f32, (1, 1) f32
    wfc_ref, bfc_ref,                        # (H, NCP) bf16, (1, NCP) f32
    out_ref,                                 # (Bp, NCP) f32
    gi_scr, seq_scr,                         # VMEM (T*Bp, 3H) f32, (T*Bp, H) f32
):
    f32 = jnp.float32
    bf16 = jnp.bfloat16

    x = x_ref[...]                           # (T, Bp, n_mel)
    T, Bp, n_mel = x.shape
    H = bhn_ref.shape[1]
    R = T * Bp

    # ---- per-utterance mean / unbiased-std normalization (torch semantics) ---
    n_elem = T * n_mel
    mean = jnp.sum(jnp.sum(x, axis=2, keepdims=True), axis=0, keepdims=True) / n_elem
    c = x - mean                                              # (T, Bp, n_mel)
    var = (jnp.sum(jnp.sum(c * c, axis=2, keepdims=True), axis=0, keepdims=True)
           / (n_elem - 1))
    inv_std = pl.reciprocal(jnp.sqrt(var) + 1e-5, approx=True)  # (1, Bp, 1) EUP
    xn = c * inv_std

    # Flatten to (T*Bp, n_mel): row = t*Bp + b (time-major, batch interleaved).
    xn2 = xn.reshape(R, n_mel)
    xn2_bf = xn2.astype(bf16)

    # ---- phi: k=3 conv over time as ONE matmul with K = 3*n_mel --------------
    # Shifting by one time step == shifting by Bp rows in the flat layout; the
    # first / last Bp rows are zero-padded (Conv1d padding=1 semantics).
    # Cast to bf16 BEFORE the lane concatenate (halves XLU lane traffic).
    zpad = jnp.zeros((Bp, n_mel), bf16)
    prev2 = jnp.concatenate([zpad, xn2_bf[:R - Bp]], axis=0)
    nxt2 = jnp.concatenate([xn2_bf[Bp:], zpad], axis=0)
    cat2 = jnp.concatenate([prev2, xn2_bf, nxt2], axis=-1)    # (R, 3*n_mel) bf16

    conv = jnp.dot(cat2, wcat_ref[...], preferred_element_type=f32) + bconv_ref[...]
    conv = jnp.maximum(conv, 0.0)
    skip = jnp.dot(xn2_bf, wskip_ref[...], preferred_element_type=f32) + bskip_ref[...]
    phi = jnp.maximum(conv + skip, 0.0)                       # (R, C) f32

    # ---- GRU input projection: ONE packed (C, 3H) matmul into ONE scratch ----
    gi_scr[...] = (jnp.dot(phi.astype(bf16), wih_ref[...], preferred_element_type=f32)
                   + bi_ref[...])                             # (R, 3H) f32

    whh = whh_ref[...]                                        # (H, 3H) bf16
    bhn = bhn_ref[...]                                        # (1, H) f32

    # ---- GRU recurrence: T unrolled steps over a (Bp, H) f32 hidden state ----
    # One bf16 matmul (single MXU pass, N=3H) and one gi load per step; all
    # gate math stays f32.
    def gru_step(t, h):
        base = pl.multiple_of(t * Bp, Bp)
        gi = gi_scr[pl.ds(base, Bp), :]                       # (Bp, 3H)
        gh = jnp.dot(h.astype(bf16), whh, preferred_element_type=f32)  # (Bp, 3H)
        r = jax.nn.sigmoid(gi[:, :H] + gh[:, :H])
        z = jax.nn.sigmoid(gi[:, H:2 * H] + gh[:, H:2 * H])
        n = jnp.tanh(gi[:, 2 * H:] + r * (gh[:, 2 * H:] + bhn))
        h_new = (1.0 - z) * n + z * h
        seq_scr[pl.ds(base, Bp), :] = h_new                   # full 8-sublane store
        return h_new

    lax.fori_loop(0, T, gru_step, jnp.zeros((Bp, H), f32), unroll=True)

    # ---- projection -----------------------------------------------------------
    seq = seq_scr[...]                                        # (R, H)
    proj = (jnp.dot(seq.astype(bf16), wp_ref[...], preferred_element_type=f32)
            + bp_ref[...])                                    # (R, H) f32
    proj3 = proj.reshape(T, Bp, H)

    # ---- attention over time: lane-major (Bp, T) softmax ---------------------
    scores = jnp.sum(proj3 * wa_ref[...], axis=-1) + ba_ref[...]   # (T, Bp)
    scores_bt = scores.T                                           # (Bp, T), T on lanes
    m = jnp.max(scores_bt, axis=-1, keepdims=True)
    e = jnp.exp(scores_bt - m)
    alpha_bt = e * pl.reciprocal(jnp.sum(e, axis=-1, keepdims=True), approx=True)
    alpha = alpha_bt.T.reshape(T, Bp, 1)                      # back to time-major
    context = jnp.sum(alpha * proj3, axis=0)                  # (Bp, H)

    # ---- classifier (lane-dense: NCP = 128-padded num_classes) ----------------
    out_ref[...] = (
        jnp.dot(context.astype(bf16), wfc_ref[...], preferred_element_type=f32)
        + bfc_ref[...]
    )


def _full_spec(a):
    nd = a.ndim
    return pl.BlockSpec(a.shape, lambda i, _nd=nd: (0,) * _nd)


def phi_gru_att_forward(x, weights):
    (w0t, w1t, w2t, bconv, wskipt, bskip, wiht, bih, whht, bhh,
     wpt, bp, wa, ba, wfct, bfc) = weights
    B, n_mel, T = x.shape
    H = whht.shape[0]
    NC = wfct.shape[1]
    f32, bf16 = jnp.float32, jnp.bfloat16

    Bp = ((B + 7) // 8) * 8                        # pad batch to a sublane group
    NCP = max(128, ((NC + 127) // 128) * 128)      # lane-dense classifier output
    R = T * Bp

    # Wrapper-side layout plumbing: time-major, batch-padded input.
    xk = jnp.transpose(x, (2, 0, 1)).astype(f32)   # (T, B, n_mel)
    xk = jnp.pad(xk, ((0, 0), (0, Bp - B), (0, 0)))

    # Weight re-packing: stacked conv taps, PACKED GRU gate blocks (r|z|n),
    # folded recurrent biases for r/z, bf16 matmul operands everywhere,
    # lane-padded classifier.
    wcat = jnp.concatenate([w0t, w1t, w2t], axis=0).astype(bf16)   # (3*n_mel, C)
    bi = jnp.concatenate([bih[:, :2 * H] + bhh[:, :2 * H],         # fold b_hr, b_hz
                          bih[:, 2 * H:]], axis=1)                 # (1, 3H)
    bhn = bhh[:, 2 * H:]                                           # b_hn stays inside r*(.)
    wfc_pad = jnp.zeros((H, NCP), f32).at[:, :NC].set(wfct).astype(bf16)
    bfc_pad = jnp.zeros((1, NCP), f32).at[:, :NC].set(bfc)

    inputs = (
        xk,
        wcat, bconv,
        wskipt.astype(bf16), bskip,
        wiht.astype(bf16), bi,
        whht.astype(bf16), bhn,
        wpt.astype(bf16), bp,
        wa.T, ba,
        wfc_pad, bfc_pad,
    )

    out = pl.pallas_call(
        _phi_gru_att_kernel,
        out_shape=jax.ShapeDtypeStruct((Bp, NCP), f32),
        grid_spec=pltpu.PrefetchScalarGridSpec(
            num_scalar_prefetch=0,
            grid=(1,),                              # batch folded into the kernel
            in_specs=[_full_spec(a) for a in inputs],
            out_specs=pl.BlockSpec((Bp, NCP), lambda i: (0, 0)),
            scratch_shapes=[pltpu.VMEM((R, 3 * H), f32),   # merged gi scratch
                            pltpu.VMEM((R, H), f32)],      # GRU output sequence
        ),
        compiler_params=pltpu.CompilerParams(
            dimension_semantics=("arbitrary",),
        ),
    )(*inputs)
    return out[:B, :NC]


def reference_forward(x, weights, ff_dtype=jnp.float32):
    """Pure-JAX reference.  `ff_dtype` controls the precision of all matmul
    operands (the kernel uses bfloat16 operands with f32 accumulation for the
    feed-forward AND recurrent matmuls)."""
    (w0t, w1t, w2t, bconv, wskipt, bskip, wiht, bih, whht, bhh,
     wpt, bp, wa, ba, wfct, bfc) = weights
    B, n_mel, T = x.shape
    H = whht.shape[0]
    f32 = jnp.float32

    def ffdot(a, b):
        return jnp.dot(a.astype(ff_dtype), b.astype(ff_dtype),
                       preferred_element_type=f32)

    mean = jnp.mean(x, axis=(1, 2), keepdims=True)
    var = jnp.sum((x - mean) ** 2, axis=(1, 2), keepdims=True) / (n_mel * T - 1)
    xn = (x - mean) / (jnp.sqrt(var) + 1e-5)
    xt = jnp.transpose(xn, (0, 2, 1))                        # (B, T, n_mel)
    prev = jnp.concatenate([jnp.zeros_like(xt[:, :1]), xt[:, :-1]], axis=1)
    nxt = jnp.concatenate([xt[:, 1:], jnp.zeros_like(xt[:, :1])], axis=1)
    conv = jnp.maximum(
        ffdot(prev, w0t) + ffdot(xt, w1t) + ffdot(nxt, w2t) + bconv, 0.0)
    phi = jnp.maximum(conv + ffdot(xt, wskipt) + bskip, 0.0)  # (B, T, C)
    gi = ffdot(phi, wiht) + bih                               # (B, T, 3H)

    def step(h, gi_t):
        gh = ffdot(h, whht) + bhh                             # recurrent matmul in ff_dtype
        r = jax.nn.sigmoid(gi_t[:, :H] + gh[:, :H])
        z = jax.nn.sigmoid(gi_t[:, H:2 * H] + gh[:, H:2 * H])
        n = jnp.tanh(gi_t[:, 2 * H:] + r * gh[:, 2 * H:])
        h_new = (1.0 - z) * n + z * h
        return h_new, h_new

    _, seq = lax.scan(step, jnp.zeros((B, H), f32), jnp.transpose(gi, (1, 0, 2)))
    seq = jnp.transpose(seq, (1, 0, 2))                       # (B, T, H)
    proj = ffdot(seq, wpt) + bp
    alpha = jax.nn.softmax(proj @ wa + ba, axis=1)            # (B, T, 1)
    context = jnp.sum(alpha * proj, axis=1)                   # (B, H)
    return ffdot(context, wfct) + bfc


if __name__ == "__main__":
    B, n_mel, T = 2, 64, 16
    C = 32            # matchbox base_filters
    H = 32            # hidden_dim
    num_classes = 10

    key = jax.random.PRNGKey(0)
    ks = jax.random.split(key, 17)

    def init(k, shape, scale=0.1):
        return (scale * jax.random.normal(k, shape)).astype(jnp.float32)

    weights = [
        init(ks[0], (n_mel, C)),          # w0_t   (conv tap t-1)
        init(ks[1], (n_mel, C)),          # w1_t   (conv tap t)
        init(ks[2], (n_mel, C)),          # w2_t   (conv tap t+1)
        init(ks[3], (1, C)),              # b_conv
        init(ks[4], (n_mel, C)),          # wskip_t
        init(ks[5], (1, C)),              # b_skip
        init(ks[6], (C, 3 * H)),          # W_ih^T (r|z|n)
        init(ks[7], (1, 3 * H)),          # b_ih
        init(ks[8], (H, 3 * H)),          # W_hh^T (r|z|n)
        init(ks[9], (1, 3 * H)),          # b_hh
        init(ks[10], (H, H)),             # projection W^T
        init(ks[11], (1, H)),             # projection b
        init(ks[12], (H, 1)),             # attention w
        init(ks[13], (1, 1)),             # attention b
        init(ks[14], (H, num_classes)),   # fc W^T
        init(ks[15], (1, num_classes)),   # fc b
    ]

    x = jax.random.normal(ks[16], (B, n_mel, T), dtype=jnp.float32)

    out = jax.block_until_ready(phi_gru_att_forward(x, weights))
    ref_mixed = jax.block_until_ready(
        reference_forward(x, weights, ff_dtype=jnp.bfloat16))
    ref_f32 = jax.block_until_ready(reference_forward(x, weights))

    assert out.shape == (B, num_classes)
    assert bool(jnp.all(jnp.isfinite(out)))
    # Tight check against a reference with the same bf16 matmul-operand policy
    # (feed-forward AND recurrent).
    assert jnp.allclose(out, ref_mixed, atol=5e-3, rtol=5e-3), (out, ref_mixed)
    # Looser check against the pure-f32 reference (bf16 MXU operand rounding
    # compounds over the T-step recurrence).
    assert jnp.allclose(out, ref_f32, atol=5e-2, rtol=5e-2), (out, ref_f32)
    print("KERNEL_OK")
</pallas_src>

<mosaic_0001>
module attributes {stable_mosaic.version = 11 : i64} {
  func.func @_phi_gru_att_kernel(%arg0: i32, %arg1: memref<16x8x64xf32, #tpu.memory_space<vmem>>, %arg2: memref<192x32xbf16, #tpu.memory_space<vmem>>, %arg3: memref<1x32xf32, #tpu.memory_space<vmem>>, %arg4: memref<64x32xbf16, #tpu.memory_space<vmem>>, %arg5: memref<1x32xf32, #tpu.memory_space<vmem>>, %arg6: memref<32x96xbf16, #tpu.memory_space<vmem>>, %arg7: memref<1x96xf32, #tpu.memory_space<vmem>>, %arg8: memref<32x96xbf16, #tpu.memory_space<vmem>>, %arg9: memref<1x32xf32, #tpu.memory_space<vmem>>, %arg10: memref<32x32xbf16, #tpu.memory_space<vmem>>, %arg11: memref<1x32xf32, #tpu.memory_space<vmem>>, %arg12: memref<1x32xf32, #tpu.memory_space<vmem>>, %arg13: memref<1x1xf32, #tpu.memory_space<vmem>>, %arg14: memref<32x128xbf16, #tpu.memory_space<vmem>>, %arg15: memref<1x128xf32, #tpu.memory_space<vmem>>, %arg16: memref<8x128xf32, #tpu.memory_space<vmem>>, %arg17: memref<128x96xf32, #tpu.memory_space<vmem>>, %arg18: memref<128x32xf32, #tpu.memory_space<vmem>>) attributes {dimension_semantics = [#tpu.dimension_semantics<arbitrary>], iteration_bounds = array<i64: 1>, scalar_prefetch = 0 : i64, scratch_operands = 2 : i64, tpu.core_type = #tpu.core_type<tc>, window_params = [{pipeline_mode = #tpu.pipeline_mode<synchronous>, transform_indices = @transform_0, window_bounds = array<i64: 16, 8, 64>}, {pipeline_mode = #tpu.pipeline_mode<synchronous>, transform_indices = @transform_1, window_bounds = array<i64: 192, 32>}, {pipeline_mode = #tpu.pipeline_mode<synchronous>, transform_indices = @transform_2, window_bounds = array<i64: 1, 32>}, {pipeline_mode = #tpu.pipeline_mode<synchronous>, transform_indices = @transform_3, window_bounds = array<i64: 64, 32>}, {pipeline_mode = #tpu.pipeline_mode<synchronous>, transform_indices = @transform_4, window_bounds = array<i64: 1, 32>}, {pipeline_mode = #tpu.pipeline_mode<synchronous>, transform_indices = @transform_5, window_bounds = array<i64: 32, 96>}, {pipeline_mode = #tpu.pipeline_mode<synchronous>, transform_indices = @transform_6, window_bounds = array<i64: 1, 96>}, {pipeline_mode = #tpu.pipeline_mode<synchronous>, transform_indices = @transform_7, window_bounds = array<i64: 32, 96>}, {pipeline_mode = #tpu.pipeline_mode<synchronous>, transform_indices = @transform_8, window_bounds = array<i64: 1, 32>}, {pipeline_mode = #tpu.pipeline_mode<synchronous>, transform_indices = @transform_9, window_bounds = array<i64: 32, 32>}, {pipeline_mode = #tpu.pipeline_mode<synchronous>, transform_indices = @transform_10, window_bounds = array<i64: 1, 32>}, {pipeline_mode = #tpu.pipeline_mode<synchronous>, transform_indices = @transform_11, window_bounds = array<i64: 1, 32>}, {pipeline_mode = #tpu.pipeline_mode<synchronous>, transform_indices = @transform_12, window_bounds = array<i64: 1, 1>}, {pipeline_mode = #tpu.pipeline_mode<synchronous>, transform_indices = @transform_13, window_bounds = array<i64: 32, 128>}, {pipeline_mode = #tpu.pipeline_mode<synchronous>, transform_indices = @transform_14, window_bounds = array<i64: 1, 128>}, {pipeline_mode = #tpu.pipeline_mode<synchronous>, transform_indices = @transform_15, window_bounds = array<i64: 8, 128>}]} {
    %c0 = arith.constant 0 : index
    %c0_0 = arith.constant 0 : index
    %c0_1 = arith.constant 0 : index
    %0 = vector.load %arg1[%c0, %c0_0, %c0_1] : memref<16x8x64xf32, #tpu.memory_space<vmem>>, vector<16x8x64xf32>
    %cst = arith.constant dense<0.000000e+00> : vector<16x8xf32>
    %1 = vector.multi_reduction <add>, %0, %cst [2] : vector<16x8x64xf32> to vector<16x8xf32>
    %2 = vector.shape_cast %1 : vector<16x8xf32> to vector<16x8x1xf32>
    %cst_2 = arith.constant dense<0.000000e+00> : vector<8x1xf32>
    %3 = vector.multi_reduction <add>, %2, %cst_2 [0] : vector<16x8x1xf32> to vector<8x1xf32>
    %4 = vector.shape_cast %3 : vector<8x1xf32> to vector<1x8x1xf32>
    %cst_3 = arith.constant 1.024000e+03 : f32
    %5 = vector.broadcast %cst_3 : f32 to vector<1x8x1xf32>
    %6 = arith.divf %4, %5 : vector<1x8x1xf32>
    %7 = vector.broadcast %6 : vector<1x8x1xf32> to vector<16x8x64xf32>
    %8 = arith.subf %0, %7 : vector<16x8x64xf32>
    %9 = arith.mulf %8, %8 : vector<16x8x64xf32>
    %cst_4 = arith.constant dense<0.000000e+00> : vector<16x8xf32>
    %10 = vector.multi_reduction <add>, %9, %cst_4 [2] : vector<16x8x64xf32> to vector<16x8xf32>
    %11 = vector.shape_cast %10 : vector<16x8xf32> to vector<16x8x1xf32>
    %cst_5 = arith.constant dense<0.000000e+00> : vector<8x1xf32>
    %12 = vector.multi_reduction <add>, %11, %cst_5 [0] : vector<16x8x1xf32> to vector<8x1xf32>
    %13 = vector.shape_cast %12 : vector<8x1xf32> to vector<1x8x1xf32>
    %cst_6 = arith.constant 1.023000e+03 : f32
    %14 = vector.broadcast %cst_6 : f32 to vector<1x8x1xf32>
    %15 = arith.divf %13, %14 : vector<1x8x1xf32>
    %16 = math.sqrt %15 : vector<1x8x1xf32>
    %cst_7 = arith.constant 9.99999974E-6 : f32
    %17 = vector.broadcast %cst_7 : f32 to vector<1x8x1xf32>
    %18 = arith.addf %16, %17 : vector<1x8x1xf32>
    %19 = tpu.reciprocal %18 {approx = true} : vector<1x8x1xf32> -> vector<1x8x1xf32>
    %20 = vector.broadcast %19 : vector<1x8x1xf32> to vector<16x8x64xf32>
    %21 = arith.mulf %8, %20 : vector<16x8x64xf32>
    %22 = vector.shape_cast %21 : vector<16x8x64xf32> to vector<128x64xf32>
    %23 = arith.truncf %22 : vector<128x64xf32> to vector<128x64xbf16>
    %cst_8 = arith.constant 0.000000e+00 : bf16
    %24 = vector.broadcast %cst_8 : bf16 to vector<8x64xbf16>
    %25 = vector.extract_strided_slice %23 {offsets = [0, 0], sizes = [120, 64], strides = [1, 1]} : vector<128x64xbf16> to vector<120x64xbf16>
    %26 = tpu.concatenate %24, %25 in 0 : vector<8x64xbf16>, vector<120x64xbf16> -> vector<128x64xbf16>
    %27 = vector.extract_strided_slice %23 {offsets = [8, 0], sizes = [120, 64], strides = [1, 1]} : vector<128x64xbf16> to vector<120x64xbf16>
    %28 = tpu.concatenate %27, %24 in 0 : vector<120x64xbf16>, vector<8x64xbf16> -> vector<128x64xbf16>
    %29 = tpu.concatenate %26, %23, %28 in 1 : vector<128x64xbf16>, vector<128x64xbf16>, vector<128x64xbf16> -> vector<128x192xbf16>
    %c0_9 = arith.constant 0 : index
    %c0_10 = arith.constant 0 : index
    %30 = vector.load %arg2[%c0_9, %c0_10] : memref<192x32xbf16, #tpu.memory_space<vmem>>, vector<192x32xbf16>
    %cst_11 = arith.constant dense<0.000000e+00> : vector<128x32xf32>
    %31 = tpu.matmul %29, %30, %cst_11 {dimension_numbers = #tpu.dot_dimension_numbers<[1], [0], [0], [1], [0, 0, 1, 1], [], []>} : vector<128x192xbf16>, vector<192x32xbf16>, vector<128x32xf32> -> vector<128x32xf32>
    %c0_12 = arith.constant 0 : index
    %c0_13 = arith.constant 0 : index
    %32 = vector.load %arg3[%c0_12, %c0_13] : memref<1x32xf32, #tpu.memory_space<vmem>>, vector<1x32xf32>
    %33 = vector.broadcast %32 : vector<1x32xf32> to vector<128x32xf32>
    %34 = arith.addf %31, %33 : vector<128x32xf32>
    %cst_14 = arith.constant 0.000000e+00 : f32
    %35 = vector.broadcast %cst_14 : f32 to vector<128x32xf32>
    %36 = arith.maximumf %34, %35 : vector<128x32xf32>
    %c0_15 = arith.constant 0 : index
    %c0_16 = arith.constant 0 : index
    %37 = vector.load %arg4[%c0_15, %c0_16] : memref<64x32xbf16, #tpu.memory_space<vmem>>, vector<64x32xbf16>
    %cst_17 = arith.constant dense<0.000000e+00> : vector<128x32xf32>
    %38 = tpu.matmul %23, %37, %cst_17 {dimension_numbers = #tpu.dot_dimension_numbers<[1], [0], [0], [1], [0, 0, 1, 1], [], []>} : vector<128x64xbf16>, vector<64x32xbf16>, vector<128x32xf32> -> vector<128x32xf32>
    %c0_18 = arith.constant 0 : index
    %c0_19 = arith.constant 0 : index
    %39 = vector.load %arg5[%c0_18, %c0_19] : memref<1x32xf32, #tpu.memory_space<vmem>>, vector<1x32xf32>
    %40 = vector.broadcast %39 : vector<1x32xf32> to vector<128x32xf32>
    %41 = arith.addf %38, %40 : vector<128x32xf32>
    %42 = arith.addf %36, %41 : vector<128x32xf32>
    %cst_20 = arith.constant 0.000000e+00 : f32
    %43 = vector.broadcast %cst_20 : f32 to vector<128x32xf32>
    %44 = arith.maximumf %42, %43 : vector<128x32xf32>
    %45 = arith.truncf %44 : vector<128x32xf32> to vector<128x32xbf16>
    %c0_21 = arith.constant 0 : index
    %c0_22 = arith.constant 0 : index
    %46 = vector.load %arg6[%c0_21, %c0_22] : memref<32x96xbf16, #tpu.memory_space<vmem>>, vector<32x96xbf16>
    %cst_23 = arith.constant dense<0.000000e+00> : vector<128x96xf32>
    %47 = tpu.matmul %45, %46, %cst_23 {dimension_numbers = #tpu.dot_dimension_numbers<[1], [0], [0], [1], [0, 0, 1, 1], [], []>} : vector<128x32xbf16>, vector<32x96xbf16>, vector<128x96xf32> -> vector<128x96xf32>
    %c0_24 = arith.constant 0 : index
    %c0_25 = arith.constant 0 : index
    %48 = vector.load %arg7[%c0_24, %c0_25] : memref<1x96xf32, #tpu.memory_space<vmem>>, vector<1x96xf32>
    %49 = vector.broadcast %48 : vector<1x96xf32> to vector<128x96xf32>
    %50 = arith.addf %47, %49 : vector<128x96xf32>
    %c0_26 = arith.constant 0 : index
    %c0_27 = arith.constant 0 : index
    %51 = vector.load %arg17[%c0_26, %c0_27] : memref<128x96xf32, #tpu.memory_space<vmem>>, vector<128x96xf32>
    tpu.vector_store %arg17[%c0_26, %c0_27], %50 {strides = array<i32>} : memref<128x96xf32, #tpu.memory_space<vmem>>, vector<128x96xf32>,
    %c0_28 = arith.constant 0 : index
    %c0_29 = arith.constant 0 : index
    %52 = vector.load %arg8[%c0_28, %c0_29] : memref<32x96xbf16, #tpu.memory_space<vmem>>, vector<32x96xbf16>
    %c0_30 = arith.constant 0 : index
    %c0_31 = arith.constant 0 : index
    %53 = vector.load %arg9[%c0_30, %c0_31] : memref<1x32xf32, #tpu.memory_space<vmem>>, vector<1x32xf32>
    %cst_32 = arith.constant 0.000000e+00 : f32
    %54 = vector.broadcast %cst_32 : f32 to vector<8x32xf32>
    %c0_i32 = arith.constant 0 : i32
    %c8_i32 = arith.constant 8 : i32
    %55 = arith.muli %c0_i32, %c8_i32 : i32
    %56 = tpu.assume_multiple %55, 8 : i32
    %57 = arith.index_cast %56 : i32 to index
    %c0_33 = arith.constant 0 : index
    %58 = vector.load %arg17[%57, %c0_33] : memref<128x96xf32, #tpu.memory_space<vmem>>, vector<8x96xf32>
    %59 = arith.truncf %54 : vector<8x32xf32> to vector<8x32xbf16>
    %cst_34 = arith.constant dense<0.000000e+00> : vector<8x96xf32>
    %60 = tpu.matmul %59, %52, %cst_34 {dimension_numbers = #tpu.dot_dimension_numbers<[1], [0], [0], [1], [0, 0, 1, 1], [], []>} : vector<8x32xbf16>, vector<32x96xbf16>, vector<8x96xf32> -> vector<8x96xf32>
    %61 = vector.extract_strided_slice %58 {offsets = [0, 0], sizes = [8, 32], strides = [1, 1]} : vector<8x96xf32> to vector<8x32xf32>
    %62 = vector.extract_strided_slice %60 {offsets = [0, 0], sizes = [8, 32], strides = [1, 1]} : vector<8x96xf32> to vector<8x32xf32>
    %63 = arith.addf %61, %62 : vector<8x32xf32>
    %64 = arith.negf %63 : vector<8x32xf32>
    %65 = math.exp %64 : vector<8x32xf32>
    %cst_35 = arith.constant 1.000000e+00 : f32
    %66 = vector.broadcast %cst_35 : f32 to vector<8x32xf32>
    %67 = arith.addf %66, %65 : vector<8x32xf32>
    %68 = arith.divf %66, %67 : vector<8x32xf32>
    %69 = vector.extract_strided_slice %58 {offsets = [0, 32], sizes = [8, 32], strides = [1, 1]} : vector<8x96xf32> to vector<8x32xf32>
    %70 = vector.extract_strided_slice %60 {offsets = [0, 32], sizes = [8, 32], strides = [1, 1]} : vector<8x96xf32> to vector<8x32xf32>
    %71 = arith.addf %69, %70 : vector<8x32xf32>
    %72 = arith.negf %71 : vector<8x32xf32>
    %73 = math.exp %72 : vector<8x32xf32>
    %cst_36 = arith.constant 1.000000e+00 : f32
    %74 = vector.broadcast %cst_36 : f32 to vector<8x32xf32>
    %75 = arith.addf %74, %73 : vector<8x32xf32>
    %76 = arith.divf %74, %75 : vector<8x32xf32>
    %77 = vector.extract_strided_slice %58 {offsets = [0, 64], sizes = [8, 32], strides = [1, 1]} : vector<8x96xf32> to vector<8x32xf32>
    %78 = vector.extract_strided_slice %60 {offsets = [0, 64], sizes = [8, 32], strides = [1, 1]} : vector<8x96xf32> to vector<8x32xf32>
    %79 = vector.broadcast %53 : vector<1x32xf32> to vector<8x32xf32>
    %80 = arith.addf %78, %79 : vector<8x32xf32>
    %81 = arith.mulf %68, %80 : vector<8x32xf32>
    %82 = arith.addf %77, %81 : vector<8x32xf32>
    %83 = math.tanh %82 : vector<8x32xf32>
    %cst_37 = arith.constant 1.000000e+00 : f32
    %84 = vector.broadcast %cst_37 : f32 to vector<8x32xf32>
    %85 = arith.subf %84, %76 : vector<8x32xf32>
    %86 = arith.mulf %85, %83 : vector<8x32xf32>
    %87 = arith.mulf %76, %54 : vector<8x32xf32>
    %88 = arith.addf %86, %87 : vector<8x32xf32>
    %89 = arith.index_cast %56 : i32 to index
    %c0_38 = arith.constant 0 : index
    %90 = vector.load %arg18[%89, %c0_38] : memref<128x32xf32, #tpu.memory_space<vmem>>, vector<8x32xf32>
    tpu.vector_store %arg18[%89, %c0_38], %88 {strides = array<i32>} : memref<128x32xf32, #tpu.memory_space<vmem>>, vector<8x32xf32>,
    %c1_i32 = arith.constant 1 : i32
    %c8_i32_39 = arith.constant 8 : i32
    %91 = arith.muli %c1_i32, %c8_i32_39 : i32
    %92 = tpu.assume_multiple %91, 8 : i32
    %93 = arith.index_cast %92 : i32 to index
    %c0_40 = arith.constant 0 : index
    %94 = vector.load %arg17[%93, %c0_40] : memref<128x96xf32, #tpu.memory_space<vmem>>, vector<8x96xf32>
    %95 = arith.truncf %88 : vector<8x32xf32> to vector<8x32xbf16>
    %cst_41 = arith.constant dense<0.000000e+00> : vector<8x96xf32>
    %96 = tpu.matmul %95, %52, %cst_41 {dimension_numbers = #tpu.dot_dimension_numbers<[1], [0], [0], [1], [0, 0, 1, 1], [], []>} : vector<8x32xbf16>, vector<32x96xbf16>, vector<8x96xf32> -> vector<8x96xf32>
    %97 = vector.extract_strided_slice %94 {offsets = [0, 0], sizes = [8, 32], strides = [1, 1]} : vector<8x96xf32> to vector<8x32xf32>
    %98 = vector.extract_strided_slice %96 {offsets = [0, 0], sizes = [8, 32], strides = [1, 1]} : vector<8x96xf32> to vector<8x32xf32>
    %99 = arith.addf %97, %98 : vector<8x32xf32>
    %100 = arith.negf %99 : vector<8x32xf32>
    %101 = math.exp %100 : vector<8x32xf32>
    %cst_42 = arith.constant 1.000000e+00 : f32
    %102 = vector.broadcast %cst_42 : f32 to vector<8x32xf32>
    %103 = arith.addf %102, %101 : vector<8x32xf32>
    %104 = arith.divf %102, %103 : vector<8x32xf32>
    %105 = vector.extract_strided_slice %94 {offsets = [0, 32], sizes = [8, 32], strides = [1, 1]} : vector<8x96xf32> to vector<8x32xf32>
    %106 = vector.extract_strided_slice %96 {offsets = [0, 32], sizes = [8, 32], strides = [1, 1]} : vector<8x96xf32> to vector<8x32xf32>
    %107 = arith.addf %105, %106 : vector<8x32xf32>
    %108 = arith.negf %107 : vector<8x32xf32>
    %109 = math.exp %108 : vector<8x32xf32>
    %cst_43 = arith.constant 1.000000e+00 : f32
    %110 = vector.broadcast %cst_43 : f32 to vector<8x32xf32>
    %111 = arith.addf %110, %109 : vector<8x32xf32>
    %112 = arith.divf %110, %111 : vector<8x32xf32>
    %113 = vector.extract_strided_slice %94 {offsets = [0, 64], sizes = [8, 32], strides = [1, 1]} : vector<8x96xf32> to vector<8x32xf32>
    %114 = vector.extract_strided_slice %96 {offsets = [0, 64], sizes = [8, 32], strides = [1, 1]} : vector<8x96xf32> to vector<8x32xf32>
    %115 = vector.broadcast %53 : vector<1x32xf32> to vector<8x32xf32>
    %116 = arith.addf %114, %115 : vector<8x32xf32>
    %117 = arith.mulf %104, %116 : vector<8x32xf32>
    %118 = arith.addf %113, %117 : vector<8x32xf32>
    %119 = math.tanh %118 : vector<8x32xf32>
    %cst_44 = arith.constant 1.000000e+00 : f32
    %120 = vector.broadcast %cst_44 : f32 to vector<8x32xf32>
    %121 = arith.subf %120, %112 : vector<8x32xf32>
    %122 = arith.mulf %121, %119 : vector<8x32xf32>
    %123 = arith.mulf %112, %88 : vector<8x32xf32>
    %124 = arith.addf %122, %123 : vector<8x32xf32>
    %125 = arith.index_cast %92 : i32 to index
    %c0_45 = arith.constant 0 : index
    %126 = vector.load %arg18[%125, %c0_45] : memref<128x32xf32, #tpu.memory_space<vmem>>, vector<8x32xf32>
    tpu.vector_store %arg18[%125, %c0_45], %124 {strides = array<i32>} : memref<128x32xf32, #tpu.memory_space<vmem>>, vector<8x32xf32>,
    %c2_i32 = arith.constant 2 : i32
    %c8_i32_46 = arith.constant 8 : i32
    %127 = arith.muli %c2_i32, %c8_i32_46 : i32
    %128 = tpu.assume_multiple %127, 8 : i32
    %129 = arith.index_cast %128 : i32 to index
    %c0_47 = arith.constant 0 : index
    %130 = vector.load %arg17[%129, %c0_47] : memref<128x96xf32, #tpu.memory_space<vmem>>, vector<8x96xf32>
    %131 = arith.truncf %124 : vector<8x32xf32> to vector<8x32xbf16>
    %cst_48 = arith.constant dense<0.000000e+00> : vector<8x96xf32>
    %132 = tpu.matmul %131, %52, %cst_48 {dimension_numbers = #tpu.dot_dimension_numbers<[1], [0], [0], [1], [0, 0, 1, 1], [], []>} : vector<8x32xbf16>, vector<32x96xbf16>, vector<8x96xf32> -> vector<8x96xf32>
    %133 = vector.extract_strided_slice %130 {offsets = [0, 0], sizes = [8, 32], strides = [1, 1]} : vector<8x96xf32> to vector<8x32xf32>
    %134 = vector.extract_strided_slice %132 {offsets = [0, 0], sizes = [8, 32], strides = [1, 1]} : vector<8x96xf32> to vector<8x32xf32>
    %135 = arith.addf %133, %134 : vector<8x32xf32>
    %136 = arith.negf %135 : vector<8x32xf32>
    %137 = math.exp %136 : vector<8x32xf32>
    %cst_49 = arith.constant 1.000000e+00 : f32
    %138 = vector.broadcast %cst_49 : f32 to vector<8x32xf32>
    %139 = arith.addf %138, %137 : vector<8x32xf32>
    %140 = arith.divf %138, %139 : vector<8x32xf32>
    %141 = vector.extract_strided_slice %130 {offsets = [0, 32], sizes = [8, 32], strides = [1, 1]} : vector<8x96xf32> to vector<8x32xf32>
    %142 = vector.extract_strided_slice %132 {offsets = [0, 32], sizes = [8, 32], strides = [1, 1]} : vector<8x96xf32> to vector<8x32xf32>
    %143 = arith.addf %141, %142 : vector<8x32xf32>
    %144 = arith.negf %143 : vector<8x32xf32>
    %145 = math.exp %144 : vector<8x32xf32>
    %cst_50 = arith.constant 1.000000e+00 : f32
    %146 = vector.broadcast %cst_50 : f32 to vector<8x32xf32>
    %147 = arith.addf %146, %145 : vector<8x32xf32>
    %148 = arith.divf %146, %147 : vector<8x32xf32>
    %149 = vector.extract_strided_slice %130 {offsets = [0, 64], sizes = [8, 32], strides = [1, 1]} : vector<8x96xf32> to vector<8x32xf32>
    %150 = vector.extract_strided_slice %132 {offsets = [0, 64], sizes = [8, 32], strides = [1, 1]} : vector<8x96xf32> to vector<8x32xf32>
    %151 = vector.broadcast %53 : vector<1x32xf32> to vector<8x32xf32>
    %152 = arith.addf %150, %151 : vector<8x32xf32>
    %153 = arith.mulf %140, %152 : vector<8x32xf32>
    %154 = arith.addf %149, %153 : vector<8x32xf32>
    %155 = math.tanh %154 : vector<8x32xf32>
    %cst_51 = arith.constant 1.000000e+00 : f32
    %156 = vector.broadcast %cst_51 : f32 to vector<8x32xf32>
    %157 = arith.subf %156, %148 : vector<8x32xf32>
    %158 = arith.mulf %157, %155 : vector<8x32xf32>
    %159 = arith.mulf %148, %124 : vector<8x32xf32>
    %160 = arith.addf %158, %159 : vector<8x32xf32>
    %161 = arith.index_cast %128 : i32 to index
    %c0_52 = arith.constant 0 : index
    %162 = vector.load %arg18[%161, %c0_52] : memref<128x32xf32, #tpu.memory_space<vmem>>, vector<8x32xf32>
    tpu.vector_store %arg18[%161, %c0_52], %160 {strides = array<i32>} : memref<128x32xf32, #tpu.memory_space<vmem>>, vector<8x32xf32>,
    %c3_i32 = arith.constant 3 : i32
    %c8_i32_53 = arith.constant 8 : i32
    %163 = arith.muli %c3_i32, %c8_i32_53 : i32
    %164 = tpu.assume_multiple %163, 8 : i32
    %165 = arith.index_cast %164 : i32 to index
    %c0_54 = arith.constant 0 : index
    %166 = vector.load %arg17[%165, %c0_54] : memref<128x96xf32, #tpu.memory_space<vmem>>, vector<8x96xf32>
    %167 = arith.truncf %160 : vector<8x32xf32> to vector<8x32xbf16>
    %cst_55 = arith.constant dense<0.000000e+00> : vector<8x96xf32>
    %168 = tpu.matmul %167, %52, %cst_55 {dimension_numbers = #tpu.dot_dimension_numbers<[1], [0], [0], [1], [0, 0, 1, 1], [], []>} : vector<8x32xbf16>, vector<32x96xbf16>, vector<8x96xf32> -> vector<8x96xf32>
    %169 = vector.extract_strided_slice %166 {offsets = [0, 0], sizes = [8, 32], strides = [1, 1]} : vector<8x96xf32> to vector<8x32xf32>
    %170 = vector.extract_strided_slice %168 {offsets = [0, 0], sizes = [8, 32], strides = [1, 1]} : vector<8x96xf32> to vector<8x32xf32>
    %171 = arith.addf %169, %170 : vector<8x32xf32>
    %172 = arith.negf %171 : vector<8x32xf32>
    %173 = math.exp %172 : vector<8x32xf32>
    %cst_56 = arith.constant 1.000000e+00 : f32
    %174 = vector.broadcast %cst_56 : f32 to vector<8x32xf32>
    %175 = arith.addf %174, %173 : vector<8x32xf32>
    %176 = arith.divf %174, %175 : vector<8x32xf32>
    %177 = vector.extract_strided_slice %166 {offsets = [0, 32], sizes = [8, 32], strides = [1, 1]} : vector<8x96xf32> to vector<8x32xf32>
    %178 = vector.extract_strided_slice %168 {offsets = [0, 32], sizes = [8, 32], strides = [1, 1]} : vector<8x96xf32> to vector<8x32xf32>
    %179 = arith.addf %177, %178 : vector<8x32xf32>
    %180 = arith.negf %179 : vector<8x32xf32>
    %181 = math.exp %180 : vector<8x32xf32>
    %cst_57 = arith.constant 1.000000e+00 : f32
    %182 = vector.broadcast %cst_57 : f32 to vector<8x32xf32>
    %183 = arith.addf %182, %181 : vector<8x32xf32>
    %184 = arith.divf %182, %183 : vector<8x32xf32>
    %185 = vector.extract_strided_slice %166 {offsets = [0, 64], sizes = [8, 32], strides = [1, 1]} : vector<8x96xf32> to vector<8x32xf32>
    %186 = vector.extract_strided_slice %168 {offsets = [0, 64], sizes = [8, 32], strides = [1, 1]} : vector<8x96xf32> to vector<8x32xf32>
    %187 = vector.broadcast %53 : vector<1x32xf32> to vector<8x32xf32>
    %188 = arith.addf %186, %187 : vector<8x32xf32>
    %189 = arith.mulf %176, %188 : vector<8x32xf32>
    %190 = arith.addf %185, %189 : vector<8x32xf32>
    %191 = math.tanh %190 : vector<8x32xf32>
    %cst_58 = arith.constant 1.000000e+00 : f32
    %192 = vector.broadcast %cst_58 : f32 to vector<8x32xf32>
    %193 = arith.subf %192, %184 : vector<8x32xf32>
    %194 = arith.mulf %193, %191 : vector<8x32xf32>
    %195 = arith.mulf %184, %160 : vector<8x32xf32>
    %196 = arith.addf %194, %195 : vector<8x32xf32>
    %197 = arith.index_cast %164 : i32 to index
    %c0_59 = arith.constant 0 : index
    %198 = vector.load %arg18[%197, %c0_59] : memref<128x32xf32, #tpu.memory_space<vmem>>, vector<8x32xf32>
    tpu.vector_store %arg18[%197, %c0_59], %196 {strides = array<i32>} : memref<128x32xf32, #tpu.memory_space<vmem>>, vector<8x32xf32>,
    %c4_i32 = arith.constant 4 : i32
    %c8_i32_60 = arith.constant 8 : i32
    %199 = arith.muli %c4_i32, %c8_i32_60 : i32
    %200 = tpu.assume_multiple %199, 8 : i32
    %201 = arith.index_cast %200 : i32 to index
    %c0_61 = arith.constant 0 : index
    %202 = vector.load %arg17[%201, %c0_61] : memref<128x96xf32, #tpu.memory_space<vmem>>, vector<8x96xf32>
    %203 = arith.truncf %196 : vector<8x32xf32> to vector<8x32xbf16>
    %cst_62 = arith.constant dense<0.000000e+00> : vector<8x96xf32>
    %204 = tpu.matmul %203, %52, %cst_62 {dimension_numbers = #tpu.dot_dimension_numbers<[1], [0], [0], [1], [0, 0, 1, 1], [], []>} : vector<8x32xbf16>, vector<32x96xbf16>, vector<8x96xf32> -> vector<8x96xf32>
    %205 = vector.extract_strided_slice %202 {offsets = [0, 0], sizes = [8, 32], strides = [1, 1]} : vector<8x96xf32> to vector<8x32xf32>
    %206 = vector.extract_strided_slice %204 {offsets = [0, 0], sizes = [8, 32], strides = [1, 1]} : vector<8x96xf32> to vector<8x32xf32>
    %207 = arith.addf %205, %206 : vector<8x32xf32>
    %208 = arith.negf %207 : vector<8x32xf32>
    %209 = math.exp %208 : vector<8x32xf32>
    %cst_63 = arith.constant 1.000000e+00 : f32
    %210 = vector.broadcast %cst_63 : f32 to vector<8x32xf32>
    %211 = arith.addf %210, %209 : vector<8x32xf32>
    %212 = arith.divf %210, %211 : vector<8x32xf32>
    %213 = vector.extract_strided_slice %202 {offsets = [0, 32], sizes = [8, 32], strides = [1, 1]} : vector<8x96xf32> to vector<8x32xf32>
    %214 = vector.extract_strided_slice %204 {offsets = [0, 32], sizes = [8, 32], strides = [1, 1]} : vector<8x96xf32> to vector<8x32xf32>
    %215 = arith.addf %213, %214 : vector<8x32xf32>
    %216 = arith.negf %215 : vector<8x32xf32>
    %217 = math.exp %216 : vector<8x32xf32>
    %cst_64 = arith.constant 1.000000e+00 : f32
    %218 = vector.broadcast %cst_64 : f32 to vector<8x32xf32>
    %219 = arith.addf %218, %217 : vector<8x32xf32>
    %220 = arith.divf %218, %219 : vector<8x32xf32>
    %221 = vector.extract_strided_slice %202 {offsets = [0, 64], sizes = [8, 32], strides = [1, 1]} : vector<8x96xf32> to vector<8x32xf32>
    %222 = vector.extract_strided_slice %204 {offsets = [0, 64], sizes = [8, 32], strides = [1, 1]} : vector<8x96xf32> to vector<8x32xf32>
    %223 = vector.broadcast %53 : vector<1x32xf32> to vector<8x32xf32>
    %224 = arith.addf %222, %223 : vector<8x32xf32>
    %225 = arith.mulf %212, %224 : vector<8x32xf32>
    %226 = arith.addf %221, %225 : vector<8x32xf32>
    %227 = math.tanh %226 : vector<8x32xf32>
    %cst_65 = arith.constant 1.000000e+00 : f32
    %228 = vector.broadcast %cst_65 : f32 to vector<8x32xf32>
    %229 = arith.subf %228, %220 : vector<8x32xf32>
    %230 = arith.mulf %229, %227 : vector<8x32xf32>
    %231 = arith.mulf %220, %196 : vector<8x32xf32>
    %232 = arith.addf %230, %231 : vector<8x32xf32>
    %233 = arith.index_cast %200 : i32 to index
    %c0_66 = arith.constant 0 : index
    %234 = vector.load %arg18[%233, %c0_66] : memref<128x32xf32, #tpu.memory_space<vmem>>, vector<8x32xf32>
    tpu.vector_store %arg18[%233, %c0_66], %232 {strides = array<i32>} : memref<128x32xf32, #tpu.memory_space<vmem>>, vector<8x32xf32>,
    %c5_i32 = arith.constant 5 : i32
    %c8_i32_67 = arith.constant 8 : i32
    %235 = arith.muli %c5_i32, %c8_i32_67 : i32
    %236 = tpu.assume_multiple %235, 8 : i32
    %237 = arith.index_cast %236 : i32 to index
    %c0_68 = arith.constant 0 : index
    %238 = vector.load %arg17[%237, %c0_68] : memref<128x96xf32, #tpu.memory_space<vmem>>, vector<8x96xf32>
    %239 = arith.truncf %232 : vector<8x32xf32> to vector<8x32xbf16>
    %cst_69 = arith.constant dense<0.000000e+00> : vector<8x96xf32>
    %240 = tpu.matmul %239, %52, %cst_69 {dimension_numbers = #tpu.dot_dimension_numbers<[1], [0], [0], [1], [0, 0, 1, 1], [], []>} : vector<8x32xbf16>, vector<32x96xbf16>, vector<8x96xf32> -> vector<8x96xf32>
    %241 = vector.extract_strided_slice %238 {offsets = [0, 0], sizes = [8, 32], strides = [1, 1]} : vector<8x96xf32> to vector<8x32xf32>
    %242 = vector.extract_strided_slice %240 {offsets = [0, 0], sizes = [8, 32], strides = [1, 1]} : vector<8x96xf32> to vector<8x32xf32>
    %243 = arith.addf %241, %242 : vector<8x32xf32>
    %244 = arith.negf %243 : vector<8x32xf32>
    %245 = math.exp %244 : vector<8x32xf32>
    %cst_70 = arith.constant 1.000000e+00 : f32
    %246 = vector.broadcast %cst_70 : f32 to vector<8x32xf32>
    %247 = arith.addf %246, %245 : vector<8x32xf32>
    %248 = arith.divf %246, %247 : vector<8x32xf32>
    %249 = vector.extract_strided_slice %238 {offsets = [0, 32], sizes = [8, 32], strides = [1, 1]} : vector<8x96xf32> to vector<8x32xf32>
    %250 = vector.extract_strided_slice %240 {offsets = [0, 32], sizes = [8, 32], strides = [1, 1]} : vector<8x96xf32> to vector<8x32xf32>
    %251 = arith.addf %249, %250 : vector<8x32xf32>
    %252 = arith.negf %251 : vector<8x32xf32>
    %253 = math.exp %252 : vector<8x32xf32>
    %cst_71 = arith.constant 1.000000e+00 : f32
    %254 = vector.broadcast %cst_71 : f32 to vector<8x32xf32>
    %255 = arith.addf %254, %253 : vector<8x32xf32>
    %256 = arith.divf %254, %255 : vector<8x32xf32>
    %257 = vector.extract_strided_slice %238 {offsets = [0, 64], sizes = [8, 32], strides = [1, 1]} : vector<8x96xf32> to vector<8x32xf32>
    %258 = vector.extract_strided_slice %240 {offsets = [0, 64], sizes = [8, 32], strides = [1, 1]} : vector<8x96xf32> to vector<8x32xf32>
    %259 = vector.broadcast %53 : vector<1x32xf32> to vector<8x32xf32>
    %260 = arith.addf %258, %259 : vector<8x32xf32>
    %261 = arith.mulf %248, %260 : vector<8x32xf32>
    %262 = arith.addf %257, %261 : vector<8x32xf32>
    %263 = math.tanh %262 : vector<8x32xf32>
    %cst_72 = arith.constant 1.000000e+00 : f32
    %264 = vector.broadcast %cst_72 : f32 to vector<8x32xf32>
    %265 = arith.subf %264, %256 : vector<8x32xf32>
    %266 = arith.mulf %265, %263 : vector<8x32xf32>
    %267 = arith.mulf %256, %232 : vector<8x32xf32>
    %268 = arith.addf %266, %267 : vector<8x32xf32>
    %269 = arith.index_cast %236 : i32 to index
    %c0_73 = arith.constant 0 : index
    %270 = vector.load %arg18[%269, %c0_73] : memref<128x32xf32, #tpu.memory_space<vmem>>, vector<8x32xf32>
    tpu.vector_store %arg18[%269, %c0_73], %268 {strides = array<i32>} : memref<128x32xf32, #tpu.memory_space<vmem>>, vector<8x32xf32>,
    %c6_i32 = arith.constant 6 : i32
    %c8_i32_74 = arith.constant 8 : i32
    %271 = arith.muli %c6_i32, %c8_i32_74 : i32
    %272 = tpu.assume_multiple %271, 8 : i32
    %273 = arith.index_cast %272 : i32 to index
    %c0_75 = arith.constant 0 : index
    %274 = vector.load %arg17[%273, %c0_75] : memref<128x96xf32, #tpu.memory_space<vmem>>, vector<8x96xf32>
    %275 = arith.truncf %268 : vector<8x32xf32> to vector<8x32xbf16>
    %cst_76 = arith.constant dense<0.000000e+00> : vector<8x96xf32>
    %276 = tpu.matmul %275, %52, %cst_76 {dimension_numbers = #tpu.dot_dimension_numbers<[1], [0], [0], [1], [0, 0, 1, 1], [], []>} : vector<8x32xbf16>, vector<32x96xbf16>, vector<8x96xf32> -> vector<8x96xf32>
    %277 = vector.extract_strided_slice %274 {offsets = [0, 0], sizes = [8, 32], strides = [1, 1]} : vector<8x96xf32> to vector<8x32xf32>
    %278 = vector.extract_strided_slice %276 {offsets = [0, 0], sizes = [8, 32], strides = [1, 1]} : vector<8x96xf32> to vector<8x32xf32>
    %279 = arith.addf %277, %278 : vector<8x32xf32>
    %280 = arith.negf %279 : vector<8x32xf32>
    %281 = math.exp %280 : vector<8x32xf32>
    %cst_77 = arith.constant 1.000000e+00 : f32
    %282 = vector.broadcast %cst_77 : f32 to vector<8x32xf32>
    %283 = arith.addf %282, %281 : vector<8x32xf32>
    %284 = arith.divf %282, %283 : vector<8x32xf32>
    %285 = vector.extract_strided_slice %274 {offsets = [0, 32], sizes = [8, 32], strides = [1, 1]} : vector<8x96xf32> to vector<8x32xf32>
    %286 = vector.extract_strided_slice %276 {offsets = [0, 32], sizes = [8, 32], strides = [1, 1]} : vector<8x96xf32> to vector<8x32xf32>
    %287 = arith.addf %285, %286 : vector<8x32xf32>
    %288 = arith.negf %287 : vector<8x32xf32>
    %289 = math.exp %288 : vector<8x32xf32>
    %cst_78 = arith.constant 1.000000e+00 : f32
    %290 = vector.broadcast %cst_78 : f32 to vector<8x32xf32>
    %291 = arith.addf %290, %289 : vector<8x32xf32>
    %292 = arith.divf %290, %291 : vector<8x32xf32>
    %293 = vector.extract_strided_slice %274 {offsets = [0, 64], sizes = [8, 32], strides = [1, 1]} : vector<8x96xf32> to vector<8x32xf32>
    %294 = vector.extract_strided_slice %276 {offsets = [0, 64], sizes = [8, 32], strides = [1, 1]} : vector<8x96xf32> to vector<8x32xf32>
    %295 = vector.broadcast %53 : vector<1x32xf32> to vector<8x32xf32>
    %296 = arith.addf %294, %295 : vector<8x32xf32>
    %297 = arith.mulf %284, %296 : vector<8x32xf32>
    %298 = arith.addf %293, %297 : vector<8x32xf32>
    %299 = math.tanh %298 : vector<8x32xf32>
    %cst_79 = arith.constant 1.000000e+00 : f32
    %300 = vector.broadcast %cst_79 : f32 to vector<8x32xf32>
    %301 = arith.subf %300, %292 : vector<8x32xf32>
    %302 = arith.mulf %301, %299 : vector<8x32xf32>
    %303 = arith.mulf %292, %268 : vector<8x32xf32>
    %304 = arith.addf %302, %303 : vector<8x32xf32>
    %305 = arith.index_cast %272 : i32 to index
    %c0_80 = arith.constant 0 : index
    %306 = vector.load %arg18[%305, %c0_80] : memref<128x32xf32, #tpu.memory_space<vmem>>, vector<8x32xf32>
    tpu.vector_store %arg18[%305, %c0_80], %304 {strides = array<i32>} : memref<128x32xf32, #tpu.memory_space<vmem>>, vector<8x32xf32>,
    %c7_i32 = arith.constant 7 : i32
    %c8_i32_81 = arith.constant 8 : i32
    %307 = arith.muli %c7_i32, %c8_i32_81 : i32
    %308 = tpu.assume_multiple %307, 8 : i32
    %309 = arith.index_cast %308 : i32 to index
    %c0_82 = arith.constant 0 : index
    %310 = vector.load %arg17[%309, %c0_82] : memref<128x96xf32, #tpu.memory_space<vmem>>, vector<8x96xf32>
    %311 = arith.truncf %304 : vector<8x32xf32> to vector<8x32xbf16>
    %cst_83 = arith.constant dense<0.000000e+00> : vector<8x96xf32>
    %312 = tpu.matmul %311, %52, %cst_83 {dimension_numbers = #tpu.dot_dimension_numbers<[1], [0], [0], [1], [0, 0, 1, 1], [], []>} : vector<8x32xbf16>, vector<32x96xbf16>, vector<8x96xf32> -> vector<8x96xf32>
    %313 = vector.extract_strided_slice %310 {offsets = [0, 0], sizes = [8, 32], strides = [1, 1]} : vector<8x96xf32> to vector<8x32xf32>
    %314 = vector.extract_strided_slice %312 {offsets = [0, 0], sizes = [8, 32], strides = [1, 1]} : vector<8x96xf32> to vector<8x32xf32>
    %315 = arith.addf %313, %314 : vector<8x32xf32>
    %316 = arith.negf %315 : vector<8x32xf32>
    %317 = math.exp %316 : vector<8x32xf32>
    %cst_84 = arith.constant 1.000000e+00 : f32
    %318 = vector.broadcast %cst_84 : f32 to vector<8x32xf32>
    %319 = arith.addf %318, %317 : vector<8x32xf32>
    %320 = arith.divf %318, %319 : vector<8x32xf32>
    %321 = vector.extract_strided_slice %310 {offsets = [0, 32], sizes = [8, 32], strides = [1, 1]} : vector<8x96xf32> to vector<8x32xf32>
    %322 = vector.extract_strided_slice %312 {offsets = [0, 32], sizes = [8, 32], strides = [1, 1]} : vector<8x96xf32> to vector<8x32xf32>
    %323 = arith.addf %321, %322 : vector<8x32xf32>
    %324 = arith.negf %323 : vector<8x32xf32>
    %325 = math.exp %324 : vector<8x32xf32>
    %cst_85 = arith.constant 1.000000e+00 : f32
    %326 = vector.broadcast %cst_85 : f32 to vector<8x32xf32>
    %327 = arith.addf %326, %325 : vector<8x32xf32>
    %328 = arith.divf %326, %327 : vector<8x32xf32>
    %329 = vector.extract_strided_slice %310 {offsets = [0, 64], sizes = [8, 32], strides = [1, 1]} : vector<8x96xf32> to vector<8x32xf32>
    %330 = vector.extract_strided_slice %312 {offsets = [0, 64], sizes = [8, 32], strides = [1, 1]} : vector<8x96xf32> to vector<8x32xf32>
    %331 = vector.broadcast %53 : vector<1x32xf32> to vector<8x32xf32>
    %332 = arith.addf %330, %331 : vector<8x32xf32>
    %333 = arith.mulf %320, %332 : vector<8x32xf32>
    %334 = arith.addf %329, %333 : vector<8x32xf32>
    %335 = math.tanh %334 : vector<8x32xf32>
    %cst_86 = arith.constant 1.000000e+00 : f32
    %336 = vector.broadcast %cst_86 : f32 to vector<8x32xf32>
    %337 = arith.subf %336, %328 : vector<8x32xf32>
    %338 = arith.mulf %337, %335 : vector<8x32xf32>
    %339 = arith.mulf %328, %304 : vector<8x32xf32>
    %340 = arith.addf %338, %339 : vector<8x32xf32>
    %341 = arith.index_cast %308 : i32 to index
    %c0_87 = arith.constant 0 : index
    %342 = vector.load %arg18[%341, %c0_87] : memref<128x32xf32, #tpu.memory_space<vmem>>, vector<8x32xf32>
    tpu.vector_store %arg18[%341, %c0_87], %340 {strides = array<i32>} : memref<128x32xf32, #tpu.memory_space<vmem>>, vector<8x32xf32>,
    %c8_i32_88 = arith.constant 8 : i32
    %c8_i32_89 = arith.constant 8 : i32
    %343 = arith.muli %c8_i32_88, %c8_i32_89 : i32
    %344 = tpu.assume_multiple %343, 8 : i32
    %345 = arith.index_cast %344 : i32 to index
    %c0_90 = arith.constant 0 : index
    %346 = vector.load %arg17[%345, %c0_90] : memref<128x96xf32, #tpu.memory_space<vmem>>, vector<8x96xf32>
    %347 = arith.truncf %340 : vector<8x32xf32> to vector<8x32xbf16>
    %cst_91 = arith.constant dense<0.000000e+00> : vector<8x96xf32>
    %348 = tpu.matmul %347, %52, %cst_91 {dimension_numbers = #tpu.dot_dimension_numbers<[1], [0], [0], [1], [0, 0, 1, 1], [], []>} : vector<8x32xbf16>, vector<32x96xbf16>, vector<8x96xf32> -> vector<8x96xf32>
    %349 = vector.extract_strided_slice %346 {offsets = [0, 0], sizes = [8, 32], strides = [1, 1]} : vector<8x96xf32> to vector<8x32xf32>
    %350 = vector.extract_strided_slice %348 {offsets = [0, 0], sizes = [8, 32], strides = [1, 1]} : vector<8x96xf32> to vector<8x32xf32>
    %351 = arith.addf %349, %350 : vector<8x32xf32>
    %352 = arith.negf %351 : vector<8x32xf32>
    %353 = math.exp %352 : vector<8x32xf32>
    %cst_92 = arith.constant 1.000000e+00 : f32
    %354 = vector.broadcast %cst_92 : f32 to vector<8x32xf32>
    %355 = arith.addf %354, %353 : vector<8x32xf32>
    %356 = arith.divf %354, %355 : vector<8x32xf32>
    %357 = vector.extract_strided_slice %346 {offsets = [0, 32], sizes = [8, 32], strides = [1, 1]} : vector<8x96xf32> to vector<8x32xf32>
    %358 = vector.extract_strided_slice %348 {offsets = [0, 32], sizes = [8, 32], strides = [1, 1]} : vector<8x96xf32> to vector<8x32xf32>
    %359 = arith.addf %357, %358 : vector<8x32xf32>
    %360 = arith.negf %359 : vector<8x32xf32>
    %361 = math.exp %360 : vector<8x32xf32>
    %cst_93 = arith.constant 1.000000e+00 : f32
    %362 = vector.broadcast %cst_93 : f32 to vector<8x32xf32>
    %363 = arith.addf %362, %361 : vector<8x32xf32>
    %364 = arith.divf %362, %363 : vector<8x32xf32>
    %365 = vector.extract_strided_slice %346 {offsets = [0, 64], sizes = [8, 32], strides = [1, 1]} : vector<8x96xf32> to vector<8x32xf32>
    %366 = vector.extract_strided_slice %348 {offsets = [0, 64], sizes = [8, 32], strides = [1, 1]} : vector<8x96xf32> to vector<8x32xf32>
    %367 = vector.broadcast %53 : vector<1x32xf32> to vector<8x32xf32>
    %368 = arith.addf %366, %367 : vector<8x32xf32>
    %369 = arith.mulf %356, %368 : vector<8x32xf32>
    %370 = arith.addf %365, %369 : vector<8x32xf32>
    %371 = math.tanh %370 : vector<8x32xf32>
    %cst_94 = arith.constant 1.000000e+00 : f32
    %372 = vector.broadcast %cst_94 : f32 to vector<8x32xf32>
    %373 = arith.subf %372, %364 : vector<8x32xf32>
    %374 = arith.mulf %373, %371 : vector<8x32xf32>
    %375 = arith.mulf %364, %340 : vector<8x32xf32>
    %376 = arith.addf %374, %375 : vector<8x32xf32>
    %377 = arith.index_cast %344 : i32 to index
    %c0_95 = arith.constant 0 : index
    %378 = vector.load %arg18[%377, %c0_95] : memref<128x32xf32, #tpu.memory_space<vmem>>, vector<8x32xf32>
    tpu.vector_store %arg18[%377, %c0_95], %376 {strides = array<i32>} : memref<128x32xf32, #tpu.memory_space<vmem>>, vector<8x32xf32>,
    %c9_i32 = arith.constant 9 : i32
    %c8_i32_96 = arith.constant 8 : i32
    %379 = arith.muli %c9_i32, %c8_i32_96 : i32
    %380 = tpu.assume_multiple %379, 8 : i32
    %381 = arith.index_cast %380 : i32 to index
    %c0_97 = arith.constant 0 : index
    %382 = vector.load %arg17[%381, %c0_97] : memref<128x96xf32, #tpu.memory_space<vmem>>, vector<8x96xf32>
    %383 = arith.truncf %376 : vector<8x32xf32> to vector<8x32xbf16>
    %cst_98 = arith.constant dense<0.000000e+00> : vector<8x96xf32>
    %384 = tpu.matmul %383, %52, %cst_98 {dimension_numbers = #tpu.dot_dimension_numbers<[1], [0], [0], [1], [0, 0, 1, 1], [], []>} : vector<8x32xbf16>, vector<32x96xbf16>, vector<8x96xf32> -> vector<8x96xf32>
    %385 = vector.extract_strided_slice %382 {offsets = [0, 0], sizes = [8, 32], strides = [1, 1]} : vector<8x96xf32> to vector<8x32xf32>
    %386 = vector.extract_strided_slice %384 {offsets = [0, 0], sizes = [8, 32], strides = [1, 1]} : vector<8x96xf32> to vector<8x32xf32>
    %387 = arith.addf %385, %386 : vector<8x32xf32>
    %388 = arith.negf %387 : vector<8x32xf32>
    %389 = math.exp %388 : vector<8x32xf32>
    %cst_99 = arith.constant 1.000000e+00 : f32
    %390 = vector.broadcast %cst_99 : f32 to vector<8x32xf32>
    %391 = arith.addf %390, %389 : vector<8x32xf32>
    %392 = arith.divf %390, %391 : vector<8x32xf32>
    %393 = vector.extract_strided_slice %382 {offsets = [0, 32], sizes = [8, 32], strides = [1, 1]} : vector<8x96xf32> to vector<8x32xf32>
    %394 = vector.extract_strided_slice %384 {offsets = [0, 32], sizes = [8, 32], strides = [1, 1]} : vector<8x96xf32> to vector<8x32xf32>
    %395 = arith.addf %393, %394 : vector<8x32xf32>
    %396 = arith.negf %395 : vector<8x32xf32>
    %397 = math.exp %396 : vector<8x32xf32>
    %cst_100 = arith.constant 1.000000e+00 : f32
    %398 = vector.broadcast %cst_100 : f32 to vector<8x32xf32>
    %399 = arith.addf %398, %397 : vector<8x32xf32>
    %400 = arith.divf %398, %399 : vector<8x32xf32>
    %401 = vector.extract_strided_slice %382 {offsets = [0, 64], sizes = [8, 32], strides = [1, 1]} : vector<8x96xf32> to vector<8x32xf32>
    %402 = vector.extract_strided_slice %384 {offsets = [0, 64], sizes = [8, 32], strides = [1, 1]} : vector<8x96xf32> to vector<8x32xf32>
    %403 = vector.broadcast %53 : vector<1x32xf32> to vector<8x32xf32>
    %404 = arith.addf %402, %403 : vector<8x32xf32>
    %405 = arith.mulf %392, %404 : vector<8x32xf32>
    %406 = arith.addf %401, %405 : vector<8x32xf32>
    %407 = math.tanh %406 : vector<8x32xf32>
    %cst_101 = arith.constant 1.000000e+00 : f32
    %408 = vector.broadcast %cst_101 : f32 to vector<8x32xf32>
    %409 = arith.subf %408, %400 : vector<8x32xf32>
    %410 = arith.mulf %409, %407 : vector<8x32xf32>
    %411 = arith.mulf %400, %376 : vector<8x32xf32>
    %412 = arith.addf %410, %411 : vector<8x32xf32>
    %413 = arith.index_cast %380 : i32 to index
    %c0_102 = arith.constant 0 : index
    %414 = vector.load %arg18[%413, %c0_102] : memref<128x32xf32, #tpu.memory_space<vmem>>, vector<8x32xf32>
    tpu.vector_store %arg18[%413, %c0_102], %412 {strides = array<i32>} : memref<128x32xf32, #tpu.memory_space<vmem>>, vector<8x32xf32>,
    %c10_i32 = arith.constant 10 : i32
    %c8_i32_103 = arith.constant 8 : i32
    %415 = arith.muli %c10_i32, %c8_i32_103 : i32
    %416 = tpu.assume_multiple %415, 8 : i32
    %417 = arith.index_cast %416 : i32 to index
    %c0_104 = arith.constant 0 : index
    %418 = vector.load %arg17[%417, %c0_104] : memref<128x96xf32, #tpu.memory_space<vmem>>, vector<8x96xf32>
    %419 = arith.truncf %412 : vector<8x32xf32> to vector<8x32xbf16>
    %cst_105 = arith.constant dense<0.000000e+00> : vector<8x96xf32>
    %420 = tpu.matmul %419, %52, %cst_105 {dimension_numbers = #tpu.dot_dimension_numbers<[1], [0], [0], [1], [0, 0, 1, 1], [], []>} : vector<8x32xbf16>, vector<32x96xbf16>, vector<8x96xf32> -> vector<8x96xf32>
    %421 = vector.extract_strided_slice %418 {offsets = [0, 0], sizes = [8, 32], strides = [1, 1]} : vector<8x96xf32> to vector<8x32xf32>
    %422 = vector.extract_strided_slice %420 {offsets = [0, 0], sizes = [8, 32], strides = [1, 1]} : vector<8x96xf32> to vector<8x32xf32>
    %423 = arith.addf %421, %422 : vector<8x32xf32>
    %424 = arith.negf %423 : vector<8x32xf32>
    %425 = math.exp %424 : vector<8x32xf32>
    %cst_106 = arith.constant 1.000000e+00 : f32
    %426 = vector.broadcast %cst_106 : f32 to vector<8x32xf32>
    %427 = arith.addf %426, %425 : vector<8x32xf32>
    %428 = arith.divf %426, %427 : vector<8x32xf32>
    %429 = vector.extract_strided_slice %418 {offsets = [0, 32], sizes = [8, 32], strides = [1, 1]} : vector<8x96xf32> to vector<8x32xf32>
    %430 = vector.extract_strided_slice %420 {offsets = [0, 32], sizes = [8, 32], strides = [1, 1]} : vector<8x96xf32> to vector<8x32xf32>
    %431 = arith.addf %429, %430 : vector<8x32xf32>
    %432 = arith.negf %431 : vector<8x32xf32>
    %433 = math.exp %432 : vector<8x32xf32>
    %cst_107 = arith.constant 1.000000e+00 : f32
    %434 = vector.broadcast %cst_107 : f32 to vector<8x32xf32>
    %435 = arith.addf %434, %433 : vector<8x32xf32>
    %436 = arith.divf %434, %435 : vector<8x32xf32>
    %437 = vector.extract_strided_slice %418 {offsets = [0, 64], sizes = [8, 32], strides = [1, 1]} : vector<8x96xf32> to vector<8x32xf32>
    %438 = vector.extract_strided_slice %420 {offsets = [0, 64], sizes = [8, 32], strides = [1, 1]} : vector<8x96xf32> to vector<8x32xf32>
    %439 = vector.broadcast %53 : vector<1x32xf32> to vector<8x32xf32>
    %440 = arith.addf %438, %439 : vector<8x32xf32>
    %441 = arith.mulf %428, %440 : vector<8x32xf32>
    %442 = arith.addf %437, %441 : vector<8x32xf32>
    %443 = math.tanh %442 : vector<8x32xf32>
    %cst_108 = arith.constant 1.000000e+00 : f32
    %444 = vector.broadcast %cst_108 : f32 to vector<8x32xf32>
    %445 = arith.subf %444, %436 : vector<8x32xf32>
    %446 = arith.mulf %445, %443 : vector<8x32xf32>
    %447 = arith.mulf %436, %412 : vector<8x32xf32>
    %448 = arith.addf %446, %447 : vector<8x32xf32>
    %449 = arith.index_cast %416 : i32 to index
    %c0_109 = arith.constant 0 : index
    %450 = vector.load %arg18[%449, %c0_109] : memref<128x32xf32, #tpu.memory_space<vmem>>, vector<8x32xf32>
    tpu.vector_store %arg18[%449, %c0_109], %448 {strides = array<i32>} : memref<128x32xf32, #tpu.memory_space<vmem>>, vector<8x32xf32>,
    %c11_i32 = arith.constant 11 : i32
    %c8_i32_110 = arith.constant 8 : i32
    %451 = arith.muli %c11_i32, %c8_i32_110 : i32
    %452 = tpu.assume_multiple %451, 8 : i32
    %453 = arith.index_cast %452 : i32 to index
    %c0_111 = arith.constant 0 : index
    %454 = vector.load %arg17[%453, %c0_111] : memref<128x96xf32, #tpu.memory_space<vmem>>, vector<8x96xf32>
    %455 = arith.truncf %448 : vector<8x32xf32> to vector<8x32xbf16>
    %cst_112 = arith.constant dense<0.000000e+00> : vector<8x96xf32>
    %456 = tpu.matmul %455, %52, %cst_112 {dimension_numbers = #tpu.dot_dimension_numbers<[1], [0], [0], [1], [0, 0, 1, 1], [], []>} : vector<8x32xbf16>, vector<32x96xbf16>, vector<8x96xf32> -> vector<8x96xf32>
    %457 = vector.extract_strided_slice %454 {offsets = [0, 0], sizes = [8, 32], strides = [1, 1]} : vector<8x96xf32> to vector<8x32xf32>
    %458 = vector.extract_strided_slice %456 {offsets = [0, 0], sizes = [8, 32], strides = [1, 1]} : vector<8x96xf32> to vector<8x32xf32>
    %459 = arith.addf %457, %458 : vector<8x32xf32>
    %460 = arith.negf %459 : vector<8x32xf32>
    %461 = math.exp %460 : vector<8x32xf32>
    %cst_113 = arith.constant 1.000000e+00 : f32
    %462 = vector.broadcast %cst_113 : f32 to vector<8x32xf32>
    %463 = arith.addf %462, %461 : vector<8x32xf32>
    %464 = arith.divf %462, %463 : vector<8x32xf32>
    %465 = vector.extract_strided_slice %454 {offsets = [0, 32], sizes = [8, 32], strides = [1, 1]} : vector<8x96xf32> to vector<8x32xf32>
    %466 = vector.extract_strided_slice %456 {offsets = [0, 32], sizes = [8, 32], strides = [1, 1]} : vector<8x96xf32> to vector<8x32xf32>
    %467 = arith.addf %465, %466 : vector<8x32xf32>
    %468 = arith.negf %467 : vector<8x32xf32>
    %469 = math.exp %468 : vector<8x32xf32>
    %cst_114 = arith.constant 1.000000e+00 : f32
    %470 = vector.broadcast %cst_114 : f32 to vector<8x32xf32>
    %471 = arith.addf %470, %469 : vector<8x32xf32>
    %472 = arith.divf %470, %471 : vector<8x32xf32>
    %473 = vector.extract_strided_slice %454 {offsets = [0, 64], sizes = [8, 32], strides = [1, 1]} : vector<8x96xf32> to vector<8x32xf32>
    %474 = vector.extract_strided_slice %456 {offsets = [0, 64], sizes = [8, 32], strides = [1, 1]} : vector<8x96xf32> to vector<8x32xf32>
    %475 = vector.broadcast %53 : vector<1x32xf32> to vector<8x32xf32>
    %476 = arith.addf %474, %475 : vector<8x32xf32>
    %477 = arith.mulf %464, %476 : vector<8x32xf32>
    %478 = arith.addf %473, %477 : vector<8x32xf32>
    %479 = math.tanh %478 : vector<8x32xf32>
    %cst_115 = arith.constant 1.000000e+00 : f32
    %480 = vector.broadcast %cst_115 : f32 to vector<8x32xf32>
    %481 = arith.subf %480, %472 : vector<8x32xf32>
    %482 = arith.mulf %481, %479 : vector<8x32xf32>
    %483 = arith.mulf %472, %448 : vector<8x32xf32>
    %484 = arith.addf %482, %483 : vector<8x32xf32>
    %485 = arith.index_cast %452 : i32 to index
    %c0_116 = arith.constant 0 : index
    %486 = vector.load %arg18[%485, %c0_116] : memref<128x32xf32, #tpu.memory_space<vmem>>, vector<8x32xf32>
    tpu.vector_store %arg18[%485, %c0_116], %484 {strides = array<i32>} : memref<128x32xf32, #tpu.memory_space<vmem>>, vector<8x32xf32>,
    %c12_i32 = arith.constant 12 : i32
    %c8_i32_117 = arith.constant 8 : i32
    %487 = arith.muli %c12_i32, %c8_i32_117 : i32
    %488 = tpu.assume_multiple %487, 8 : i32
    %489 = arith.index_cast %488 : i32 to index
    %c0_118 = arith.constant 0 : index
    %490 = vector.load %arg17[%489, %c0_118] : memref<128x96xf32, #tpu.memory_space<vmem>>, vector<8x96xf32>
    %491 = arith.truncf %484 : vector<8x32xf32> to vector<8x32xbf16>
    %cst_119 = arith.constant dense<0.000000e+00> : vector<8x96xf32>
    %492 = tpu.matmul %491, %52, %cst_119 {dimension_numbers = #tpu.dot_dimension_numbers<[1], [0], [0], [1], [0, 0, 1, 1], [], []>} : vector<8x32xbf16>, vector<32x96xbf16>, vector<8x96xf32> -> vector<8x96xf32>
    %493 = vector.extract_strided_slice %490 {offsets = [0, 0], sizes = [8, 32], strides = [1, 1]} : vector<8x96xf32> to vector<8x32xf32>
    %494 = vector.extract_strided_slice %492 {offsets = [0, 0], sizes = [8, 32], strides = [1, 1]} : vector<8x96xf32> to vector<8x32xf32>
    %495 = arith.addf %493, %494 : vector<8x32xf32>
    %496 = arith.negf %495 : vector<8x32xf32>
    %497 = math.exp %496 : vector<8x32xf32>
    %cst_120 = arith.constant 1.000000e+00 : f32
    %498 = vector.broadcast %cst_120 : f32 to vector<8x32xf32>
    %499 = arith.addf %498, %497 : vector<8x32xf32>
    %500 = arith.divf %498, %499 : vector<8x32xf32>
    %501 = vector.extract_strided_slice %490 {offsets = [0, 32], sizes = [8, 32], strides = [1, 1]} : vector<8x96xf32> to vector<8x32xf32>
    %502 = vector.extract_strided_slice %492 {offsets = [0, 32], sizes = [8, 32], strides = [1, 1]} : vector<8x96xf32> to vector<8x32xf32>
    %503 = arith.addf %501, %502 : vector<8x32xf32>
    %504 = arith.negf %503 : vector<8x32xf32>
    %505 = math.exp %504 : vector<8x32xf32>
    %cst_121 = arith.constant 1.000000e+00 : f32
    %506 = vector.broadcast %cst_121 : f32 to vector<8x32xf32>
    %507 = arith.addf %506, %505 : vector<8x32xf32>
    %508 = arith.divf %506, %507 : vector<8x32xf32>
    %509 = vector.extract_strided_slice %490 {offsets = [0, 64], sizes = [8, 32], strides = [1, 1]} : vector<8x96xf32> to vector<8x32xf32>
    %510 = vector.extract_strided_slice %492 {offsets = [0, 64], sizes = [8, 32], strides = [1, 1]} : vector<8x96xf32> to vector<8x32xf32>
    %511 = vector.broadcast %53 : vector<1x32xf32> to vector<8x32xf32>
    %512 = arith.addf %510, %511 : vector<8x32xf32>
    %513 = arith.mulf %500, %512 : vector<8x32xf32>
    %514 = arith.addf %509, %513 : vector<8x32xf32>
    %515 = math.tanh %514 : vector<8x32xf32>
    %cst_122 = arith.constant 1.000000e+00 : f32
    %516 = vector.broadcast %cst_122 : f32 to vector<8x32xf32>
    %517 = arith.subf %516, %508 : vector<8x32xf32>
    %518 = arith.mulf %517, %515 : vector<8x32xf32>
    %519 = arith.mulf %508, %484 : vector<8x32xf32>
    %520 = arith.addf %518, %519 : vector<8x32xf32>
    %521 = arith.index_cast %488 : i32 to index
    %c0_123 = arith.constant 0 : index
    %522 = vector.load %arg18[%521, %c0_123] : memref<128x32xf32, #tpu.memory_space<vmem>>, vector<8x32xf32>
    tpu.vector_store %arg18[%521, %c0_123], %520 {strides = array<i32>} : memref<128x32xf32, #tpu.memory_space<vmem>>, vector<8x32xf32>,
    %c13_i32 = arith.constant 13 : i32
    %c8_i32_124 = arith.constant 8 : i32
    %523 = arith.muli %c13_i32, %c8_i32_124 : i32
    %524 = tpu.assume_multiple %523, 8 : i32
    %525 = arith.index_cast %524 : i32 to index
    %c0_125 = arith.constant 0 : index
    %526 = vector.load %arg17[%525, %c0_125] : memref<128x96xf32, #tpu.memory_space<vmem>>, vector<8x96xf32>
    %527 = arith.truncf %520 : vector<8x32xf32> to vector<8x32xbf16>
    %cst_126 = arith.constant dense<0.000000e+00> : vector<8x96xf32>
    %528 = tpu.matmul %527, %52, %cst_126 {dimension_numbers = #tpu.dot_dimension_numbers<[1], [0], [0], [1], [0, 0, 1, 1], [], []>} : vector<8x32xbf16>, vector<32x96xbf16>, vector<8x96xf32> -> vector<8x96xf32>
    %529 = vector.extract_strided_slice %526 {offsets = [0, 0], sizes = [8, 32], strides = [1, 1]} : vector<8x96xf32> to vector<8x32xf32>
    %530 = vector.extract_strided_slice %528 {offsets = [0, 0], sizes = [8, 32], strides = [1, 1]} : vector<8x96xf32> to vector<8x32xf32>
    %531 = arith.addf %529, %530 : vector<8x32xf32>
    %532 = arith.negf %531 : vector<8x32xf32>
    %533 = math.exp %532 : vector<8x32xf32>
    %cst_127 = arith.constant 1.000000e+00 : f32
    %534 = vector.broadcast %cst_127 : f32 to vector<8x32xf32>
    %535 = arith.addf %534, %533 : vector<8x32xf32>
    %536 = arith.divf %534, %535 : vector<8x32xf32>
    %537 = vector.extract_strided_slice %526 {offsets = [0, 32], sizes = [8, 32], strides = [1, 1]} : vector<8x96xf32> to vector<8x32xf32>
    %538 = vector.extract_strided_slice %528 {offsets = [0, 32], sizes = [8, 32], strides = [1, 1]} : vector<8x96xf32> to vector<8x32xf32>
    %539 = arith.addf %537, %538 : vector<8x32xf32>
    %540 = arith.negf %539 : vector<8x32xf32>
    %541 = math.exp %540 : vector<8x32xf32>
    %cst_128 = arith.constant 1.000000e+00 : f32
    %542 = vector.broadcast %cst_128 : f32 to vector<8x32xf32>
    %543 = arith.addf %542, %541 : vector<8x32xf32>
    %544 = arith.divf %542, %543 : vector<8x32xf32>
    %545 = vector.extract_strided_slice %526 {offsets = [0, 64], sizes = [8, 32], strides = [1, 1]} : vector<8x96xf32> to vector<8x32xf32>
    %546 = vector.extract_strided_slice %528 {offsets = [0, 64], sizes = [8, 32], strides = [1, 1]} : vector<8x96xf32> to vector<8x32xf32>
    %547 = vector.broadcast %53 : vector<1x32xf32> to vector<8x32xf32>
    %548 = arith.addf %546, %547 : vector<8x32xf32>
    %549 = arith.mulf %536, %548 : vector<8x32xf32>
    %550 = arith.addf %545, %549 : vector<8x32xf32>
    %551 = math.tanh %550 : vector<8x32xf32>
    %cst_129 = arith.constant 1.000000e+00 : f32
    %552 = vector.broadcast %cst_129 : f32 to vector<8x32xf32>
    %553 = arith.subf %552, %544 : vector<8x32xf32>
    %554 = arith.mulf %553, %551 : vector<8x32xf32>
    %555 = arith.mulf %544, %520 : vector<8x32xf32>
    %556 = arith.addf %554, %555 : vector<8x32xf32>
    %557 = arith.index_cast %524 : i32 to index
    %c0_130 = arith.constant 0 : index
    %558 = vector.load %arg18[%557, %c0_130] : memref<128x32xf32, #tpu.memory_space<vmem>>, vector<8x32xf32>
    tpu.vector_store %arg18[%557, %c0_130], %556 {strides = array<i32>} : memref<128x32xf32, #tpu.memory_space<vmem>>, vector<8x32xf32>,
    %c14_i32 = arith.constant 14 : i32
    %c8_i32_131 = arith.constant 8 : i32
    %559 = arith.muli %c14_i32, %c8_i32_131 : i32
    %560 = tpu.assume_multiple %559, 8 : i32
    %561 = arith.index_cast %560 : i32 to index
    %c0_132 = arith.constant 0 : index
    %562 = vector.load %arg17[%561, %c0_132] : memref<128x96xf32, #tpu.memory_space<vmem>>, vector<8x96xf32>
    %563 = arith.truncf %556 : vector<8x32xf32> to vector<8x32xbf16>
    %cst_133 = arith.constant dense<0.000000e+00> : vector<8x96xf32>
    %564 = tpu.matmul %563, %52, %cst_133 {dimension_numbers = #tpu.dot_dimension_numbers<[1], [0], [0], [1], [0, 0, 1, 1], [], []>} : vector<8x32xbf16>, vector<32x96xbf16>, vector<8x96xf32> -> vector<8x96xf32>
    %565 = vector.extract_strided_slice %562 {offsets = [0, 0], sizes = [8, 32], strides = [1, 1]} : vector<8x96xf32> to vector<8x32xf32>
    %566 = vector.extract_strided_slice %564 {offsets = [0, 0], sizes = [8, 32], strides = [1, 1]} : vector<8x96xf32> to vector<8x32xf32>
    %567 = arith.addf %565, %566 : vector<8x32xf32>
    %568 = arith.negf %567 : vector<8x32xf32>
    %569 = math.exp %568 : vector<8x32xf32>
    %cst_134 = arith.constant 1.000000e+00 : f32
    %570 = vector.broadcast %cst_134 : f32 to vector<8x32xf32>
    %571 = arith.addf %570, %569 : vector<8x32xf32>
    %572 = arith.divf %570, %571 : vector<8x32xf32>
    %573 = vector.extract_strided_slice %562 {offsets = [0, 32], sizes = [8, 32], strides = [1, 1]} : vector<8x96xf32> to vector<8x32xf32>
    %574 = vector.extract_strided_slice %564 {offsets = [0, 32], sizes = [8, 32], strides = [1, 1]} : vector<8x96xf32> to vector<8x32xf32>
    %575 = arith.addf %573, %574 : vector<8x32xf32>
    %576 = arith.negf %575 : vector<8x32xf32>
    %577 = math.exp %576 : vector<8x32xf32>
    %cst_135 = arith.constant 1.000000e+00 : f32
    %578 = vector.broadcast %cst_135 : f32 to vector<8x32xf32>
    %579 = arith.addf %578, %577 : vector<8x32xf32>
    %580 = arith.divf %578, %579 : vector<8x32xf32>
    %581 = vector.extract_strided_slice %562 {offsets = [0, 64], sizes = [8, 32], strides = [1, 1]} : vector<8x96xf32> to vector<8x32xf32>
    %582 = vector.extract_strided_slice %564 {offsets = [0, 64], sizes = [8, 32], strides = [1, 1]} : vector<8x96xf32> to vector<8x32xf32>
    %583 = vector.broadcast %53 : vector<1x32xf32> to vector<8x32xf32>
    %584 = arith.addf %582, %583 : vector<8x32xf32>
    %585 = arith.mulf %572, %584 : vector<8x32xf32>
    %586 = arith.addf %581, %585 : vector<8x32xf32>
    %587 = math.tanh %586 : vector<8x32xf32>
    %cst_136 = arith.constant 1.000000e+00 : f32
    %588 = vector.broadcast %cst_136 : f32 to vector<8x32xf32>
    %589 = arith.subf %588, %580 : vector<8x32xf32>
    %590 = arith.mulf %589, %587 : vector<8x32xf32>
    %591 = arith.mulf %580, %556 : vector<8x32xf32>
    %592 = arith.addf %590, %591 : vector<8x32xf32>
    %593 = arith.index_cast %560 : i32 to index
    %c0_137 = arith.constant 0 : index
    %594 = vector.load %arg18[%593, %c0_137] : memref<128x32xf32, #tpu.memory_space<vmem>>, vector<8x32xf32>
    tpu.vector_store %arg18[%593, %c0_137], %592 {strides = array<i32>} : memref<128x32xf32, #tpu.memory_space<vmem>>, vector<8x32xf32>,
    %c15_i32 = arith.constant 15 : i32
    %c8_i32_138 = arith.constant 8 : i32
    %595 = arith.muli %c15_i32, %c8_i32_138 : i32
    %596 = tpu.assume_multiple %595, 8 : i32
    %597 = arith.index_cast %596 : i32 to index
    %c0_139 = arith.constant 0 : index
    %598 = vector.load %arg17[%597, %c0_139] : memref<128x96xf32, #tpu.memory_space<vmem>>, vector<8x96xf32>
    %599 = arith.truncf %592 : vector<8x32xf32> to vector<8x32xbf16>
    %cst_140 = arith.constant dense<0.000000e+00> : vector<8x96xf32>
    %600 = tpu.matmul %599, %52, %cst_140 {dimension_numbers = #tpu.dot_dimension_numbers<[1], [0], [0], [1], [0, 0, 1, 1], [], []>} : vector<8x32xbf16>, vector<32x96xbf16>, vector<8x96xf32> -> vector<8x96xf32>
    %601 = vector.extract_strided_slice %598 {offsets = [0, 0], sizes = [8, 32], strides = [1, 1]} : vector<8x96xf32> to vector<8x32xf32>
    %602 = vector.extract_strided_slice %600 {offsets = [0, 0], sizes = [8, 32], strides = [1, 1]} : vector<8x96xf32> to vector<8x32xf32>
    %603 = arith.addf %601, %602 : vector<8x32xf32>
    %604 = arith.negf %603 : vector<8x32xf32>
    %605 = math.exp %604 : vector<8x32xf32>
    %cst_141 = arith.constant 1.000000e+00 : f32
    %606 = vector.broadcast %cst_141 : f32 to vector<8x32xf32>
    %607 = arith.addf %606, %605 : vector<8x32xf32>
    %608 = arith.divf %606, %607 : vector<8x32xf32>
    %609 = vector.extract_strided_slice %598 {offsets = [0, 32], sizes = [8, 32], strides = [1, 1]} : vector<8x96xf32> to vector<8x32xf32>
    %610 = vector.extract_strided_slice %600 {offsets = [0, 32], sizes = [8, 32], strides = [1, 1]} : vector<8x96xf32> to vector<8x32xf32>
    %611 = arith.addf %609, %610 : vector<8x32xf32>
    %612 = arith.negf %611 : vector<8x32xf32>
    %613 = math.exp %612 : vector<8x32xf32>
    %cst_142 = arith.constant 1.000000e+00 : f32
    %614 = vector.broadcast %cst_142 : f32 to vector<8x32xf32>
    %615 = arith.addf %614, %613 : vector<8x32xf32>
    %616 = arith.divf %614, %615 : vector<8x32xf32>
    %617 = vector.extract_strided_slice %598 {offsets = [0, 64], sizes = [8, 32], strides = [1, 1]} : vector<8x96xf32> to vector<8x32xf32>
    %618 = vector.extract_strided_slice %600 {offsets = [0, 64], sizes = [8, 32], strides = [1, 1]} : vector<8x96xf32> to vector<8x32xf32>
    %619 = vector.broadcast %53 : vector<1x32xf32> to vector<8x32xf32>
    %620 = arith.addf %618, %619 : vector<8x32xf32>
    %621 = arith.mulf %608, %620 : vector<8x32xf32>
    %622 = arith.addf %617, %621 : vector<8x32xf32>
    %623 = math.tanh %622 : vector<8x32xf32>
    %cst_143 = arith.constant 1.000000e+00 : f32
    %624 = vector.broadcast %cst_143 : f32 to vector<8x32xf32>
    %625 = arith.subf %624, %616 : vector<8x32xf32>
    %626 = arith.mulf %625, %623 : vector<8x32xf32>
    %627 = arith.mulf %616, %592 : vector<8x32xf32>
    %628 = arith.addf %626, %627 : vector<8x32xf32>
    %629 = arith.index_cast %596 : i32 to index
    %c0_144 = arith.constant 0 : index
    %630 = vector.load %arg18[%629, %c0_144] : memref<128x32xf32, #tpu.memory_space<vmem>>, vector<8x32xf32>
    tpu.vector_store %arg18[%629, %c0_144], %628 {strides = array<i32>} : memref<128x32xf32, #tpu.memory_space<vmem>>, vector<8x32xf32>,
    %c16_i32 = arith.constant 16 : i32
    %c0_145 = arith.constant 0 : index
    %c0_146 = arith.constant 0 : index
    %631 = vector.load %arg18[%c0_145, %c0_146] : memref<128x32xf32, #tpu.memory_space<vmem>>, vector<128x32xf32>
    %632 = arith.truncf %631 : vector<128x32xf32> to vector<128x32xbf16>
    %c0_147 = arith.constant 0 : index
    %c0_148 = arith.constant 0 : index
    %633 = vector.load %arg10[%c0_147, %c0_148] : memref<32x32xbf16, #tpu.memory_space<vmem>>, vector<32x32xbf16>
    %cst_149 = arith.constant dense<0.000000e+00> : vector<128x32xf32>
    %634 = tpu.matmul %632, %633, %cst_149 {dimension_numbers = #tpu.dot_dimension_numbers<[1], [0], [0], [1], [0, 0, 1, 1], [], []>} : vector<128x32xbf16>, vector<32x32xbf16>, vector<128x32xf32> -> vector<128x32xf32>
    %c0_150 = arith.constant 0 : index
    %c0_151 = arith.constant 0 : index
    %635 = vector.load %arg11[%c0_150, %c0_151] : memref<1x32xf32, #tpu.memory_space<vmem>>, vector<1x32xf32>
    %636 = vector.broadcast %635 : vector<1x32xf32> to vector<128x32xf32>
    %637 = arith.addf %634, %636 : vector<128x32xf32>
    %638 = vector.shape_cast %637 : vector<128x32xf32> to vector<16x8x32xf32>
    %c0_152 = arith.constant 0 : index
    %c0_153 = arith.constant 0 : index
    %639 = vector.load %arg12[%c0_152, %c0_153] : memref<1x32xf32, #tpu.memory_space<vmem>>, vector<1x32xf32>
    %640 = vector.shape_cast %639 : vector<1x32xf32> to vector<1x1x32xf32>
    %641 = vector.broadcast %640 : vector<1x1x32xf32> to vector<16x8x32xf32>
    %642 = arith.mulf %638, %641 : vector<16x8x32xf32>
    %cst_154 = arith.constant dense<0.000000e+00> : vector<16x8xf32>
    %643 = vector.multi_reduction <add>, %642, %cst_154 [2] : vector<16x8x32xf32> to vector<16x8xf32>
    %c0_155 = arith.constant 0 : index
    %c0_156 = arith.constant 0 : index
    %644 = vector.load %arg13[%c0_155, %c0_156] : memref<1x1xf32, #tpu.memory_space<vmem>>, vector<1x1xf32>
    %645 = vector.broadcast %644 : vector<1x1xf32> to vector<16x8xf32>
    %646 = arith.addf %643, %645 : vector<16x8xf32>
    %647 = tpu.transpose %646, [1, 0] : vector<16x8xf32> -> vector<8x16xf32>
    %cst_157 = arith.constant dense<0xFF800000> : vector<8xf32>
    %648 = vector.multi_reduction <maximumf>, %647, %cst_157 [1] : vector<8x16xf32> to vector<8xf32>
    %649 = vector.shape_cast %648 : vector<8xf32> to vector<8x1xf32>
    %650 = vector.broadcast %649 : vector<8x1xf32> to vector<8x16xf32>
    %651 = arith.subf %647, %650 : vector<8x16xf32>
    %652 = math.exp %651 : vector<8x16xf32>
    %cst_158 = arith.constant dense<0.000000e+00> : vector<8xf32>
    %653 = vector.multi_reduction <add>, %652, %cst_158 [1] : vector<8x16xf32> to vector<8xf32>
    %654 = vector.shape_cast %653 : vector<8xf32> to vector<8x1xf32>
    %655 = tpu.reciprocal %654 {approx = true} : vector<8x1xf32> -> vector<8x1xf32>
    %656 = vector.broadcast %655 : vector<8x1xf32> to vector<8x16xf32>
    %657 = arith.mulf %652, %656 : vector<8x16xf32>
    %658 = tpu.transpose %657, [1, 0] : vector<8x16xf32> -> vector<16x8xf32>
    %659 = vector.shape_cast %658 : vector<16x8xf32> to vector<16x8x1xf32>
    %660 = vector.broadcast %659 : vector<16x8x1xf32> to vector<16x8x32xf32>
    %661 = arith.mulf %660, %638 : vector<16x8x32xf32>
    %cst_159 = arith.constant dense<0.000000e+00> : vector<8x32xf32>
    %662 = vector.multi_reduction <add>, %661, %cst_159 [0] : vector<16x8x32xf32> to vector<8x32xf32>
    %663 = arith.truncf %662 : vector<8x32xf32> to vector<8x32xbf16>
    %c0_160 = arith.constant 0 : index
    %c0_161 = arith.constant 0 : index
    %664 = vector.load %arg14[%c0_160, %c0_161] : memref<32x128xbf16, #tpu.memory_space<vmem>>, vector<32x128xbf16>
    %cst_162 = arith.constant dense<0.000000e+00> : vector<8x128xf32>
    %665 = tpu.matmul %663, %664, %cst_162 {dimension_numbers = #tpu.dot_dimension_numbers<[1], [0], [0], [1], [0, 0, 1, 1], [], []>} : vector<8x32xbf16>, vector<32x128xbf16>, vector<8x128xf32> -> vector<8x128xf32>
    %c0_163 = arith.constant 0 : index
    %c0_164 = arith.constant 0 : index
    %666 = vector.load %arg15[%c0_163, %c0_164] : memref<1x128xf32, #tpu.memory_space<vmem>>, vector<1x128xf32>
    %667 = vector.broadcast %666 : vector<1x128xf32> to vector<8x128xf32>
    %668 = arith.addf %665, %667 : vector<8x128xf32>
    %c0_165 = arith.constant 0 : index
    %c0_166 = arith.constant 0 : index
    %669 = vector.load %arg16[%c0_165, %c0_166] : memref<8x128xf32, #tpu.memory_space<vmem>>, vector<8x128xf32>
    tpu.vector_store %arg16[%c0_165, %c0_166], %668 {strides = array<i32>} : memref<8x128xf32, #tpu.memory_space<vmem>>, vector<8x128xf32>,
    return
  }
  func.func @transform_0(%arg0: i32) -> (i32, i32, i32) {
    %c0_i32 = arith.constant 0 : i32
    %c0_i32_0 = arith.constant 0 : i32
    %c0_i32_1 = arith.constant 0 : i32
    %c0_i32_2 = arith.constant 0 : i32
    return %c0_i32, %c0_i32_0, %c0_i32_1 : i32, i32, i32
  }
  func.func @transform_1(%arg0: i32) -> (i32, i32) {
    %c0_i32 = arith.constant 0 : i32
    %c0_i32_0 = arith.constant 0 : i32
    %c0_i32_1 = arith.constant 0 : i32
    return %c0_i32, %c0_i32_0 : i32, i32
  }
  func.func @transform_2(%arg0: i32) -> (i32, i32) {
    %c0_i32 = arith.constant 0 : i32
    %c0_i32_0 = arith.constant 0 : i32
    %c0_i32_1 = arith.constant 0 : i32
    return %c0_i32, %c0_i32_0 : i32, i32
  }
  func.func @transform_3(%arg0: i32) -> (i32, i32) {
    %c0_i32 = arith.constant 0 : i32
    %c0_i32_0 = arith.constant 0 : i32
    %c0_i32_1 = arith.constant 0 : i32
    return %c0_i32, %c0_i32_0 : i32, i32
  }
  func.func @transform_4(%arg0: i32) -> (i32, i32) {
    %c0_i32 = arith.constant 0 : i32
    %c0_i32_0 = arith.constant 0 : i32
    %c0_i32_1 = arith.constant 0 : i32
    return %c0_i32, %c0_i32_0 : i32, i32
  }
  func.func @transform_5(%arg0: i32) -> (i32, i32) {
    %c0_i32 = arith.constant 0 : i32
    %c0_i32_0 = arith.constant 0 : i32
    %c0_i32_1 = arith.constant 0 : i32
    return %c0_i32, %c0_i32_0 : i32, i32
  }
  func.func @transform_6(%arg0: i32) -> (i32, i32) {
    %c0_i32 = arith.constant 0 : i32
    %c0_i32_0 = arith.constant 0 : i32
    %c0_i32_1 = arith.constant 0 : i32
    return %c0_i32, %c0_i32_0 : i32, i32
  }
  func.func @transform_7(%arg0: i32) -> (i32, i32) {
    %c0_i32 = arith.constant 0 : i32
    %c0_i32_0 = arith.constant 0 : i32
    %c0_i32_1 = arith.constant 0 : i32
    return %c0_i32, %c0_i32_0 : i32, i32
  }
  func.func @transform_8(%arg0: i32) -> (i32, i32) {
    %c0_i32 = arith.constant 0 : i32
    %c0_i32_0 = arith.constant 0 : i32
    %c0_i32_1 = arith.constant 0 : i32
    return %c0_i32, %c0_i32_0 : i32, i32
  }
  func.func @transform_9(%arg0: i32) -> (i32, i32) {
    %c0_i32 = arith.constant 0 : i32
    %c0_i32_0 = arith.constant 0 : i32
    %c0_i32_1 = arith.constant 0 : i32
    return %c0_i32, %c0_i32_0 : i32, i32
  }
  func.func @transform_10(%arg0: i32) -> (i32, i32) {
    %c0_i32 = arith.constant 0 : i32
    %c0_i32_0 = arith.constant 0 : i32
    %c0_i32_1 = arith.constant 0 : i32
    return %c0_i32, %c0_i32_0 : i32, i32
  }
  func.func @transform_11(%arg0: i32) -> (i32, i32) {
    %c0_i32 = arith.constant 0 : i32
    %c0_i32_0 = arith.constant 0 : i32
    %c0_i32_1 = arith.constant 0 : i32
    return %c0_i32, %c0_i32_0 : i32, i32
  }
  func.func @transform_12(%arg0: i32) -> (i32, i32) {
    %c0_i32 = arith.constant 0 : i32
    %c0_i32_0 = arith.constant 0 : i32
    %c0_i32_1 = arith.constant 0 : i32
    return %c0_i32, %c0_i32_0 : i32, i32
  }
  func.func @transform_13(%arg0: i32) -> (i32, i32) {
    %c0_i32 = arith.constant 0 : i32
    %c0_i32_0 = arith.constant 0 : i32
    %c0_i32_1 = arith.constant 0 : i32
    return %c0_i32, %c0_i32_0 : i32, i32
  }
  func.func @transform_14(%arg0: i32) -> (i32, i32) {
    %c0_i32 = arith.constant 0 : i32
    %c0_i32_0 = arith.constant 0 : i32
    %c0_i32_1 = arith.constant 0 : i32
    return %c0_i32, %c0_i32_0 : i32, i32
  }
  func.func @transform_15(%arg0: i32) -> (i32, i32) {
    %c0_i32 = arith.constant 0 : i32
    %c0_i32_0 = arith.constant 0 : i32
    %c0_i32_1 = arith.constant 0 : i32
    return %c0_i32, %c0_i32_0 : i32, i32
  }
}

</mosaic_0001>

<llo_original>
// kernel: tpu_custom_call.1
$region0: #{tpu_custom_call.1}
  #allocation0 [shape = 'u32[]', space=smem, size = 0x4, offset = 0x4, fixed_abs, tag = 'smem constant byte address 0x4 - core index']
  #allocation1 [shape = 'u32[144,128]{1,0:T(1,128)}', space=vmem, size = 0x12000, scoped, tag = 'internal scratch']
  #allocation2 [shape = 'f32[128,96]{1,0:T(8,128)}', space=vmem, size = 0x10000, scoped, tag = 'scratch operand']
  #allocation3 [shape = 'f32[128,32]{1,0:T(8,128)}', space=vmem, size = 0x10000, scoped, tag = 'scratch operand']
  #allocation4 [shape = 'f32[1,1]{1,0:T(1,128)S(1)}', space=vmem, size = 0x200, scoped, tag = 'scoped memory for tpu_custom_call.1']
  %s0 = inlined_call_operand.vmem [shape: f32[16,8,64], index: 0, kind: input, shape index: {}]
  %s1 = inlined_call_operand.vmem [shape: bf16[192,32], index: 1, kind: input, shape index: {}]
  %s2 = inlined_call_operand.hbm [shape: f32[1,32], index: 2, kind: input, shape index: {}]
  %s3 = inlined_call_operand.vmem [shape: bf16[64,32], index: 3, kind: input, shape index: {}]
  %s4 = inlined_call_operand.hbm [shape: f32[1,32], index: 4, kind: input, shape index: {}]
  %s5 = inlined_call_operand.vmem [shape: bf16[32,96], index: 5, kind: input, shape index: {}]
  %s6 = inlined_call_operand.hbm [shape: f32[1,96], index: 6, kind: input, shape index: {}]
  %s7 = inlined_call_operand.hbm [shape: bf16[32,96], index: 7, kind: input, shape index: {}]
  %s8 = inlined_call_operand.hbm [shape: f32[1,32], index: 8, kind: input, shape index: {}]
  %s9 = inlined_call_operand.vmem [shape: bf16[32,32], index: 9, kind: input, shape index: {}]
  %s10 = inlined_call_operand.vmem [shape: f32[1,32], index: 10, kind: input, shape index: {}]
  %s11 = inlined_call_operand.vmem [shape: f32[1,32], index: 11, kind: input, shape index: {}]
  %s12 = inlined_call_operand.<no memory space> [shape: f32[1,1], index: 12, kind: input, shape index: {}]
  %s13 = inlined_call_operand.hbm [shape: bf16[32,128], index: 13, kind: input, shape index: {}]
  %s14 = inlined_call_operand.vmem [shape: f32[1,128], index: 14, kind: input, shape index: {}]
  %s15 = inlined_call_operand.hbm [shape: f32[8,128], index: 15, kind: output, shape index: {}]
  %s16 = sld [smem:[#allocation0]]
  $region94: #{tpu_custom_call.1} parent=0
    _
  %s18 = ssub.s32 1, %s16
  %s19 = scalar_select 0, %s18, %s16
  %v20 = vstv %s12
  %21 = vst [vmem:[#allocation4] sm:$0x1] %v20
  $region1: #{tpu_custom_call.1} parent=0
    #allocation5 [shape = 'u8[512]{0}', space=vmem, size = 0x400, scoped, tag = 'input window, operand 2, single buffered']
    #allocation6 [shape = 's32[1]{0}', space=sflag, size = 0x4, scoped, tag = 'scoped memory for tpu_custom_call.1']
    #allocation7 [shape = 's32[1]{0}', space=sflag, size = 0x4, scoped, tag = 'scoped memory for tpu_custom_call.1']
    #allocation8 [shape = 'u8[512]{0}', space=vmem, size = 0x400, scoped, tag = 'input window, operand 4, single buffered']
    #allocation9 [shape = 's32[1]{0}', space=sflag, size = 0x4, scoped, tag = 'scoped memory for tpu_custom_call.1']
    #allocation10 [shape = 'u8[512]{0}', space=vmem, size = 0x400, scoped, tag = 'input window, operand 6, single buffered']
    #allocation11 [shape = 'u8[8192]{0}', space=vmem, size = 0x2000, scoped, tag = 'input window, operand 7, single buffered']
    #allocation12 [shape = 's32[1]{0}', space=sflag, size = 0x4, scoped, tag = 'scoped memory for tpu_custom_call.1']
    #allocation13 [shape = 'u8[512]{0}', space=vmem, size = 0x400, scoped, tag = 'input window, operand 8, single buffered']
    #allocation14 [shape = 'u8[8192]{0}', space=vmem, size = 0x2000, scoped, tag = 'input window, operand 13, single buffered']
    #allocation15 [shape = 's32[1]{0}', space=sflag, size = 0x4, scoped, tag = 'scoped memory for tpu_custom_call.1']
    #allocation16 [shape = 'u8[4096]{0}', space=vmem, size = 0x1000, scoped, tag = 'output window, operand 0, single buffered']
    %22 = vsyncpa [#allocation6], 0
    %23 = vsyncpa [#allocation9], 0
    %24 = vsyncpa [#allocation12], 0
    %25 = vsyncpa [#allocation15], 0
    %26 = vsyncpa [#allocation7], 0
    // Predicated region
    $region2: #{tpu_custom_call.1} parent=1 // pred_check
      _
    $region3: #{tpu_custom_call.1} parent=1 // pred_check_branch
      %28 = sbr.rel (0) target = $region5
    $region4: #{tpu_custom_call.1} parent=1 // pred_region
      _
    $region5: #{tpu_custom_call.1} parent=1 // pred_fallthru
      _
    // Predicated region
    $region6: #{tpu_custom_call.1} parent=1 // pred_check
      _
    $region7: #{tpu_custom_call.1} parent=1 // pred_check_branch
      %30 = sbr.rel (0) target = $region9
    $region8: #{tpu_custom_call.1} parent=1 // pred_region
      _
    $region9: #{tpu_custom_call.1} parent=1 // pred_fallthru
      _
    // Predicated region
    $region10: #{tpu_custom_call.1} parent=1 // pred_check
      _
    $region11: #{tpu_custom_call.1} parent=1 // pred_check_branch
      %32 = sbr.rel (0) target = $region13
    $region12: #{tpu_custom_call.1} parent=1 // pred_region
      %s34 = ssub.s32 16, 16
      %35 = vsyncadd [#allocation6], %s34
      %s37 = sshll.u32 [#allocation5], 4
      %s38 = int_to_ptr.vmem [resolvable:$true] %s37
      %40 = dma.hbm_to_vmem [thread:$0]  %s2, 16, %s38, [#allocation6]
    $region13: #{tpu_custom_call.1} parent=1 // pred_fallthru
      _
    // Predicated region
    $region14: #{tpu_custom_call.1} parent=1 // pred_check
      _
    $region15: #{tpu_custom_call.1} parent=1 // pred_check_branch
      %42 = sbr.rel (0) target = $region17
    $region16: #{tpu_custom_call.1} parent=1 // pred_region
      _
    $region17: #{tpu_custom_call.1} parent=1 // pred_fallthru
      _
    // Predicated region
    $region18: #{tpu_custom_call.1} parent=1 // pred_check
      _
    $region19: #{tpu_custom_call.1} parent=1 // pred_check_branch
      %44 = sbr.rel (0) target = $region21
    $region20: #{tpu_custom_call.1} parent=1 // pred_region
      %s46 = ssub.s32 16, 16
      %47 = vsyncadd [#allocation9], %s46
      %s49 = sshll.u32 [#allocation8], 4
      %s50 = int_to_ptr.vmem [resolvable:$true] %s49
      %52 = dma.hbm_to_vmem [thread:$0]  %s4, 16, %s50, [#allocation9]
    $region21: #{tpu_custom_call.1} parent=1 // pred_fallthru
      _
    // Predicated region
    $region22: #{tpu_custom_call.1} parent=1 // pred_check
      _
    $region23: #{tpu_custom_call.1} parent=1 // pred_check_branch
      %54 = sbr.rel (0) target = $region25
    $region24: #{tpu_custom_call.1} parent=1 // pred_region
      _
    $region25: #{tpu_custom_call.1} parent=1 // pred_fallthru
      _
    // Predicated region
    $region26: #{tpu_custom_call.1} parent=1 // pred_check
      _
    $region27: #{tpu_custom_call.1} parent=1 // pred_check_branch
      %56 = sbr.rel (0) target = $region29
    $region28: #{tpu_custom_call.1} parent=1 // pred_region
      %s58 = ssub.s32 16, 16
      %59 = vsyncadd [#allocation9], %s58
      %s61 = sshll.u32 [#allocation10], 4
      %s62 = int_to_ptr.vmem [resolvable:$true] %s61
      %64 = dma.hbm_to_vmem [thread:$0]  %s6, 16, %s62, [#allocation9]
    $region29: #{tpu_custom_call.1} parent=1 // pred_fallthru
      _
    // Predicated region
    $region30: #{tpu_custom_call.1} parent=1 // pred_check
      _
    $region31: #{tpu_custom_call.1} parent=1 // pred_check_branch
      %66 = sbr.rel (0) target = $region33
    $region32: #{tpu_custom_call.1} parent=1 // pred_region
      %s68 = ssub.s32 256, 256
      %69 = vsyncadd [#allocation12], %s68
      %s70 = sshll.u32 [#allocation11], 4
      %s71 = int_to_ptr.vmem [resolvable:$true] %s70
      %76 = dma.hbm_to_vmem [thread:$0]  %s7, 256, %s71, [#allocation12], 64, 64, 4
    $region33: #{tpu_custom_call.1} parent=1 // pred_fallthru
      _
    // Predicated region
    $region34: #{tpu_custom_call.1} parent=1 // pred_check
      _
    $region35: #{tpu_custom_call.1} parent=1 // pred_check_branch
      %78 = sbr.rel (0) target = $region37
    $region36: #{tpu_custom_call.1} parent=1 // pred_region
      %s80 = ssub.s32 16, 16
      %81 = vsyncadd [#allocation12], %s80
      %s83 = sshll.u32 [#allocation13], 4
      %s84 = int_to_ptr.vmem [resolvable:$true] %s83
      %86 = dma.hbm_to_vmem [thread:$0]  %s8, 16, %s84, [#allocation12]
    $region37: #{tpu_custom_call.1} parent=1 // pred_fallthru
      _
    // Predicated region
    $region38: #{tpu_custom_call.1} parent=1 // pred_check
      _
    $region39: #{tpu_custom_call.1} parent=1 // pred_check_branch
      %88 = sbr.rel (0) target = $region41
    $region40: #{tpu_custom_call.1} parent=1 // pred_region
      _
    $region41: #{tpu_custom_call.1} parent=1 // pred_fallthru
      _
    // Predicated region
    $region42: #{tpu_custom_call.1} parent=1 // pred_check
      _
    $region43: #{tpu_custom_call.1} parent=1 // pred_check_branch
      %90 = sbr.rel (0) target = $region45
    $region44: #{tpu_custom_call.1} parent=1 // pred_region
      _
    $region45: #{tpu_custom_call.1} parent=1 // pred_fallthru
      _
    // Predicated region
    $region46: #{tpu_custom_call.1} parent=1 // pred_check
      _
    $region47: #{tpu_custom_call.1} parent=1 // pred_check_branch
      %92 = sbr.rel (0) target = $region49
    $region48: #{tpu_custom_call.1} parent=1 // pred_region
      _
    $region49: #{tpu_custom_call.1} parent=1 // pred_fallthru
      _
    // Predicated region
    $region50: #{tpu_custom_call.1} parent=1 // pred_check
      _
    $region51: #{tpu_custom_call.1} parent=1 // pred_check_branch
      %94 = sbr.rel (0) target = $region53
    $region52: #{tpu_custom_call.1} parent=1 // pred_region
      _
    $region53: #{tpu_custom_call.1} parent=1 // pred_fallthru
      _
    // Predicated region
    $region54: #{tpu_custom_call.1} parent=1 // pred_check
      _
    $region55: #{tpu_custom_call.1} parent=1 // pred_check_branch
      %96 = sbr.rel (0) target = $region57
    $region56: #{tpu_custom_call.1} parent=1 // pred_region
      %s98 = ssub.s32 256, 256
      %99 = vsyncadd [#allocation15], %s98
      %s100 = sshll.u32 [#allocation14], 4
      %s101 = int_to_ptr.vmem [resolvable:$true] %s100
      %106 = dma.hbm_to_vmem [thread:$0]  %s13, 256, %s101, [#allocation15], 64, 64, 4
    $region57: #{tpu_custom_call.1} parent=1 // pred_fallthru
      _
    // Predicated region
    $region58: #{tpu_custom_call.1} parent=1 // pred_check
      _
    $region59: #{tpu_custom_call.1} parent=1 // pred_check_branch
      %108 = sbr.rel (0) target = $region61
    $region60: #{tpu_custom_call.1} parent=1 // pred_region
      _
    $region61: #{tpu_custom_call.1} parent=1 // pred_fallthru
      _
    // Predicated region
    $region62: #{tpu_custom_call.1} parent=1 // pred_check
      _
    $region63: #{tpu_custom_call.1} parent=1 // pred_check_branch
      %110 = sbr.rel (0) target = $region65
    $region64: #{tpu_custom_call.1} parent=1 // pred_region
      %111 = dma.done [#allocation6], 16
    $region65: #{tpu_custom_call.1} parent=1 // pred_fallthru
      _
    // Predicated region
    $region66: #{tpu_custom_call.1} parent=1 // pred_check
      _
    $region67: #{tpu_custom_call.1} parent=1 // pred_check_branch
      %113 = sbr.rel (0) target = $region69
    $region68: #{tpu_custom_call.1} parent=1 // pred_region
      %114 = dma.done [#allocation9], 16
    $region69: #{tpu_custom_call.1} parent=1 // pred_fallthru
      _
    // Predicated region
    $region70: #{tpu_custom_call.1} parent=1 // pred_check
      _
    $region71: #{tpu_custom_call.1} parent=1 // pred_check_branch
      %116 = sbr.rel (0) target = $region73
    $region72: #{tpu_custom_call.1} parent=1 // pred_region
      %117 = dma.done [#allocation9], 16
    $region73: #{tpu_custom_call.1} parent=1 // pred_fallthru
      _
    // Predicated region
    $region74: #{tpu_custom_call.1} parent=1 // pred_check
      _
    $region75: #{tpu_custom_call.1} parent=1 // pred_check_branch
      %119 = sbr.rel (0) target = $region77
    $region76: #{tpu_custom_call.1} parent=1 // pred_region
      %120 = dma.done [#allocation12], 256
    $region77: #{tpu_custom_call.1} parent=1 // pred_fallthru
      _
    // Predicated region
    $region78: #{tpu_custom_call.1} parent=1 // pred_check
      _
    $region79: #{tpu_custom_call.1} parent=1 // pred_check_branch
      %122 = sbr.rel (0) target = $region81
    $region80: #{tpu_custom_call.1} parent=1 // pred_region
      %123 = dma.done [#allocation12], 16
    $region81: #{tpu_custom_call.1} parent=1 // pred_fallthru
      _
    // Predicated region
    $region82: #{tpu_custom_call.1} parent=1 // pred_check
      _
    $region83: #{tpu_custom_call.1} parent=1 // pred_check_branch
      %125 = sbr.rel (0) target = $region85
    $region84: #{tpu_custom_call.1} parent=1 // pred_region
      %126 = dma.done [#allocation15], 256
    $region85: #{tpu_custom_call.1} parent=1 // pred_fallthru
      _
    %v128 = vld [vmem:[%s0] sm:$0xff]
    %v129 = vld [vmem:[%s0 + $0x8] sm:$0xff]
    %v130 = vld [vmem:[%s0 + $0x10] sm:$0xff]
    %v131 = vld [vmem:[%s0 + $0x18] sm:$0xff]
    %v132 = vld [vmem:[%s0 + $0x20] sm:$0xff]
    %v133 = vld [vmem:[%s0 + $0x28] sm:$0xff]
    %v134 = vld [vmem:[%s0 + $0x30] sm:$0xff]
    %v135 = vld [vmem:[%s0 + $0x38] sm:$0xff]
    %v136 = vld [vmem:[%s0 + $0x40] sm:$0xff]
    %v137 = vld [vmem:[%s0 + $0x48] sm:$0xff]
    %v138 = vld [vmem:[%s0 + $0x50] sm:$0xff]
    %v139 = vld [vmem:[%s0 + $0x58] sm:$0xff]
    %v140 = vld [vmem:[%s0 + $0x60] sm:$0xff]
    %v141 = vld [vmem:[%s0 + $0x68] sm:$0xff]
    %v142 = vld [vmem:[%s0 + $0x70] sm:$0xff]
    %v143 = vld [vmem:[%s0 + $0x78] sm:$0xff]
    %vm144 = vcmask 523264
    %v145 = vsel %vm144, %v128, 0.0
    %146 = vadd.xlane.f32.xlu0 %v145
    %v147 = vpop.xlane.xlu0 %146
    %v148 = vsel %vm144, %v129, 0.0
    %149 = vadd.xlane.f32.xlu0 %v148
    %v150 = vpop.xlane.xlu0 %149
    %v151 = vsel %vm144, %v130, 0.0
    %152 = vadd.xlane.f32.xlu0 %v151
    %v153 = vpop.xlane.xlu0 %152
    %v154 = vsel %vm144, %v131, 0.0
    %155 = vadd.xlane.f32.xlu0 %v154
    %v156 = vpop.xlane.xlu0 %155
    %v157 = vsel %vm144, %v132, 0.0
    %158 = vadd.xlane.f32.xlu0 %v157
    %v159 = vpop.xlane.xlu0 %158
    %v160 = vsel %vm144, %v133, 0.0
    %161 = vadd.xlane.f32.xlu0 %v160
    %v162 = vpop.xlane.xlu0 %161
    %v163 = vsel %vm144, %v134, 0.0
    %164 = vadd.xlane.f32.xlu0 %v163
    %v165 = vpop.xlane.xlu0 %164
    %v166 = vsel %vm144, %v135, 0.0
    %167 = vadd.xlane.f32.xlu0 %v166
    %v168 = vpop.xlane.xlu0 %167
    %v169 = vsel %vm144, %v136, 0.0
    %170 = vadd.xlane.f32.xlu0 %v169
    %v171 = vpop.xlane.xlu0 %170
    %v172 = vsel %vm144, %v137, 0.0
    %173 = vadd.xlane.f32.xlu0 %v172
    %v174 = vpop.xlane.xlu0 %173
    %v175 = vsel %vm144, %v138, 0.0
    %176 = vadd.xlane.f32.xlu0 %v175
    %v177 = vpop.xlane.xlu0 %176
    %v178 = vsel %vm144, %v139, 0.0
    %179 = vadd.xlane.f32.xlu0 %v178
    %v180 = vpop.xlane.xlu0 %179
    %v181 = vsel %vm144, %v140, 0.0
    %182 = vadd.xlane.f32.xlu0 %v181
    %v183 = vpop.xlane.xlu0 %182
    %v184 = vsel %vm144, %v141, 0.0
    %185 = vadd.xlane.f32.xlu0 %v184
    %v186 = vpop.xlane.xlu0 %185
    %v187 = vsel %vm144, %v142, 0.0
    %188 = vadd.xlane.f32.xlu0 %v187
    %v189 = vpop.xlane.xlu0 %188
    %v190 = vsel %vm144, %v143, 0.0
    %191 = vadd.xlane.f32.xlu0 %v190
    %v192 = vpop.xlane.xlu0 %191
    %v193 = vadd.f32 %v147, %v150
    %v194 = vadd.f32 %v193, %v153
    %v195 = vadd.f32 %v194, %v156
    %v196 = vadd.f32 %v195, %v159
    %v197 = vadd.f32 %v196, %v162
    %v198 = vadd.f32 %v197, %v165
    %v199 = vadd.f32 %v198, %v168
    %v200 = vadd.f32 %v199, %v171
    %v201 = vadd.f32 %v200, %v174
    %v202 = vadd.f32 %v201, %v177
    %v203 = vadd.f32 %v202, %v180
    %v204 = vadd.f32 %v203, %v183
    %v205 = vadd.f32 %v204, %v186
    %v206 = vadd.f32 %v205, %v189
    %v207 = vadd.f32 %v206, %v192
    %v208 = vrcp.pop 1024.0
    %v209 = vmul.f32 %v207, %v208
    %v210 = vsub.f32 %v128, %v209
    %v211 = vsub.f32 %v129, %v209
    %v212 = vsub.f32 %v130, %v209
    %v213 = vsub.f32 %v131, %v209
    %v214 = vsub.f32 %v132, %v209
    %v215 = vsub.f32 %v133, %v209
    %v216 = vsub.f32 %v134, %v209
    %v217 = vsub.f32 %v135, %v209
    %v218 = vsub.f32 %v136, %v209
    %v219 = vsub.f32 %v137, %v209
    %v220 = vsub.f32 %v138, %v209
    %v221 = vsub.f32 %v139, %v209
    %v222 = vsub.f32 %v140, %v209
    %v223 = vsub.f32 %v141, %v209
    %v224 = vsub.f32 %v142, %v209
    %v225 = vsub.f32 %v143, %v209
    %v226 = vmul.f32 %v210, %v210
    %v227 = vmul.f32 %v211, %v211
    %v228 = vmul.f32 %v212, %v212
    %v229 = vmul.f32 %v213, %v213
    %v230 = vmul.f32 %v214, %v214
    %v231 = vmul.f32 %v215, %v215
    %v232 = vmul.f32 %v216, %v216
    %v233 = vmul.f32 %v217, %v217
    %v234 = vmul.f32 %v218, %v218
    %v235 = vmul.f32 %v219, %v219
    %v236 = vmul.f32 %v220, %v220
    %v237 = vmul.f32 %v221, %v221
    %v238 = vmul.f32 %v222, %v222
    %v239 = vmul.f32 %v223, %v223
    %v240 = vmul.f32 %v224, %v224
    %v241 = vmul.f32 %v225, %v225
    %v242 = vsel %vm144, %v226, 0.0
    %243 = vadd.xlane.f32.xlu0 %v242
    %v244 = vpop.xlane.xlu0 %243
    %v245 = vsel %vm144, %v227, 0.0
    %246 = vadd.xlane.f32.xlu0 %v245
    %v247 = vpop.xlane.xlu0 %246
    %v248 = vsel %vm144, %v228, 0.0
    %249 = vadd.xlane.f32.xlu0 %v248
    %v250 = vpop.xlane.xlu0 %249
    %v251 = vsel %vm144, %v229, 0.0
    %252 = vadd.xlane.f32.xlu0 %v251
    %v253 = vpop.xlane.xlu0 %252
    %v254 = vsel %vm144, %v230, 0.0
    %255 = vadd.xlane.f32.xlu0 %v254
    %v256 = vpop.xlane.xlu0 %255
    %v257 = vsel %vm144, %v231, 0.0
    %258 = vadd.xlane.f32.xlu0 %v257
    %v259 = vpop.xlane.xlu0 %258
    %v260 = vsel %vm144, %v232, 0.0
    %261 = vadd.xlane.f32.xlu0 %v260
    %v262 = vpop.xlane.xlu0 %261
    %v263 = vsel %vm144, %v233, 0.0
    %264 = vadd.xlane.f32.xlu0 %v263
    %v265 = vpop.xlane.xlu0 %264
    %v266 = vsel %vm144, %v234, 0.0
    %267 = vadd.xlane.f32.xlu0 %v266
    %v268 = vpop.xlane.xlu0 %267
    %v269 = vsel %vm144, %v235, 0.0
    %270 = vadd.xlane.f32.xlu0 %v269
    %v271 = vpop.xlane.xlu0 %270
    %v272 = vsel %vm144, %v236, 0.0
    %273 = vadd.xlane.f32.xlu0 %v272
    %v274 = vpop.xlane.xlu0 %273
    %v275 = vsel %vm144, %v237, 0.0
    %276 = vadd.xlane.f32.xlu0 %v275
    %v277 = vpop.xlane.xlu0 %276
    %v278 = vsel %vm144, %v238, 0.0
    %279 = vadd.xlane.f32.xlu0 %v278
    %v280 = vpop.xlane.xlu0 %279
    %v281 = vsel %vm144, %v239, 0.0
    %282 = vadd.xlane.f32.xlu0 %v281
    %v283 = vpop.xlane.xlu0 %282
    %v284 = vsel %vm144, %v240, 0.0
    %285 = vadd.xlane.f32.xlu0 %v284
    %v286 = vpop.xlane.xlu0 %285
    %v287 = vsel %vm144, %v241, 0.0
    %288 = vadd.xlane.f32.xlu0 %v287
    %v289 = vpop.xlane.xlu0 %288
    %v290 = vadd.f32 %v244, %v247
    %v291 = vadd.f32 %v290, %v250
    %v292 = vadd.f32 %v291, %v253
    %v293 = vadd.f32 %v292, %v256
    %v294 = vadd.f32 %v293, %v259
    %v295 = vadd.f32 %v294, %v262
    %v296 = vadd.f32 %v295, %v265
    %v297 = vadd.f32 %v296, %v268
    %v298 = vadd.f32 %v297, %v271
    %v299 = vadd.f32 %v298, %v274
    %v300 = vadd.f32 %v299, %v277
    %v301 = vadd.f32 %v300, %v280
    %v302 = vadd.f32 %v301, %v283
    %v303 = vadd.f32 %v302, %v286
    %v304 = vadd.f32 %v303, %v289
    %v305 = vrcp.pop 1023.0
    %v306 = vmul.f32 %v304, %v305
    %v307 = vrsqrt.pop %v306
    %v308 = vmul.f32 %v306, %v307
    %vm309 = vcmp.eq.f32.partialorder %v306, inf
    %v310 = vsel %vm309, %v306, %v308
    %vm311 = vcmp.eq.f32.partialorder %v306, 0.0
    %v312 = vand.u32 %v306, 2147483648
    %v313 = vsel %vm311, %v312, %v310
    %v314 = vadd.f32 %v313, 1e-05
    %v315 = vrcp.pop %v314
    %v316 = vmul.f32 %v210, %v315
    %v317 = vmul.f32 %v211, %v315
    %v318 = vmul.f32 %v212, %v315
    %v319 = vmul.f32 %v213, %v315
    %v320 = vmul.f32 %v214, %v315
    %v321 = vmul.f32 %v215, %v315
    %v322 = vmul.f32 %v216, %v315
    %v323 = vmul.f32 %v217, %v315
    %v324 = vmul.f32 %v218, %v315
    %v325 = vmul.f32 %v219, %v315
    %v326 = vmul.f32 %v220, %v315
    %v327 = vmul.f32 %v221, %v315
    %v328 = vmul.f32 %v222, %v315
    %v329 = vmul.f32 %v223, %v315
    %v330 = vmul.f32 %v224, %v315
    %v331 = vmul.f32 %v225, %v315
    %v332 = vpack.c.bf16 %v317, %v316
    %v333 = vpack.c.bf16 %v319, %v318
    %v334 = vpack.c.bf16 %v321, %v320
    %v335 = vpack.c.bf16 %v323, %v322
    %v336 = vpack.c.bf16 %v325, %v324
    %v337 = vpack.c.bf16 %v327, %v326
    %v338 = vpack.c.bf16 %v329, %v328
    %v339 = vpack.c.bf16 %v331, %v330
    %vm348 = vcmask 1043456
    %v349 = vrot.slane %v332, 4
    %v350 = vrot.slane %v333, 4
    %v351 = vsel %vm348, %v349, %v350
    %v352 = vrot.slane %v334, 4
    %v353 = vsel %vm348, %v350, %v352
    %v354 = vrot.slane %v335, 4
    %v355 = vsel %vm348, %v352, %v354
    %v356 = vrot.slane %v336, 4
    %v357 = vsel %vm348, %v354, %v356
    %v358 = vrot.slane %v337, 4
    %v359 = vsel %vm348, %v356, %v358
    %v360 = vrot.slane %v338, 4
    %v361 = vsel %vm348, %v358, %v360
    %v362 = vrot.slane %v339, 4
    %v363 = vsel %vm348, %v360, %v362
    %vm364 = vcmask 1043456
    %v367 = vsel %vm364, 0, %v349
    %v369 = vsel %vm364, %v362, 0
    %370 = vrot.lane.b32.xlu0 %v332, 64
    %v371 = vpop.permute.xlu0 %370
    %372 = vrot.lane.b32.xlu0 %v333, 64
    %v373 = vpop.permute.xlu0 %372
    %374 = vrot.lane.b32.xlu0 %v334, 64
    %v375 = vpop.permute.xlu0 %374
    %376 = vrot.lane.b32.xlu0 %v335, 64
    %v377 = vpop.permute.xlu0 %376
    %378 = vrot.lane.b32.xlu0 %v336, 64
    %v379 = vpop.permute.xlu0 %378
    %380 = vrot.lane.b32.xlu0 %v337, 64
    %v381 = vpop.permute.xlu0 %380
    %382 = vrot.lane.b32.xlu0 %v338, 64
    %v383 = vpop.permute.xlu0 %382
    %384 = vrot.lane.b32.xlu0 %v339, 64
    %v385 = vpop.permute.xlu0 %384
    %v387 = vsel %vm144, %v367, %v371
    %v391 = vsel %vm144, %v351, %v373
    %v395 = vsel %vm144, %v353, %v375
    %v399 = vsel %vm144, %v355, %v377
    %v403 = vsel %vm144, %v357, %v379
    %v407 = vsel %vm144, %v359, %v381
    %v411 = vsel %vm144, %v361, %v383
    %v415 = vsel %vm144, %v363, %v385
    %v417 = vld [vmem:[%s1] sm:$0xf]
    %v418 = vld [vmem:[%s1 + $0x4] sm:$0xf]
    %v419 = vld [vmem:[%s1 + $0x8] sm:$0xf]
    %v420 = vld [vmem:[%s1 + $0xc] sm:$0xf]
    %v421 = vld [vmem:[%s1 + $0x10] sm:$0xf]
    %v422 = vld [vmem:[%s1 + $0x14] sm:$0xf]
    %v423 = vld [vmem:[%s1 + $0x18] sm:$0xf]
    %v424 = vld [vmem:[%s1 + $0x1c] sm:$0xf]
    %v425 = vld [vmem:[%s1 + $0x20] sm:$0xf]
    %v426 = vld [vmem:[%s1 + $0x24] sm:$0xf]
    %v427 = vld [vmem:[%s1 + $0x28] sm:$0xf]
    %v428 = vld [vmem:[%s1 + $0x2c] sm:$0xf]
    %v429 = vld [vmem:[%s1 + $0x30] sm:$0xf]
    %v430 = vld [vmem:[%s1 + $0x34] sm:$0xf]
    %v431 = vld [vmem:[%s1 + $0x38] sm:$0xf]
    %v432 = vld [vmem:[%s1 + $0x3c] sm:$0xf]
    %v433 = vld [vmem:[%s1 + $0x40] sm:$0xf]
    %v434 = vld [vmem:[%s1 + $0x44] sm:$0xf]
    %v435 = vld [vmem:[%s1 + $0x48] sm:$0xf]
    %v436 = vld [vmem:[%s1 + $0x4c] sm:$0xf]
    %v437 = vld [vmem:[%s1 + $0x50] sm:$0xf]
    %v438 = vld [vmem:[%s1 + $0x54] sm:$0xf]
    %v439 = vld [vmem:[%s1 + $0x58] sm:$0xf]
    %v440 = vld [vmem:[%s1 + $0x5c] sm:$0xf]
    %v441 = vld [vmem:[#allocation5] sm:$0x1]
    %v443 = vlaneseq
    %v444 = vshrl.u32 %v443, 7
    %v445 = vsub.s32 0, %v444
    %v446 = vrot.slane %v441, %v445
    %v472 = vunpack.c.l.b16 %v417
    %v473 = vunpack.c.l.b16 %v418
    %v474 = vunpack.c.l.b16 %v419
    %v475 = vunpack.c.l.b16 %v420
    %v476 = vunpack.c.l.b16 %v421
    %v477 = vunpack.c.l.b16 %v422
    %v478 = vunpack.c.l.b16 %v423
    %v479 = vunpack.c.l.b16 %v424
    %v480 = vunpack.c.l.b16 %v425
    %v481 = vunpack.c.l.b16 %v426
    %v482 = vunpack.c.l.b16 %v427
    %v483 = vunpack.c.l.b16 %v428
    %v484 = vunpack.c.l.b16 %v429
    %v485 = vunpack.c.l.b16 %v430
    %v486 = vunpack.c.l.b16 %v431
    %v487 = vunpack.c.l.b16 %v432
    %v488 = vunpack.c.l.b16 %v433
    %v489 = vunpack.c.l.b16 %v434
    %v490 = vunpack.c.l.b16 %v435
    %v491 = vunpack.c.l.b16 %v436
    %v492 = vunpack.c.l.b16 %v437
    %v493 = vunpack.c.l.b16 %v438
    %v494 = vunpack.c.l.b16 %v439
    %v495 = vunpack.c.l.b16 %v440
    %v496 = vpack.c.b16 %v473, %v472
    %v497 = vpack.c.b16 %v475, %v474
    %v498 = vpack.c.b16 %v477, %v476
    %v499 = vpack.c.b16 %v479, %v478
    %v500 = vpack.c.b16 %v481, %v480
    %v501 = vpack.c.b16 %v483, %v482
    %v502 = vpack.c.b16 %v485, %v484
    %v503 = vpack.c.b16 %v487, %v486
    %v504 = vpack.c.b16 %v489, %v488
    %v505 = vpack.c.b16 %v491, %v490
    %v506 = vpack.c.b16 %v493, %v492
    %v507 = vpack.c.b16 %v495, %v494
    %v520 = vsel %vm144, %v351, 0
    %v522 = vsel %vm144, %v353, 0
    %v524 = vsel %vm144, %v355, 0
    %v526 = vsel %vm144, %v357, 0
    %v528 = vsel %vm144, %v359, 0
    %v530 = vsel %vm144, %v361, 0
    %v532 = vsel %vm144, %v363, 0
    %v534 = vsel %vm144, %v369, 0
    %536 = vmatprep.subr.bf16.mxu0 0
    %537 = vmatpush1.bf16.msra.mxu0 %v503
    %538 = vmatprep.subr.bf16.mxu0 0
    %539 = vmatpush1.bf16.msra.mxu0 %v502
    %540 = vmatprep.subr.bf16.mxu0 0
    %541 = vmatpush1.bf16.msra.mxu0 %v501
    %542 = vmatprep.subr.bf16.mxu0 0
    %543 = vmatpush1.bf16.msra.mxu0 %v500
    %544 = vmatprep.subr.bf16.mxu0 0
    %545 = vmatpush1.bf16.msra.mxu0 %v499
    %546 = vmatprep.subr.bf16.mxu0 0
    %547 = vmatpush1.bf16.msra.mxu0 %v498
    %548 = vmatprep.subr.bf16.mxu0 0
    %549 = vmatpush1.bf16.msra.mxu0 %v497
    %550 = vmatprep.subr.bf16.mxu0 0
    %551 = vmatpush1.bf16.msra.mxu0 %v496
    %552 = vmatprep.subr.bf16.mxu0 0
    %553 = vmatpush2.bf16.msra.mxu0 0
    %554 = vmatprep.subr.bf16.mxu0 0
    %555 = vmatpush2.bf16.msra.mxu0 0
    %556 = vmatprep.subr.bf16.mxu0 0
    %557 = vmatpush2.bf16.msra.mxu0 0
    %558 = vmatprep.subr.bf16.mxu0 0
    %559 = vmatpush2.bf16.msra.mxu0 0
    %560 = vmatprep.subr.bf16.mxu0 0
    %561 = vmatpush2.bf16.msra.mxu0 %v507
    %562 = vmatprep.subr.bf16.mxu0 0
    %563 = vmatpush2.bf16.msra.mxu0 %v506
    %564 = vmatprep.subr.bf16.mxu0 0
    %565 = vmatpush2.bf16.msra.mxu0 %v505
    %566 = vmatprep.subr.bf16.mxu0 0
    %567 = vmatpush2.bf16.msra.mxu0 %v504
    %568 = vmatprep.mubr.bf16.mxu0 %v520
    %569 = vmatmul.mubr.bf16.gmra.mxu0 %v387
    %v570 = vpop.f32.mrf.mxu0
    %v571 = vadd.f32 %v446, %v570
    %v572 = vpop.f32.mrf.mxu0
    %v573 = vpop.f32.mrf.mxu0
    %v574 = vadd.f32 %v446, %v573
    %v575 = vpop.f32.mrf.mxu0
    %576 = vmatprep.mubr.bf16.mxu0 %v522
    %577 = vmatmul.mubr.bf16.gmra.mxu0 %v391
    %v578 = vpop.f32.mrf.mxu0
    %v579 = vadd.f32 %v446, %v578
    %v580 = vpop.f32.mrf.mxu0
    %v581 = vpop.f32.mrf.mxu0
    %v582 = vadd.f32 %v446, %v581
    %v583 = vpop.f32.mrf.mxu0
    %584 = vmatprep.mubr.bf16.mxu0 %v524
    %585 = vmatmul.mubr.bf16.gmra.mxu0 %v395
    %v586 = vpop.f32.mrf.mxu0
    %v587 = vadd.f32 %v446, %v586
    %v588 = vpop.f32.mrf.mxu0
    %v589 = vpop.f32.mrf.mxu0
    %v590 = vadd.f32 %v446, %v589
    %v591 = vpop.f32.mrf.mxu0
    %592 = vmatprep.mubr.bf16.mxu0 %v526
    %593 = vmatmul.mubr.bf16.gmra.mxu0 %v399
    %v594 = vpop.f32.mrf.mxu0
    %v595 = vadd.f32 %v446, %v594
    %v596 = vpop.f32.mrf.mxu0
    %v597 = vpop.f32.mrf.mxu0
    %v598 = vadd.f32 %v446, %v597
    %v599 = vpop.f32.mrf.mxu0
    %600 = vmatprep.mubr.bf16.mxu0 %v528
    %601 = vmatmul.mubr.bf16.gmra.mxu0 %v403
    %v602 = vpop.f32.mrf.mxu0
    %v603 = vadd.f32 %v446, %v602
    %v604 = vpop.f32.mrf.mxu0
    %v605 = vpop.f32.mrf.mxu0
    %v606 = vadd.f32 %v446, %v605
    %v607 = vpop.f32.mrf.mxu0
    %608 = vmatprep.mubr.bf16.mxu0 %v530
    %609 = vmatmul.mubr.bf16.gmra.mxu0 %v407
    %v610 = vpop.f32.mrf.mxu0
    %v611 = vadd.f32 %v446, %v610
    %v612 = vpop.f32.mrf.mxu0
    %v613 = vpop.f32.mrf.mxu0
    %v614 = vadd.f32 %v446, %v613
    %v615 = vpop.f32.mrf.mxu0
    %616 = vmatprep.mubr.bf16.mxu0 %v532
    %617 = vmatmul.mubr.bf16.gmra.mxu0 %v411
    %v618 = vpop.f32.mrf.mxu0
    %v619 = vadd.f32 %v446, %v618
    %v620 = vpop.f32.mrf.mxu0
    %v621 = vpop.f32.mrf.mxu0
    %v622 = vadd.f32 %v446, %v621
    %v623 = vpop.f32.mrf.mxu0
    %624 = vmatprep.mubr.bf16.mxu0 %v534
    %625 = vmatmul.mubr.bf16.gmra.mxu0 %v415
    %v626 = vpop.f32.mrf.mxu0
    %v627 = vadd.f32 %v446, %v626
    %v628 = vpop.f32.mrf.mxu0
    %v629 = vpop.f32.mrf.mxu0
    %v630 = vadd.f32 %v446, %v629
    %v631 = vpop.f32.mrf.mxu0
    %632 = vdwg.mxu0
    %v633 = vmax.f32 %v571, 0.0
    %v634 = vmax.f32 %v574, 0.0
    %v635 = vmax.f32 %v579, 0.0
    %v636 = vmax.f32 %v582, 0.0
    %v637 = vmax.f32 %v587, 0.0
    %v638 = vmax.f32 %v590, 0.0
    %v639 = vmax.f32 %v595, 0.0
    %v640 = vmax.f32 %v598, 0.0
    %v641 = vmax.f32 %v603, 0.0
    %v642 = vmax.f32 %v606, 0.0
    %v643 = vmax.f32 %v611, 0.0
    %v644 = vmax.f32 %v614, 0.0
    %v645 = vmax.f32 %v619, 0.0
    %v646 = vmax.f32 %v622, 0.0
    %v647 = vmax.f32 %v627, 0.0
    %v648 = vmax.f32 %v630, 0.0
    %v649 = vld [vmem:[%s3] sm:$0xf]
    %v650 = vld [vmem:[%s3 + $0x4] sm:$0xf]
    %v651 = vld [vmem:[%s3 + $0x8] sm:$0xf]
    %v652 = vld [vmem:[%s3 + $0xc] sm:$0xf]
    %v653 = vld [vmem:[%s3 + $0x10] sm:$0xf]
    %v654 = vld [vmem:[%s3 + $0x14] sm:$0xf]
    %v655 = vld [vmem:[%s3 + $0x18] sm:$0xf]
    %v656 = vld [vmem:[%s3 + $0x1c] sm:$0xf]
    %v657 = vld [vmem:[#allocation8] sm:$0x1]
    %v659 = vlaneseq
    %v660 = vshrl.u32 %v659, 7
    %v661 = vsub.s32 0, %v660
    %v662 = vrot.slane %v657, %v661
    %v672 = vunpack.c.l.b16 %v649
    %v673 = vunpack.c.l.b16 %v650
    %v674 = vunpack.c.l.b16 %v651
    %v675 = vunpack.c.l.b16 %v652
    %v676 = vunpack.c.l.b16 %v653
    %v677 = vunpack.c.l.b16 %v654
    %v678 = vunpack.c.l.b16 %v655
    %v679 = vunpack.c.l.b16 %v656
    %v680 = vpack.c.b16 %v673, %v672
    %v681 = vpack.c.b16 %v675, %v674
    %v682 = vpack.c.b16 %v677, %v676
    %v683 = vpack.c.b16 %v679, %v678
    %v689 = vsel %vm144, %v332, 0
    %v692 = vsel %vm144, %v333, 0
    %v695 = vsel %vm144, %v334, 0
    %v698 = vsel %vm144, %v335, 0
    %v701 = vsel %vm144, %v336, 0
    %v704 = vsel %vm144, %v337, 0
    %v707 = vsel %vm144, %v338, 0
    %v710 = vsel %vm144, %v339, 0
    %712 = vmatprep.subr.bf16.mxu0 0
    %713 = vmatpush1.bf16.msra.mxu0 0
    %714 = vmatprep.subr.bf16.mxu0 0
    %715 = vmatpush1.bf16.msra.mxu0 0
    %716 = vmatprep.subr.bf16.mxu0 0
    %717 = vmatpush1.bf16.msra.mxu0 0
    %718 = vmatprep.subr.bf16.mxu0 0
    %719 = vmatpush1.bf16.msra.mxu0 0
    %720 = vmatprep.subr.bf16.mxu0 0
    %721 = vmatpush1.bf16.msra.mxu0 %v683
    %722 = vmatprep.subr.bf16.mxu0 0
    %723 = vmatpush1.bf16.msra.mxu0 %v682
    %724 = vmatprep.subr.bf16.mxu0 0
    %725 = vmatpush1.bf16.msra.mxu0 %v681
    %726 = vmatprep.subr.bf16.mxu0 0
    %727 = vmatpush1.bf16.msra.mxu0 %v680
    %728 = vmatprep.subr.bf16.mxu0 0
    %729 = vmatpush2.bf16.msra.mxu0 0
    %730 = vmatprep.subr.bf16.mxu0 0
    %731 = vmatpush2.bf16.msra.mxu0 0
    %732 = vmatprep.subr.bf16.mxu0 0
    %733 = vmatpush2.bf16.msra.mxu0 0
    %734 = vmatprep.subr.bf16.mxu0 0
    %735 = vmatpush2.bf16.msra.mxu0 0
    %736 = vmatprep.subr.bf16.mxu0 0
    %737 = vmatpush2.bf16.msra.mxu0 0
    %738 = vmatprep.subr.bf16.mxu0 0
    %739 = vmatpush2.bf16.msra.mxu0 0
    %740 = vmatprep.subr.bf16.mxu0 0
    %741 = vmatpush2.bf16.msra.mxu0 0
    %742 = vmatprep.subr.bf16.mxu0 0
    %743 = vmatpush2.bf16.msra.mxu0 0
    %744 = vmatprep.mubr.bf16.mxu0 0
    %745 = vmatmul.mubr.bf16.gmra.mxu0 %v689
    %v746 = vpop.f32.mrf.mxu0
    %v747 = vadd.f32 %v662, %v746
    %v748 = vpop.f32.mrf.mxu0
    %v749 = vpop.f32.mrf.mxu0
    %v750 = vadd.f32 %v662, %v749
    %v751 = vpop.f32.mrf.mxu0
    %752 = vmatprep.mubr.bf16.mxu0 0
    %753 = vmatmul.mubr.bf16.gmra.mxu0 %v692
    %v754 = vpop.f32.mrf.mxu0
    %v755 = vadd.f32 %v662, %v754
    %v756 = vpop.f32.mrf.mxu0
    %v757 = vpop.f32.mrf.mxu0
    %v758 = vadd.f32 %v662, %v757
    %v759 = vpop.f32.mrf.mxu0
    %760 = vmatprep.mubr.bf16.mxu0 0
    %761 = vmatmul.mubr.bf16.gmra.mxu0 %v695
    %v762 = vpop.f32.mrf.mxu0
    %v763 = vadd.f32 %v662, %v762
    %v764 = vpop.f32.mrf.mxu0
    %v765 = vpop.f32.mrf.mxu0
    %v766 = vadd.f32 %v662, %v765
    %v767 = vpop.f32.mrf.mxu0
    %768 = vmatprep.mubr.bf16.mxu0 0
    %769 = vmatmul.mubr.bf16.gmra.mxu0 %v698
    %v770 = vpop.f32.mrf.mxu0
    %v771 = vadd.f32 %v662, %v770
    %v772 = vpop.f32.mrf.mxu0
    %v773 = vpop.f32.mrf.mxu0
    %v774 = vadd.f32 %v662, %v773
    %v775 = vpop.f32.mrf.mxu0
    %776 = vmatprep.mubr.bf16.mxu0 0
    %777 = vmatmul.mubr.bf16.gmra.mxu0 %v701
    %v778 = vpop.f32.mrf.mxu0
    %v779 = vadd.f32 %v662, %v778
    %v780 = vpop.f32.mrf.mxu0
    %v781 = vpop.f32.mrf.mxu0
    %v782 = vadd.f32 %v662, %v781
    %v783 = vpop.f32.mrf.mxu0
    %784 = vmatprep.mubr.bf16.mxu0 0
    %785 = vmatmul.mubr.bf16.gmra.mxu0 %v704
    %v786 = vpop.f32.mrf.mxu0
    %v787 = vadd.f32 %v662, %v786
    %v788 = vpop.f32.mrf.mxu0
    %v789 = vpop.f32.mrf.mxu0
    %v790 = vadd.f32 %v662, %v789
    %v791 = vpop.f32.mrf.mxu0
    %792 = vmatprep.mubr.bf16.mxu0 0
    %793 = vmatmul.mubr.bf16.gmra.mxu0 %v707
    %v794 = vpop.f32.mrf.mxu0
    %v795 = vadd.f32 %v662, %v794
    %v796 = vpop.f32.mrf.mxu0
    %v797 = vpop.f32.mrf.mxu0
    %v798 = vadd.f32 %v662, %v797
    %v799 = vpop.f32.mrf.mxu0
    %800 = vmatprep.mubr.bf16.mxu0 0
    %801 = vmatmul.mubr.bf16.gmra.mxu0 %v710
    %v802 = vpop.f32.mrf.mxu0
    %v803 = vadd.f32 %v662, %v802
    %v804 = vpop.f32.mrf.mxu0
    %v805 = vpop.f32.mrf.mxu0
    %v806 = vadd.f32 %v662, %v805
    %v807 = vpop.f32.mrf.mxu0
    %808 = vdwg.mxu0
    %v809 = vadd.f32 %v633, %v747
    %v810 = vadd.f32 %v634, %v750
    %v811 = vadd.f32 %v635, %v755
    %v812 = vadd.f32 %v636, %v758
    %v813 = vadd.f32 %v637, %v763
    %v814 = vadd.f32 %v638, %v766
    %v815 = vadd.f32 %v639, %v771
    %v816 = vadd.f32 %v640, %v774
    %v817 = vadd.f32 %v641, %v779
    %v818 = vadd.f32 %v642, %v782
    %v819 = vadd.f32 %v643, %v787
    %v820 = vadd.f32 %v644, %v790
    %v821 = vadd.f32 %v645, %v795
    %v822 = vadd.f32 %v646, %v798
    %v823 = vadd.f32 %v647, %v803
    %v824 = vadd.f32 %v648, %v806
    %v825 = vmax.f32 %v809, 0.0
    %v826 = vmax.f32 %v810, 0.0
    %v827 = vmax.f32 %v811, 0.0
    %v828 = vmax.f32 %v812, 0.0
    %v829 = vmax.f32 %v813, 0.0
    %v830 = vmax.f32 %v814, 0.0
    %v831 = vmax.f32 %v815, 0.0
    %v832 = vmax.f32 %v816, 0.0
    %v833 = vmax.f32 %v817, 0.0
    %v834 = vmax.f32 %v818, 0.0
    %v835 = vmax.f32 %v819, 0.0
    %v836 = vmax.f32 %v820, 0.0
    %v837 = vmax.f32 %v821, 0.0
    %v838 = vmax.f32 %v822, 0.0
    %v839 = vmax.f32 %v823, 0.0
    %v840 = vmax.f32 %v824, 0.0
    %v841 = vpack.c.bf16 %v826, %v825
    %v842 = vpack.c.bf16 %v828, %v827
    %v843 = vpack.c.bf16 %v830, %v829
    %v844 = vpack.c.bf16 %v832, %v831
    %v845 = vpack.c.bf16 %v834, %v833
    %v846 = vpack.c.bf16 %v836, %v835
    %v847 = vpack.c.bf16 %v838, %v837
    %v848 = vpack.c.bf16 %v840, %v839
    %v849 = vld [vmem:[%s5] sm:$0xf]
    %v850 = vld [vmem:[%s5 + $0x4] sm:$0xf]
    %v851 = vld [vmem:[%s5 + $0x8] sm:$0xf]
    %v852 = vld [vmem:[%s5 + $0xc] sm:$0xf]
    %v853 = vld [vmem:[#allocation10] sm:$0x1]
    %v855 = vlaneseq
    %v856 = vshrl.u32 %v855, 7
    %v857 = vsub.s32 0, %v856
    %v858 = vrot.slane %v853, %v857
    %v864 = vunpack.c.l.b16 %v849
    %v865 = vunpack.c.l.b16 %v850
    %v866 = vunpack.c.l.b16 %v851
    %v867 = vunpack.c.l.b16 %v852
    %v868 = vpack.c.b16 %v865, %v864
    %v869 = vpack.c.b16 %v867, %v866
    %vm872 = vcmask 261120
    %v874 = vsel %vm872, %v841, 0
    %v877 = vsel %vm872, %v842, 0
    %v880 = vsel %vm872, %v843, 0
    %v883 = vsel %vm872, %v844, 0
    %v886 = vsel %vm872, %v845, 0
    %v889 = vsel %vm872, %v846, 0
    %v892 = vsel %vm872, %v847, 0
    %v895 = vsel %vm872, %v848, 0
    %897 = vmatprep.subr.bf16.mxu0 0
    %898 = vmatpush1.bf16.msra.mxu0 0
    %899 = vmatprep.subr.bf16.mxu0 0
    %900 = vmatpush1.bf16.msra.mxu0 0
    %901 = vmatprep.subr.bf16.mxu0 0
    %902 = vmatpush1.bf16.msra.mxu0 0
    %903 = vmatprep.subr.bf16.mxu0 0
    %904 = vmatpush1.bf16.msra.mxu0 0
    %905 = vmatprep.subr.bf16.mxu0 0
    %906 = vmatpush1.bf16.msra.mxu0 0
    %907 = vmatprep.subr.bf16.mxu0 0
    %908 = vmatpush1.bf16.msra.mxu0 0
    %909 = vmatprep.subr.bf16.mxu0 0
    %910 = vmatpush1.bf16.msra.mxu0 %v869
    %911 = vmatprep.subr.bf16.mxu0 0
    %912 = vmatpush1.bf16.msra.mxu0 %v868
    %913 = vmatprep.subr.bf16.mxu0 0
    %914 = vmatpush2.bf16.msra.mxu0 0
    %915 = vmatprep.subr.bf16.mxu0 0
    %916 = vmatpush2.bf16.msra.mxu0 0
    %917 = vmatprep.subr.bf16.mxu0 0
    %918 = vmatpush2.bf16.msra.mxu0 0
    %919 = vmatprep.subr.bf16.mxu0 0
    %920 = vmatpush2.bf16.msra.mxu0 0
    %921 = vmatprep.subr.bf16.mxu0 0
    %922 = vmatpush2.bf16.msra.mxu0 0
    %923 = vmatprep.subr.bf16.mxu0 0
    %924 = vmatpush2.bf16.msra.mxu0 0
    %925 = vmatprep.subr.bf16.mxu0 0
    %926 = vmatpush2.bf16.msra.mxu0 0
    %927 = vmatprep.subr.bf16.mxu0 0
    %928 = vmatpush2.bf16.msra.mxu0 0
    %929 = vmatprep.mubr.bf16.mxu0 0
    %930 = vmatmul.mubr.bf16.gmra.mxu0 %v874
    %v931 = vpop.f32.mrf.mxu0
    %v932 = vadd.f32 %v858, %v931
    %v933 = vpop.f32.mrf.mxu0
    %v934 = vpop.f32.mrf.mxu0
    %v935 = vadd.f32 %v858, %v934
    %v936 = vpop.f32.mrf.mxu0
    %937 = vmatprep.mubr.bf16.mxu0 0
    %938 = vmatmul.mubr.bf16.gmra.mxu0 %v877
    %v939 = vpop.f32.mrf.mxu0
    %v940 = vadd.f32 %v858, %v939
    %v941 = vpop.f32.mrf.mxu0
    %v942 = vpop.f32.mrf.mxu0
    %v943 = vadd.f32 %v858, %v942
    %v944 = vpop.f32.mrf.mxu0
    %945 = vmatprep.mubr.bf16.mxu0 0
    %946 = vmatmul.mubr.bf16.gmra.mxu0 %v880
    %v947 = vpop.f32.mrf.mxu0
    %v948 = vadd.f32 %v858, %v947
    %v949 = vpop.f32.mrf.mxu0
    %v950 = vpop.f32.mrf.mxu0
    %v951 = vadd.f32 %v858, %v950
    %v952 = vpop.f32.mrf.mxu0
    %953 = vmatprep.mubr.bf16.mxu0 0
    %954 = vmatmul.mubr.bf16.gmra.mxu0 %v883
    %v955 = vpop.f32.mrf.mxu0
    %v956 = vadd.f32 %v858, %v955
    %v957 = vpop.f32.mrf.mxu0
    %v958 = vpop.f32.mrf.mxu0
    %v959 = vadd.f32 %v858, %v958
    %v960 = vpop.f32.mrf.mxu0
    %961 = vmatprep.mubr.bf16.mxu0 0
    %962 = vmatmul.mubr.bf16.gmra.mxu0 %v886
    %v963 = vpop.f32.mrf.mxu0
    %v964 = vadd.f32 %v858, %v963
    %v965 = vpop.f32.mrf.mxu0
    %v966 = vpop.f32.mrf.mxu0
    %v967 = vadd.f32 %v858, %v966
    %v968 = vpop.f32.mrf.mxu0
    %969 = vmatprep.mubr.bf16.mxu0 0
    %970 = vmatmul.mubr.bf16.gmra.mxu0 %v889
    %v971 = vpop.f32.mrf.mxu0
    %v972 = vadd.f32 %v858, %v971
    %v973 = vpop.f32.mrf.mxu0
    %v974 = vpop.f32.mrf.mxu0
    %v975 = vadd.f32 %v858, %v974
    %v976 = vpop.f32.mrf.mxu0
    %977 = vmatprep.mubr.bf16.mxu0 0
    %978 = vmatmul.mubr.bf16.gmra.mxu0 %v892
    %v979 = vpop.f32.mrf.mxu0
    %v980 = vadd.f32 %v858, %v979
    %v981 = vpop.f32.mrf.mxu0
    %v982 = vpop.f32.mrf.mxu0
    %v983 = vadd.f32 %v858, %v982
    %v984 = vpop.f32.mrf.mxu0
    %985 = vmatprep.mubr.bf16.mxu0 0
    %986 = vmatmul.mubr.bf16.gmra.mxu0 %v895
    %v987 = vpop.f32.mrf.mxu0
    %v988 = vadd.f32 %v858, %v987
    %v989 = vpop.f32.mrf.mxu0
    %v990 = vpop.f32.mrf.mxu0
    %v991 = vadd.f32 %v858, %v990
    %v992 = vpop.f32.mrf.mxu0
    %993 = vdwg.mxu0
    %vm994 = vcmask 785408
    %995 = vst.msk [vmem:[#allocation2] sm:$0xff] %vm994, %v932
    %996 = vst.msk [vmem:[#allocation2 + $0x8] sm:$0xff] %vm994, %v935
    %997 = vst.msk [vmem:[#allocation2 + $0x10] sm:$0xff] %vm994, %v940
    %998 = vst.msk [vmem:[#allocation2 + $0x18] sm:$0xff] %vm994, %v943
    %999 = vst.msk [vmem:[#allocation2 + $0x20] sm:$0xff] %vm994, %v948
    %1000 = vst.msk [vmem:[#allocation2 + $0x28] sm:$0xff] %vm994, %v951
    %1001 = vst.msk [vmem:[#allocation2 + $0x30] sm:$0xff] %vm994, %v956
    %1002 = vst.msk [vmem:[#allocation2 + $0x38] sm:$0xff] %vm994, %v959
    %1003 = vst.msk [vmem:[#allocation2 + $0x40] sm:$0xff] %vm994, %v964
    %1004 = vst.msk [vmem:[#allocation2 + $0x48] sm:$0xff] %vm994, %v967
    %1005 = vst.msk [vmem:[#allocation2 + $0x50] sm:$0xff] %vm994, %v972
    %1006 = vst.msk [vmem:[#allocation2 + $0x58] sm:$0xff] %vm994, %v975
    %1007 = vst.msk [vmem:[#allocation2 + $0x60] sm:$0xff] %vm994, %v980
    %1008 = vst.msk [vmem:[#allocation2 + $0x68] sm:$0xff] %vm994, %v983
    %1009 = vst.msk [vmem:[#allocation2 + $0x70] sm:$0xff] %vm994, %v988
    %1010 = vst.msk [vmem:[#allocation2 + $0x78] sm:$0xff] %vm994, %v991
    %v1011 = vld [vmem:[#allocation11] sm:$0xf]
    %v1012 = vld [vmem:[#allocation11 + $0x4] sm:$0xf]
    %v1013 = vld [vmem:[#allocation11 + $0x8] sm:$0xf]
    %v1014 = vld [vmem:[#allocation11 + $0xc] sm:$0xf]
    %v1015 = vld [vmem:[#allocation13] sm:$0x1]
    %v1016 = vld [vmem:[#allocation2] sm:$0xff]
    %v1021 = vunpack.c.l.b16 %v1011
    %v1022 = vunpack.c.l.b16 %v1012
    %v1023 = vunpack.c.l.b16 %v1013
    %v1024 = vunpack.c.l.b16 %v1014
    %v1025 = vpack.c.b16 %v1022, %v1021
    %v1026 = vpack.c.b16 %v1024, %v1023
    %v1029 = vsel %vm872, 0, 0
    %1031 = vmatprep.subr.bf16.mxu0 0
    %1032 = vmatpush1.bf16.msra.mxu0 0
    %1033 = vmatprep.subr.bf16.mxu0 0
    %1034 = vmatpush1.bf16.msra.mxu0 0
    %1035 = vmatprep.subr.bf16.mxu0 0
    %1036 = vmatpush1.bf16.msra.mxu0 0
    %1037 = vmatprep.subr.bf16.mxu0 0
    %1038 = vmatpush1.bf16.msra.mxu0 0
    %1039 = vmatprep.subr.bf16.mxu0 0
    %1040 = vmatpush1.bf16.msra.mxu0 0
    %1041 = vmatprep.subr.bf16.mxu0 0
    %1042 = vmatpush1.bf16.msra.mxu0 0
    %1043 = vmatprep.subr.bf16.mxu0 0
    %1044 = vmatpush1.bf16.msra.mxu0 %v1026
    %1045 = vmatprep.subr.bf16.mxu0 0
    %1046 = vmatpush1.bf16.msra.mxu0 %v1025
    %1047 = vmatprep.subr.bf16.mxu0 0
    %1048 = vmatpush2.bf16.msra.mxu0 0
    %1049 = vmatprep.subr.bf16.mxu0 0
    %1050 = vmatpush2.bf16.msra.mxu0 0
    %1051 = vmatprep.subr.bf16.mxu0 0
    %1052 = vmatpush2.bf16.msra.mxu0 0
    %1053 = vmatprep.subr.bf16.mxu0 0
    %1054 = vmatpush2.bf16.msra.mxu0 0
    %1055 = vmatprep.subr.bf16.mxu0 0
    %1056 = vmatpush2.bf16.msra.mxu0 0
    %1057 = vmatprep.subr.bf16.mxu0 0
    %1058 = vmatpush2.bf16.msra.mxu0 0
    %1059 = vmatprep.subr.bf16.mxu0 0
    %1060 = vmatpush2.bf16.msra.mxu0 0
    %1061 = vmatprep.subr.bf16.mxu0 0
    %1062 = vmatpush2.bf16.msra.mxu0 0
    %1063 = vmatprep.mubr.bf16.mxu0 0
    %1064 = vmatmul.mubr.bf16.gmra.mxu0 %v1029
    %v1065 = vpop.f32.mrf.mxu0
    %v1066 = vadd.f32 0.0, %v1065
    %v1067 = vpop.f32.mrf.mxu0
    %v1068 = vpop.f32.mrf.mxu0
    %v1069 = vpop.f32.mrf.mxu0
    %1070 = vdwg.mxu0
    %v1071 = vadd.f32 %v1016, %v1066
    %v1072 = vxor.u32 %v1071, 2147483648
    %v1073 = vmul.f32 %v1072, 1.442695
    %v1074 = vpow.pop %v1073
    %v1075 = vadd.f32 %v1074, 1.0
    %v1076 = vrcp.pop %v1075
    %v1077 = vmul.f32 1.0, %v1076
    %v1079 = vlaneseq
    %v1080 = vshrl.u32 %v1079, 7
    %v1081 = vsub.s32 0, %v1080
    %v1082 = vrot.slane %v1015, %v1081
    %1083 = vrot.lane.b32.xlu0 %v1082, 64
    %v1084 = vpop.permute.xlu0 %1083
    %v1086 = vadd.f32 %v1066, %v1084
    %1088 = vrot.lane.b32.xlu0 %v1086, 64
    %v1089 = vpop.permute.xlu0 %1088
    %v1091 = vmul.f32 %v1077, %v1089
    %1093 = vrot.lane.b32.xlu0 %v1091, 64
    %v1094 = vpop.permute.xlu0 %1093
    %v1096 = vadd.f32 %v1016, %v1094
    %v1097 = vtanh.pop %v1096
    %v1098 = vsub.f32 1.0, %v1077
    %1100 = vrot.lane.b32.xlu0 %v1097, 96
    %v1101 = vpop.permute.xlu0 %1100
    %v1103 = vmul.f32 %v1098, %v1101
    %v1104 = vmul.f32 %v1077, 0.0
    %v1105 = vadd.f32 %v1103, %v1104
    %1107 = vrot.lane.b32.xlu0 %v1105, 96
    %v1108 = vpop.permute.xlu0 %1107
    %1110 = vst.msk [vmem:[#allocation3] sm:$0xff] %vm872, %v1108
    %s1111 = scalar_lea.vmem [#allocation2], 8
    %v1112 = vld [vmem:[%s1111] sm:$0xff]
    %v1113 = vpack.c.bf16 %v1105, %v1105
    %1115 = vrot.lane.b32.xlu0 %v1113, 96
    %v1116 = vpop.permute.xlu0 %1115
    %v1118 = vsel %vm872, %v1116, 0
    %1120 = vmatprep.subr.bf16.mxu0 0
    %1121 = vmatpush1.bf16.msra.mxu0 0
    %1122 = vmatprep.subr.bf16.mxu0 0
    %1123 = vmatpush1.bf16.msra.mxu0 0
    %1124 = vmatprep.subr.bf16.mxu0 0
    %1125 = vmatpush1.bf16.msra.mxu0 0
    %1126 = vmatprep.subr.bf16.mxu0 0
    %1127 = vmatpush1.bf16.msra.mxu0 0
    %1128 = vmatprep.subr.bf16.mxu0 0
    %1129 = vmatpush1.bf16.msra.mxu0 0
    %1130 = vmatprep.subr.bf16.mxu0 0
    %1131 = vmatpush1.bf16.msra.mxu0 0
    %1132 = vmatprep.subr.bf16.mxu0 0
    %1133 = vmatpush1.bf16.msra.mxu0 %v1026
    %1134 = vmatprep.subr.bf16.mxu0 0
    %1135 = vmatpush1.bf16.msra.mxu0 %v1025
    %1136 = vmatprep.subr.bf16.mxu0 0
    %1137 = vmatpush2.bf16.msra.mxu0 0
    %1138 = vmatprep.subr.bf16.mxu0 0
    %1139 = vmatpush2.bf16.msra.mxu0 0
    %1140 = vmatprep.subr.bf16.mxu0 0
    %1141 = vmatpush2.bf16.msra.mxu0 0
    %1142 = vmatprep.subr.bf16.mxu0 0
    %1143 = vmatpush2.bf16.msra.mxu0 0
    %1144 = vmatprep.subr.bf16.mxu0 0
    %1145 = vmatpush2.bf16.msra.mxu0 0
    %1146 = vmatprep.subr.bf16.mxu0 0
    %1147 = vmatpush2.bf16.msra.mxu0 0
    %1148 = vmatprep.subr.bf16.mxu0 0
    %1149 = vmatpush2.bf16.msra.mxu0 0
    %1150 = vmatprep.subr.bf16.mxu0 0
    %1151 = vmatpush2.bf16.msra.mxu0 0
    %1152 = vmatprep.mubr.bf16.mxu0 0
    %1153 = vmatmul.mubr.bf16.gmra.mxu0 %v1118
    %v1154 = vpop.f32.mrf.mxu0
    %v1155 = vadd.f32 0.0, %v1154
    %v1156 = vpop.f32.mrf.mxu0
    %v1157 = vpop.f32.mrf.mxu0
    %v1158 = vpop.f32.mrf.mxu0
    %1159 = vdwg.mxu0
    %v1160 = vadd.f32 %v1112, %v1155
    %v1161 = vxor.u32 %v1160, 2147483648
    %v1162 = vmul.f32 %v1161, 1.442695
    %v1163 = vpow.pop %v1162
    %v1164 = vadd.f32 %v1163, 1.0
    %v1165 = vrcp.pop %v1164
    %v1166 = vmul.f32 1.0, %v1165
    %v1167 = vadd.f32 %v1155, %v1084
    %1169 = vrot.lane.b32.xlu0 %v1167, 64
    %v1170 = vpop.permute.xlu0 %1169
    %v1172 = vmul.f32 %v1166, %v1170
    %1174 = vrot.lane.b32.xlu0 %v1172, 64
    %v1175 = vpop.permute.xlu0 %1174
    %v1177 = vadd.f32 %v1112, %v1175
    %v1178 = vtanh.pop %v1177
    %v1179 = vsub.f32 1.0, %v1166
    %1181 = vrot.lane.b32.xlu0 %v1178, 96
    %v1182 = vpop.permute.xlu0 %1181
    %v1184 = vmul.f32 %v1179, %v1182
    %v1185 = vmul.f32 %v1166, %v1105
    %v1186 = vadd.f32 %v1184, %v1185
    %1188 = vrot.lane.b32.xlu0 %v1186, 96
    %v1189 = vpop.permute.xlu0 %1188
    %s1191 = scalar_lea.vmem [#allocation3], 8
    %1192 = vst.msk [vmem:[%s1191] sm:$0xff] %vm872, %v1189
    %s1193 = scalar_lea.vmem [#allocation2], 16
    %v1194 = vld [vmem:[%s1193] sm:$0xff]
    %v1195 = vpack.c.bf16 %v1186, %v1186
    %1197 = vrot.lane.b32.xlu0 %v1195, 96
    %v1198 = vpop.permute.xlu0 %1197
    %v1200 = vsel %vm872, %v1198, 0
    %1202 = vmatprep.subr.bf16.mxu0 0
    %1203 = vmatpush1.bf16.msra.mxu0 0
    %1204 = vmatprep.subr.bf16.mxu0 0
    %1205 = vmatpush1.bf16.msra.mxu0 0
    %1206 = vmatprep.subr.bf16.mxu0 0
    %1207 = vmatpush1.bf16.msra.mxu0 0
    %1208 = vmatprep.subr.bf16.mxu0 0
    %1209 = vmatpush1.bf16.msra.mxu0 0
    %1210 = vmatprep.subr.bf16.mxu0 0
    %1211 = vmatpush1.bf16.msra.mxu0 0
    %1212 = vmatprep.subr.bf16.mxu0 0
    %1213 = vmatpush1.bf16.msra.mxu0 0
    %1214 = vmatprep.subr.bf16.mxu0 0
    %1215 = vmatpush1.bf16.msra.mxu0 %v1026
    %1216 = vmatprep.subr.bf16.mxu0 0
    %1217 = vmatpush1.bf16.msra.mxu0 %v1025
    %1218 = vmatprep.subr.bf16.mxu0 0
    %1219 = vmatpush2.bf16.msra.mxu0 0
    %1220 = vmatprep.subr.bf16.mxu0 0
    %1221 = vmatpush2.bf16.msra.mxu0 0
    %1222 = vmatprep.subr.bf16.mxu0 0
    %1223 = vmatpush2.bf16.msra.mxu0 0
    %1224 = vmatprep.subr.bf16.mxu0 0
    %1225 = vmatpush2.bf16.msra.mxu0 0
    %1226 = vmatprep.subr.bf16.mxu0 0
    %1227 = vmatpush2.bf16.msra.mxu0 0
    %1228 = vmatprep.subr.bf16.mxu0 0
    %1229 = vmatpush2.bf16.msra.mxu0 0
    %1230 = vmatprep.subr.bf16.mxu0 0
    %1231 = vmatpush2.bf16.msra.mxu0 0
    %1232 = vmatprep.subr.bf16.mxu0 0
    %1233 = vmatpush2.bf16.msra.mxu0 0
    %1234 = vmatprep.mubr.bf16.mxu0 0
    %1235 = vmatmul.mubr.bf16.gmra.mxu0 %v1200
    %v1236 = vpop.f32.mrf.mxu0
    %v1237 = vadd.f32 0.0, %v1236
    %v1238 = vpop.f32.mrf.mxu0
    %v1239 = vpop.f32.mrf.mxu0
    %v1240 = vpop.f32.mrf.mxu0
    %1241 = vdwg.mxu0
    %v1242 = vadd.f32 %v1194, %v1237
    %v1243 = vxor.u32 %v1242, 2147483648
    %v1244 = vmul.f32 %v1243, 1.442695
    %v1245 = vpow.pop %v1244
    %v1246 = vadd.f32 %v1245, 1.0
    %v1247 = vrcp.pop %v1246
    %v1248 = vmul.f32 1.0, %v1247
    %v1249 = vadd.f32 %v1237, %v1084
    %1251 = vrot.lane.b32.xlu0 %v1249, 64
    %v1252 = vpop.permute.xlu0 %1251
    %v1254 = vmul.f32 %v1248, %v1252
    %1256 = vrot.lane.b32.xlu0 %v1254, 64
    %v1257 = vpop.permute.xlu0 %1256
    %v1259 = vadd.f32 %v1194, %v1257
    %v1260 = vtanh.pop %v1259
    %v1261 = vsub.f32 1.0, %v1248
    %1263 = vrot.lane.b32.xlu0 %v1260, 96
    %v1264 = vpop.permute.xlu0 %1263
    %v1266 = vmul.f32 %v1261, %v1264
    %v1267 = vmul.f32 %v1248, %v1186
    %v1268 = vadd.f32 %v1266, %v1267
    %1270 = vrot.lane.b32.xlu0 %v1268, 96
    %v1271 = vpop.permute.xlu0 %1270
    %s1273 = scalar_lea.vmem [#allocation3], 16
    %1274 = vst.msk [vmem:[%s1273] sm:$0xff] %vm872, %v1271
    %s1275 = scalar_lea.vmem [#allocation2], 24
    %v1276 = vld [vmem:[%s1275] sm:$0xff]
    %v1277 = vpack.c.bf16 %v1268, %v1268
    %1279 = vrot.lane.b32.xlu0 %v1277, 96
    %v1280 = vpop.permute.xlu0 %1279
    %v1282 = vsel %vm872, %v1280, 0
    %1284 = vmatprep.subr.bf16.mxu0 0
    %1285 = vmatpush1.bf16.msra.mxu0 0
    %1286 = vmatprep.subr.bf16.mxu0 0
    %1287 = vmatpush1.bf16.msra.mxu0 0
    %1288 = vmatprep.subr.bf16.mxu0 0
    %1289 = vmatpush1.bf16.msra.mxu0 0
    %1290 = vmatprep.subr.bf16.mxu0 0
    %1291 = vmatpush1.bf16.msra.mxu0 0
    %1292 = vmatprep.subr.bf16.mxu0 0
    %1293 = vmatpush1.bf16.msra.mxu0 0
    %1294 = vmatprep.subr.bf16.mxu0 0
    %1295 = vmatpush1.bf16.msra.mxu0 0
    %1296 = vmatprep.subr.bf16.mxu0 0
    %1297 = vmatpush1.bf16.msra.mxu0 %v1026
    %1298 = vmatprep.subr.bf16.mxu0 0
    %1299 = vmatpush1.bf16.msra.mxu0 %v1025
    %1300 = vmatprep.subr.bf16.mxu0 0
    %1301 = vmatpush2.bf16.msra.mxu0 0
    %1302 = vmatprep.subr.bf16.mxu0 0
    %1303 = vmatpush2.bf16.msra.mxu0 0
    %1304 = vmatprep.subr.bf16.mxu0 0
    %1305 = vmatpush2.bf16.msra.mxu0 0
    %1306 = vmatprep.subr.bf16.mxu0 0
    %1307 = vmatpush2.bf16.msra.mxu0 0
    %1308 = vmatprep.subr.bf16.mxu0 0
    %1309 = vmatpush2.bf16.msra.mxu0 0
    %1310 = vmatprep.subr.bf16.mxu0 0
    %1311 = vmatpush2.bf16.msra.mxu0 0
    %1312 = vmatprep.subr.bf16.mxu0 0
    %1313 = vmatpush2.bf16.msra.mxu0 0
    %1314 = vmatprep.subr.bf16.mxu0 0
    %1315 = vmatpush2.bf16.msra.mxu0 0
    %1316 = vmatprep.mubr.bf16.mxu0 0
    %1317 = vmatmul.mubr.bf16.gmra.mxu0 %v1282
    %v1318 = vpop.f32.mrf.mxu0
    %v1319 = vadd.f32 0.0, %v1318
    %v1320 = vpop.f32.mrf.mxu0
    %v1321 = vpop.f32.mrf.mxu0
    %v1322 = vpop.f32.mrf.mxu0
    %1323 = vdwg.mxu0
    %v1324 = vadd.f32 %v1276, %v1319
    %v1325 = vxor.u32 %v1324, 2147483648
    %v1326 = vmul.f32 %v1325, 1.442695
    %v1327 = vpow.pop %v1326
    %v1328 = vadd.f32 %v1327, 1.0
    %v1329 = vrcp.pop %v1328
    %v1330 = vmul.f32 1.0, %v1329
    %v1331 = vadd.f32 %v1319, %v1084
    %1333 = vrot.lane.b32.xlu0 %v1331, 64
    %v1334 = vpop.permute.xlu0 %1333
    %v1336 = vmul.f32 %v1330, %v1334
    %1338 = vrot.lane.b32.xlu0 %v1336, 64
    %v1339 = vpop.permute.xlu0 %1338
    %v1341 = vadd.f32 %v1276, %v1339
    %v1342 = vtanh.pop %v1341
    %v1343 = vsub.f32 1.0, %v1330
    %1345 = vrot.lane.b32.xlu0 %v1342, 96
    %v1346 = vpop.permute.xlu0 %1345
    %v1348 = vmul.f32 %v1343, %v1346
    %v1349 = vmul.f32 %v1330, %v1268
    %v1350 = vadd.f32 %v1348, %v1349
    %1352 = vrot.lane.b32.xlu0 %v1350, 96
    %v1353 = vpop.permute.xlu0 %1352
    %s1355 = scalar_lea.vmem [#allocation3], 24
    %1356 = vst.msk [vmem:[%s1355] sm:$0xff] %vm872, %v1353
    %s1357 = scalar_lea.vmem [#allocation2], 32
    %v1358 = vld [vmem:[%s1357] sm:$0xff]
    %v1359 = vpack.c.bf16 %v1350, %v1350
    %1361 = vrot.lane.b32.xlu0 %v1359, 96
    %v1362 = vpop.permute.xlu0 %1361
    %v1364 = vsel %vm872, %v1362, 0
    %1366 = vmatprep.subr.bf16.mxu0 0
    %1367 = vmatpush1.bf16.msra.mxu0 0
    %1368 = vmatprep.subr.bf16.mxu0 0
    %1369 = vmatpush1.bf16.msra.mxu0 0
    %1370 = vmatprep.subr.bf16.mxu0 0
    %1371 = vmatpush1.bf16.msra.mxu0 0
    %1372 = vmatprep.subr.bf16.mxu0 0
    %1373 = vmatpush1.bf16.msra.mxu0 0
    %1374 = vmatprep.subr.bf16.mxu0 0
    %1375 = vmatpush1.bf16.msra.mxu0 0
    %1376 = vmatprep.subr.bf16.mxu0 0
    %1377 = vmatpush1.bf16.msra.mxu0 0
    %1378 = vmatprep.subr.bf16.mxu0 0
    %1379 = vmatpush1.bf16.msra.mxu0 %v1026
    %1380 = vmatprep.subr.bf16.mxu0 0
    %1381 = vmatpush1.bf16.msra.mxu0 %v1025
    %1382 = vmatprep.subr.bf16.mxu0 0
    %1383 = vmatpush2.bf16.msra.mxu0 0
    %1384 = vmatprep.subr.bf16.mxu0 0
    %1385 = vmatpush2.bf16.msra.mxu0 0
    %1386 = vmatprep.subr.bf16.mxu0 0
    %1387 = vmatpush2.bf16.msra.mxu0 0
    %1388 = vmatprep.subr.bf16.mxu0 0
    %1389 = vmatpush2.bf16.msra.mxu0 0
    %1390 = vmatprep.subr.bf16.mxu0 0
    %1391 = vmatpush2.bf16.msra.mxu0 0
    %1392 = vmatprep.subr.bf16.mxu0 0
    %1393 = vmatpush2.bf16.msra.mxu0 0
    %1394 = vmatprep.subr.bf16.mxu0 0
    %1395 = vmatpush2.bf16.msra.mxu0 0
    %1396 = vmatprep.subr.bf16.mxu0 0
    %1397 = vmatpush2.bf16.msra.mxu0 0
    %1398 = vmatprep.mubr.bf16.mxu0 0
    %1399 = vmatmul.mubr.bf16.gmra.mxu0 %v1364
    %v1400 = vpop.f32.mrf.mxu0
    %v1401 = vadd.f32 0.0, %v1400
    %v1402 = vpop.f32.mrf.mxu0
    %v1403 = vpop.f32.mrf.mxu0
    %v1404 = vpop.f32.mrf.mxu0
    %1405 = vdwg.mxu0
    %v1406 = vadd.f32 %v1358, %v1401
    %v1407 = vxor.u32 %v1406, 2147483648
    %v1408 = vmul.f32 %v1407, 1.442695
    %v1409 = vpow.pop %v1408
    %v1410 = vadd.f32 %v1409, 1.0
    %v1411 = vrcp.pop %v1410
    %v1412 = vmul.f32 1.0, %v1411
    %v1413 = vadd.f32 %v1401, %v1084
    %1415 = vrot.lane.b32.xlu0 %v1413, 64
    %v1416 = vpop.permute.xlu0 %1415
    %v1418 = vmul.f32 %v1412, %v1416
    %1420 = vrot.lane.b32.xlu0 %v1418, 64
    %v1421 = vpop.permute.xlu0 %1420
    %v1423 = vadd.f32 %v1358, %v1421
    %v1424 = vtanh.pop %v1423
    %v1425 = vsub.f32 1.0, %v1412
    %1427 = vrot.lane.b32.xlu0 %v1424, 96
    %v1428 = vpop.permute.xlu0 %1427
    %v1430 = vmul.f32 %v1425, %v1428
    %v1431 = vmul.f32 %v1412, %v1350
    %v1432 = vadd.f32 %v1430, %v1431
    %1434 = vrot.lane.b32.xlu0 %v1432, 96
    %v1435 = vpop.permute.xlu0 %1434
    %s1437 = scalar_lea.vmem [#allocation3], 32
    %1438 = vst.msk [vmem:[%s1437] sm:$0xff] %vm872, %v1435
    %s1439 = scalar_lea.vmem [#allocation2], 40
    %v1440 = vld [vmem:[%s1439] sm:$0xff]
    %v1441 = vpack.c.bf16 %v1432, %v1432
    %1443 = vrot.lane.b32.xlu0 %v1441, 96
    %v1444 = vpop.permute.xlu0 %1443
    %v1446 = vsel %vm872, %v1444, 0
    %1448 = vmatprep.subr.bf16.mxu0 0
    %1449 = vmatpush1.bf16.msra.mxu0 0
    %1450 = vmatprep.subr.bf16.mxu0 0
    %1451 = vmatpush1.bf16.msra.mxu0 0
    %1452 = vmatprep.subr.bf16.mxu0 0
    %1453 = vmatpush1.bf16.msra.mxu0 0
    %1454 = vmatprep.subr.bf16.mxu0 0
    %1455 = vmatpush1.bf16.msra.mxu0 0
    %1456 = vmatprep.subr.bf16.mxu0 0
    %1457 = vmatpush1.bf16.msra.mxu0 0
    %1458 = vmatprep.subr.bf16.mxu0 0
    %1459 = vmatpush1.bf16.msra.mxu0 0
    %1460 = vmatprep.subr.bf16.mxu0 0
    %1461 = vmatpush1.bf16.msra.mxu0 %v1026
    %1462 = vmatprep.subr.bf16.mxu0 0
    %1463 = vmatpush1.bf16.msra.mxu0 %v1025
    %1464 = vmatprep.subr.bf16.mxu0 0
    %1465 = vmatpush2.bf16.msra.mxu0 0
    %1466 = vmatprep.subr.bf16.mxu0 0
    %1467 = vmatpush2.bf16.msra.mxu0 0
    %1468 = vmatprep.subr.bf16.mxu0 0
    %1469 = vmatpush2.bf16.msra.mxu0 0
    %1470 = vmatprep.subr.bf16.mxu0 0
    %1471 = vmatpush2.bf16.msra.mxu0 0
    %1472 = vmatprep.subr.bf16.mxu0 0
    %1473 = vmatpush2.bf16.msra.mxu0 0
    %1474 = vmatprep.subr.bf16.mxu0 0
    %1475 = vmatpush2.bf16.msra.mxu0 0
    %1476 = vmatprep.subr.bf16.mxu0 0
    %1477 = vmatpush2.bf16.msra.mxu0 0
    %1478 = vmatprep.subr.bf16.mxu0 0
    %1479 = vmatpush2.bf16.msra.mxu0 0
    %1480 = vmatprep.mubr.bf16.mxu0 0
    %1481 = vmatmul.mubr.bf16.gmra.mxu0 %v1446
    %v1482 = vpop.f32.mrf.mxu0
    %v1483 = vadd.f32 0.0, %v1482
    %v1484 = vpop.f32.mrf.mxu0
    %v1485 = vpop.f32.mrf.mxu0
    %v1486 = vpop.f32.mrf.mxu0
    %1487 = vdwg.mxu0
    %v1488 = vadd.f32 %v1440, %v1483
    %v1489 = vxor.u32 %v1488, 2147483648
    %v1490 = vmul.f32 %v1489, 1.442695
    %v1491 = vpow.pop %v1490
    %v1492 = vadd.f32 %v1491, 1.0
    %v1493 = vrcp.pop %v1492
    %v1494 = vmul.f32 1.0, %v1493
    %v1495 = vadd.f32 %v1483, %v1084
    %1497 = vrot.lane.b32.xlu0 %v1495, 64
    %v1498 = vpop.permute.xlu0 %1497
    %v1500 = vmul.f32 %v1494, %v1498
    %1502 = vrot.lane.b32.xlu0 %v1500, 64
    %v1503 = vpop.permute.xlu0 %1502
    %v1505 = vadd.f32 %v1440, %v1503
    %v1506 = vtanh.pop %v1505
    %v1507 = vsub.f32 1.0, %v1494
    %1509 = vrot.lane.b32.xlu0 %v1506, 96
    %v1510 = vpop.permute.xlu0 %1509
    %v1512 = vmul.f32 %v1507, %v1510
    %v1513 = vmul.f32 %v1494, %v1432
    %v1514 = vadd.f32 %v1512, %v1513
    %1516 = vrot.lane.b32.xlu0 %v1514, 96
    %v1517 = vpop.permute.xlu0 %1516
    %s1519 = scalar_lea.vmem [#allocation3], 40
    %1520 = vst.msk [vmem:[%s1519] sm:$0xff] %vm872, %v1517
    %s1521 = scalar_lea.vmem [#allocation2], 48
    %v1522 = vld [vmem:[%s1521] sm:$0xff]
    %v1523 = vpack.c.bf16 %v1514, %v1514
    %1525 = vrot.lane.b32.xlu0 %v1523, 96
    %v1526 = vpop.permute.xlu0 %1525
    %v1528 = vsel %vm872, %v1526, 0
    %1530 = vmatprep.subr.bf16.mxu0 0
    %1531 = vmatpush1.bf16.msra.mxu0 0
    %1532 = vmatprep.subr.bf16.mxu0 0
    %1533 = vmatpush1.bf16.msra.mxu0 0
    %1534 = vmatprep.subr.bf16.mxu0 0
    %1535 = vmatpush1.bf16.msra.mxu0 0
    %1536 = vmatprep.subr.bf16.mxu0 0
    %1537 = vmatpush1.bf16.msra.mxu0 0
    %1538 = vmatprep.subr.bf16.mxu0 0
    %1539 = vmatpush1.bf16.msra.mxu0 0
    %1540 = vmatprep.subr.bf16.mxu0 0
    %1541 = vmatpush1.bf16.msra.mxu0 0
    %1542 = vmatprep.subr.bf16.mxu0 0
    %1543 = vmatpush1.bf16.msra.mxu0 %v1026
    %1544 = vmatprep.subr.bf16.mxu0 0
    %1545 = vmatpush1.bf16.msra.mxu0 %v1025
    %1546 = vmatprep.subr.bf16.mxu0 0
    %1547 = vmatpush2.bf16.msra.mxu0 0
    %1548 = vmatprep.subr.bf16.mxu0 0
    %1549 = vmatpush2.bf16.msra.mxu0 0
    %1550 = vmatprep.subr.bf16.mxu0 0
    %1551 = vmatpush2.bf16.msra.mxu0 0
    %1552 = vmatprep.subr.bf16.mxu0 0
    %1553 = vmatpush2.bf16.msra.mxu0 0
    %1554 = vmatprep.subr.bf16.mxu0 0
    %1555 = vmatpush2.bf16.msra.mxu0 0
    %1556 = vmatprep.subr.bf16.mxu0 0
    %1557 = vmatpush2.bf16.msra.mxu0 0
    %1558 = vmatprep.subr.bf16.mxu0 0
    %1559 = vmatpush2.bf16.msra.mxu0 0
    %1560 = vmatprep.subr.bf16.mxu0 0
    %1561 = vmatpush2.bf16.msra.mxu0 0
    %1562 = vmatprep.mubr.bf16.mxu0 0
    %1563 = vmatmul.mubr.bf16.gmra.mxu0 %v1528
    %v1564 = vpop.f32.mrf.mxu0
    %v1565 = vadd.f32 0.0, %v1564
    %v1566 = vpop.f32.mrf.mxu0
    %v1567 = vpop.f32.mrf.mxu0
    %v1568 = vpop.f32.mrf.mxu0
    %1569 = vdwg.mxu0
    %v1570 = vadd.f32 %v1522, %v1565
    %v1571 = vxor.u32 %v1570, 2147483648
    %v1572 = vmul.f32 %v1571, 1.442695
    %v1573 = vpow.pop %v1572
    %v1574 = vadd.f32 %v1573, 1.0
    %v1575 = vrcp.pop %v1574
    %v1576 = vmul.f32 1.0, %v1575
    %v1577 = vadd.f32 %v1565, %v1084
    %1579 = vrot.lane.b32.xlu0 %v1577, 64
    %v1580 = vpop.permute.xlu0 %1579
    %v1582 = vmul.f32 %v1576, %v1580
    %1584 = vrot.lane.b32.xlu0 %v1582, 64
    %v1585 = vpop.permute.xlu0 %1584
    %v1587 = vadd.f32 %v1522, %v1585
    %v1588 = vtanh.pop %v1587
    %v1589 = vsub.f32 1.0, %v1576
    %1591 = vrot.lane.b32.xlu0 %v1588, 96
    %v1592 = vpop.permute.xlu0 %1591
    %v1594 = vmul.f32 %v1589, %v1592
    %v1595 = vmul.f32 %v1576, %v1514
    %v1596 = vadd.f32 %v1594, %v1595
    %1598 = vrot.lane.b32.xlu0 %v1596, 96
    %v1599 = vpop.permute.xlu0 %1598
    %s1601 = scalar_lea.vmem [#allocation3], 48
    %1602 = vst.msk [vmem:[%s1601] sm:$0xff] %vm872, %v1599
    %s1603 = scalar_lea.vmem [#allocation2], 56
    %v1604 = vld [vmem:[%s1603] sm:$0xff]
    %v1605 = vpack.c.bf16 %v1596, %v1596
    %1607 = vrot.lane.b32.xlu0 %v1605, 96
    %v1608 = vpop.permute.xlu0 %1607
    %v1610 = vsel %vm872, %v1608, 0
    %1612 = vmatprep.subr.bf16.mxu0 0
    %1613 = vmatpush1.bf16.msra.mxu0 0
    %1614 = vmatprep.subr.bf16.mxu0 0
    %1615 = vmatpush1.bf16.msra.mxu0 0
    %1616 = vmatprep.subr.bf16.mxu0 0
    %1617 = vmatpush1.bf16.msra.mxu0 0
    %1618 = vmatprep.subr.bf16.mxu0 0
    %1619 = vmatpush1.bf16.msra.mxu0 0
    %1620 = vmatprep.subr.bf16.mxu0 0
    %1621 = vmatpush1.bf16.msra.mxu0 0
    %1622 = vmatprep.subr.bf16.mxu0 0
    %1623 = vmatpush1.bf16.msra.mxu0 0
    %1624 = vmatprep.subr.bf16.mxu0 0
    %1625 = vmatpush1.bf16.msra.mxu0 %v1026
    %1626 = vmatprep.subr.bf16.mxu0 0
    %1627 = vmatpush1.bf16.msra.mxu0 %v1025
    %1628 = vmatprep.subr.bf16.mxu0 0
    %1629 = vmatpush2.bf16.msra.mxu0 0
    %1630 = vmatprep.subr.bf16.mxu0 0
    %1631 = vmatpush2.bf16.msra.mxu0 0
    %1632 = vmatprep.subr.bf16.mxu0 0
    %1633 = vmatpush2.bf16.msra.mxu0 0
    %1634 = vmatprep.subr.bf16.mxu0 0
    %1635 = vmatpush2.bf16.msra.mxu0 0
    %1636 = vmatprep.subr.bf16.mxu0 0
    %1637 = vmatpush2.bf16.msra.mxu0 0
    %1638 = vmatprep.subr.bf16.mxu0 0
    %1639 = vmatpush2.bf16.msra.mxu0 0
    %1640 = vmatprep.subr.bf16.mxu0 0
    %1641 = vmatpush2.bf16.msra.mxu0 0
    %1642 = vmatprep.subr.bf16.mxu0 0
    %1643 = vmatpush2.bf16.msra.mxu0 0
    %1644 = vmatprep.mubr.bf16.mxu0 0
    %1645 = vmatmul.mubr.bf16.gmra.mxu0 %v1610
    %v1646 = vpop.f32.mrf.mxu0
    %v1647 = vadd.f32 0.0, %v1646
    %v1648 = vpop.f32.mrf.mxu0
    %v1649 = vpop.f32.mrf.mxu0
    %v1650 = vpop.f32.mrf.mxu0
    %1651 = vdwg.mxu0
    %v1652 = vadd.f32 %v1604, %v1647
    %v1653 = vxor.u32 %v1652, 2147483648
    %v1654 = vmul.f32 %v1653, 1.442695
    %v1655 = vpow.pop %v1654
    %v1656 = vadd.f32 %v1655, 1.0
    %v1657 = vrcp.pop %v1656
    %v1658 = vmul.f32 1.0, %v1657
    %v1659 = vadd.f32 %v1647, %v1084
    %1661 = vrot.lane.b32.xlu0 %v1659, 64
    %v1662 = vpop.permute.xlu0 %1661
    %v1664 = vmul.f32 %v1658, %v1662
    %1666 = vrot.lane.b32.xlu0 %v1664, 64
    %v1667 = vpop.permute.xlu0 %1666
    %v1669 = vadd.f32 %v1604, %v1667
    %v1670 = vtanh.pop %v1669
    %v1671 = vsub.f32 1.0, %v1658
    %1673 = vrot.lane.b32.xlu0 %v1670, 96
    %v1674 = vpop.permute.xlu0 %1673
    %v1676 = vmul.f32 %v1671, %v1674
    %v1677 = vmul.f32 %v1658, %v1596
    %v1678 = vadd.f32 %v1676, %v1677
    %1680 = vrot.lane.b32.xlu0 %v1678, 96
    %v1681 = vpop.permute.xlu0 %1680
    %s1683 = scalar_lea.vmem [#allocation3], 56
    %1684 = vst.msk [vmem:[%s1683] sm:$0xff] %vm872, %v1681
    %s1685 = scalar_lea.vmem [#allocation2], 64
    %v1686 = vld [vmem:[%s1685] sm:$0xff]
    %v1687 = vpack.c.bf16 %v1678, %v1678
    %1689 = vrot.lane.b32.xlu0 %v1687, 96
    %v1690 = vpop.permute.xlu0 %1689
    %v1692 = vsel %vm872, %v1690, 0
    %1694 = vmatprep.subr.bf16.mxu0 0
    %1695 = vmatpush1.bf16.msra.mxu0 0
    %1696 = vmatprep.subr.bf16.mxu0 0
    %1697 = vmatpush1.bf16.msra.mxu0 0
    %1698 = vmatprep.subr.bf16.mxu0 0
    %1699 = vmatpush1.bf16.msra.mxu0 0
    %1700 = vmatprep.subr.bf16.mxu0 0
    %1701 = vmatpush1.bf16.msra.mxu0 0
    %1702 = vmatprep.subr.bf16.mxu0 0
    %1703 = vmatpush1.bf16.msra.mxu0 0
    %1704 = vmatprep.subr.bf16.mxu0 0
    %1705 = vmatpush1.bf16.msra.mxu0 0
    %1706 = vmatprep.subr.bf16.mxu0 0
    %1707 = vmatpush1.bf16.msra.mxu0 %v1026
    %1708 = vmatprep.subr.bf16.mxu0 0
    %1709 = vmatpush1.bf16.msra.mxu0 %v1025
    %1710 = vmatprep.subr.bf16.mxu0 0
    %1711 = vmatpush2.bf16.msra.mxu0 0
    %1712 = vmatprep.subr.bf16.mxu0 0
    %1713 = vmatpush2.bf16.msra.mxu0 0
    %1714 = vmatprep.subr.bf16.mxu0 0
    %1715 = vmatpush2.bf16.msra.mxu0 0
    %1716 = vmatprep.subr.bf16.mxu0 0
    %1717 = vmatpush2.bf16.msra.mxu0 0
    %1718 = vmatprep.subr.bf16.mxu0 0
    %1719 = vmatpush2.bf16.msra.mxu0 0
    %1720 = vmatprep.subr.bf16.mxu0 0
    %1721 = vmatpush2.bf16.msra.mxu0 0
    %1722 = vmatprep.subr.bf16.mxu0 0
    %1723 = vmatpush2.bf16.msra.mxu0 0
    %1724 = vmatprep.subr.bf16.mxu0 0
    %1725 = vmatpush2.bf16.msra.mxu0 0
    %1726 = vmatprep.mubr.bf16.mxu0 0
    %1727 = vmatmul.mubr.bf16.gmra.mxu0 %v1692
    %v1728 = vpop.f32.mrf.mxu0
    %v1729 = vadd.f32 0.0, %v1728
    %v1730 = vpop.f32.mrf.mxu0
    %v1731 = vpop.f32.mrf.mxu0
    %v1732 = vpop.f32.mrf.mxu0
    %1733 = vdwg.mxu0
    %v1734 = vadd.f32 %v1686, %v1729
    %v1735 = vxor.u32 %v1734, 2147483648
    %v1736 = vmul.f32 %v1735, 1.442695
    %v1737 = vpow.pop %v1736
    %v1738 = vadd.f32 %v1737, 1.0
    %v1739 = vrcp.pop %v1738
    %v1740 = vmul.f32 1.0, %v1739
    %v1741 = vadd.f32 %v1729, %v1084
    %1743 = vrot.lane.b32.xlu0 %v1741, 64
    %v1744 = vpop.permute.xlu0 %1743
    %v1746 = vmul.f32 %v1740, %v1744
    %1748 = vrot.lane.b32.xlu0 %v1746, 64
    %v1749 = vpop.permute.xlu0 %1748
    %v1751 = vadd.f32 %v1686, %v1749
    %v1752 = vtanh.pop %v1751
    %v1753 = vsub.f32 1.0, %v1740
    %1755 = vrot.lane.b32.xlu0 %v1752, 96
    %v1756 = vpop.permute.xlu0 %1755
    %v1758 = vmul.f32 %v1753, %v1756
    %v1759 = vmul.f32 %v1740, %v1678
    %v1760 = vadd.f32 %v1758, %v1759
    %1762 = vrot.lane.b32.xlu0 %v1760, 96
    %v1763 = vpop.permute.xlu0 %1762
    %s1765 = scalar_lea.vmem [#allocation3], 64
    %1766 = vst.msk [vmem:[%s1765] sm:$0xff] %vm872, %v1763
    %s1767 = scalar_lea.vmem [#allocation2], 72
    %v1768 = vld [vmem:[%s1767] sm:$0xff]
    %v1769 = vpack.c.bf16 %v1760, %v1760
    %1771 = vrot.lane.b32.xlu0 %v1769, 96
    %v1772 = vpop.permute.xlu0 %1771
    %v1774 = vsel %vm872, %v1772, 0
    %1776 = vmatprep.subr.bf16.mxu0 0
    %1777 = vmatpush1.bf16.msra.mxu0 0
    %1778 = vmatprep.subr.bf16.mxu0 0
    %1779 = vmatpush1.bf16.msra.mxu0 0
    %1780 = vmatprep.subr.bf16.mxu0 0
    %1781 = vmatpush1.bf16.msra.mxu0 0
    %1782 = vmatprep.subr.bf16.mxu0 0
    %1783 = vmatpush1.bf16.msra.mxu0 0
    %1784 = vmatprep.subr.bf16.mxu0 0
    %1785 = vmatpush1.bf16.msra.mxu0 0
    %1786 = vmatprep.subr.bf16.mxu0 0
    %1787 = vmatpush1.bf16.msra.mxu0 0
    %1788 = vmatprep.subr.bf16.mxu0 0
    %1789 = vmatpush1.bf16.msra.mxu0 %v1026
    %1790 = vmatprep.subr.bf16.mxu0 0
    %1791 = vmatpush1.bf16.msra.mxu0 %v1025
    %1792 = vmatprep.subr.bf16.mxu0 0
    %1793 = vmatpush2.bf16.msra.mxu0 0
    %1794 = vmatprep.subr.bf16.mxu0 0
    %1795 = vmatpush2.bf16.msra.mxu0 0
    %1796 = vmatprep.subr.bf16.mxu0 0
    %1797 = vmatpush2.bf16.msra.mxu0 0
    %1798 = vmatprep.subr.bf16.mxu0 0
    %1799 = vmatpush2.bf16.msra.mxu0 0
    %1800 = vmatprep.subr.bf16.mxu0 0
    %1801 = vmatpush2.bf16.msra.mxu0 0
    %1802 = vmatprep.subr.bf16.mxu0 0
    %1803 = vmatpush2.bf16.msra.mxu0 0
    %1804 = vmatprep.subr.bf16.mxu0 0
    %1805 = vmatpush2.bf16.msra.mxu0 0
    %1806 = vmatprep.subr.bf16.mxu0 0
    %1807 = vmatpush2.bf16.msra.mxu0 0
    %1808 = vmatprep.mubr.bf16.mxu0 0
    %1809 = vmatmul.mubr.bf16.gmra.mxu0 %v1774
    %v1810 = vpop.f32.mrf.mxu0
    %v1811 = vadd.f32 0.0, %v1810
    %v1812 = vpop.f32.mrf.mxu0
    %v1813 = vpop.f32.mrf.mxu0
    %v1814 = vpop.f32.mrf.mxu0
    %1815 = vdwg.mxu0
    %v1816 = vadd.f32 %v1768, %v1811
    %v1817 = vxor.u32 %v1816, 2147483648
    %v1818 = vmul.f32 %v1817, 1.442695
    %v1819 = vpow.pop %v1818
    %v1820 = vadd.f32 %v1819, 1.0
    %v1821 = vrcp.pop %v1820
    %v1822 = vmul.f32 1.0, %v1821
    %v1823 = vadd.f32 %v1811, %v1084
    %1825 = vrot.lane.b32.xlu0 %v1823, 64
    %v1826 = vpop.permute.xlu0 %1825
    %v1828 = vmul.f32 %v1822, %v1826
    %1830 = vrot.lane.b32.xlu0 %v1828, 64
    %v1831 = vpop.permute.xlu0 %1830
    %v1833 = vadd.f32 %v1768, %v1831
    %v1834 = vtanh.pop %v1833
    %v1835 = vsub.f32 1.0, %v1822
    %1837 = vrot.lane.b32.xlu0 %v1834, 96
    %v1838 = vpop.permute.xlu0 %1837
    %v1840 = vmul.f32 %v1835, %v1838
    %v1841 = vmul.f32 %v1822, %v1760
    %v1842 = vadd.f32 %v1840, %v1841
    %1844 = vrot.lane.b32.xlu0 %v1842, 96
    %v1845 = vpop.permute.xlu0 %1844
    %s1847 = scalar_lea.vmem [#allocation3], 72
    %1848 = vst.msk [vmem:[%s1847] sm:$0xff] %vm872, %v1845
    %s1849 = scalar_lea.vmem [#allocation2], 80
    %v1850 = vld [vmem:[%s1849] sm:$0xff]
    %v1851 = vpack.c.bf16 %v1842, %v1842
    %1853 = vrot.lane.b32.xlu0 %v1851, 96
    %v1854 = vpop.permute.xlu0 %1853
    %v1856 = vsel %vm872, %v1854, 0
    %1858 = vmatprep.subr.bf16.mxu0 0
    %1859 = vmatpush1.bf16.msra.mxu0 0
    %1860 = vmatprep.subr.bf16.mxu0 0
    %1861 = vmatpush1.bf16.msra.mxu0 0
    %1862 = vmatprep.subr.bf16.mxu0 0
    %1863 = vmatpush1.bf16.msra.mxu0 0
    %1864 = vmatprep.subr.bf16.mxu0 0
    %1865 = vmatpush1.bf16.msra.mxu0 0
    %1866 = vmatprep.subr.bf16.mxu0 0
    %1867 = vmatpush1.bf16.msra.mxu0 0
    %1868 = vmatprep.subr.bf16.mxu0 0
    %1869 = vmatpush1.bf16.msra.mxu0 0
    %1870 = vmatprep.subr.bf16.mxu0 0
    %1871 = vmatpush1.bf16.msra.mxu0 %v1026
    %1872 = vmatprep.subr.bf16.mxu0 0
    %1873 = vmatpush1.bf16.msra.mxu0 %v1025
    %1874 = vmatprep.subr.bf16.mxu0 0
    %1875 = vmatpush2.bf16.msra.mxu0 0
    %1876 = vmatprep.subr.bf16.mxu0 0
    %1877 = vmatpush2.bf16.msra.mxu0 0
    %1878 = vmatprep.subr.bf16.mxu0 0
    %1879 = vmatpush2.bf16.msra.mxu0 0
    %1880 = vmatprep.subr.bf16.mxu0 0
    %1881 = vmatpush2.bf16.msra.mxu0 0
    %1882 = vmatprep.subr.bf16.mxu0 0
    %1883 = vmatpush2.bf16.msra.mxu0 0
    %1884 = vmatprep.subr.bf16.mxu0 0
    %1885 = vmatpush2.bf16.msra.mxu0 0
    %1886 = vmatprep.subr.bf16.mxu0 0
    %1887 = vmatpush2.bf16.msra.mxu0 0
    %1888 = vmatprep.subr.bf16.mxu0 0
    %1889 = vmatpush2.bf16.msra.mxu0 0
    %1890 = vmatprep.mubr.bf16.mxu0 0
    %1891 = vmatmul.mubr.bf16.gmra.mxu0 %v1856
    %v1892 = vpop.f32.mrf.mxu0
    %v1893 = vadd.f32 0.0, %v1892
    %v1894 = vpop.f32.mrf.mxu0
    %v1895 = vpop.f32.mrf.mxu0
    %v1896 = vpop.f32.mrf.mxu0
    %1897 = vdwg.mxu0
    %v1898 = vadd.f32 %v1850, %v1893
    %v1899 = vxor.u32 %v1898, 2147483648
    %v1900 = vmul.f32 %v1899, 1.442695
    %v1901 = vpow.pop %v1900
    %v1902 = vadd.f32 %v1901, 1.0
    %v1903 = vrcp.pop %v1902
    %v1904 = vmul.f32 1.0, %v1903
    %v1905 = vadd.f32 %v1893, %v1084
    %1907 = vrot.lane.b32.xlu0 %v1905, 64
    %v1908 = vpop.permute.xlu0 %1907
    %v1910 = vmul.f32 %v1904, %v1908
    %1912 = vrot.lane.b32.xlu0 %v1910, 64
    %v1913 = vpop.permute.xlu0 %1912
    %v1915 = vadd.f32 %v1850, %v1913
    %v1916 = vtanh.pop %v1915
    %v1917 = vsub.f32 1.0, %v1904
    %1919 = vrot.lane.b32.xlu0 %v1916, 96
    %v1920 = vpop.permute.xlu0 %1919
    %v1922 = vmul.f32 %v1917, %v1920
    %v1923 = vmul.f32 %v1904, %v1842
    %v1924 = vadd.f32 %v1922, %v1923
    %1926 = vrot.lane.b32.xlu0 %v1924, 96
    %v1927 = vpop.permute.xlu0 %1926
    %s1929 = scalar_lea.vmem [#allocation3], 80
    %1930 = vst.msk [vmem:[%s1929] sm:$0xff] %vm872, %v1927
    %s1931 = scalar_lea.vmem [#allocation2], 88
    %v1932 = vld [vmem:[%s1931] sm:$0xff]
    %v1933 = vpack.c.bf16 %v1924, %v1924
    %1935 = vrot.lane.b32.xlu0 %v1933, 96
    %v1936 = vpop.permute.xlu0 %1935
    %v1938 = vsel %vm872, %v1936, 0
    %1940 = vmatprep.subr.bf16.mxu0 0
    %1941 = vmatpush1.bf16.msra.mxu0 0
    %1942 = vmatprep.subr.bf16.mxu0 0
    %1943 = vmatpush1.bf16.msra.mxu0 0
    %1944 = vmatprep.subr.bf16.mxu0 0
    %1945 = vmatpush1.bf16.msra.mxu0 0
    %1946 = vmatprep.subr.bf16.mxu0 0
    %1947 = vmatpush1.bf16.msra.mxu0 0
    %1948 = vmatprep.subr.bf16.mxu0 0
    %1949 = vmatpush1.bf16.msra.mxu0 0
    %1950 = vmatprep.subr.bf16.mxu0 0
    %1951 = vmatpush1.bf16.msra.mxu0 0
    %1952 = vmatprep.subr.bf16.mxu0 0
    %1953 = vmatpush1.bf16.msra.mxu0 %v1026
    %1954 = vmatprep.subr.bf16.mxu0 0
    %1955 = vmatpush1.bf16.msra.mxu0 %v1025
    %1956 = vmatprep.subr.bf16.mxu0 0
    %1957 = vmatpush2.bf16.msra.mxu0 0
    %1958 = vmatprep.subr.bf16.mxu0 0
    %1959 = vmatpush2.bf16.msra.mxu0 0
    %1960 = vmatprep.subr.bf16.mxu0 0
    %1961 = vmatpush2.bf16.msra.mxu0 0
    %1962 = vmatprep.subr.bf16.mxu0 0
    %1963 = vmatpush2.bf16.msra.mxu0 0
    %1964 = vmatprep.subr.bf16.mxu0 0
    %1965 = vmatpush2.bf16.msra.mxu0 0
    %1966 = vmatprep.subr.bf16.mxu0 0
    %1967 = vmatpush2.bf16.msra.mxu0 0
    %1968 = vmatprep.subr.bf16.mxu0 0
    %1969 = vmatpush2.bf16.msra.mxu0 0
    %1970 = vmatprep.subr.bf16.mxu0 0
    %1971 = vmatpush2.bf16.msra.mxu0 0
    %1972 = vmatprep.mubr.bf16.mxu0 0
    %1973 = vmatmul.mubr.bf16.gmra.mxu0 %v1938
    %v1974 = vpop.f32.mrf.mxu0
    %v1975 = vadd.f32 0.0, %v1974
    %v1976 = vpop.f32.mrf.mxu0
    %v1977 = vpop.f32.mrf.mxu0
    %v1978 = vpop.f32.mrf.mxu0
    %1979 = vdwg.mxu0
    %v1980 = vadd.f32 %v1932, %v1975
    %v1981 = vxor.u32 %v1980, 2147483648
    %v1982 = vmul.f32 %v1981, 1.442695
    %v1983 = vpow.pop %v1982
    %v1984 = vadd.f32 %v1983, 1.0
    %v1985 = vrcp.pop %v1984
    %v1986 = vmul.f32 1.0, %v1985
    %v1987 = vadd.f32 %v1975, %v1084
    %1989 = vrot.lane.b32.xlu0 %v1987, 64
    %v1990 = vpop.permute.xlu0 %1989
    %v1992 = vmul.f32 %v1986, %v1990
    %1994 = vrot.lane.b32.xlu0 %v1992, 64
    %v1995 = vpop.permute.xlu0 %1994
    %v1997 = vadd.f32 %v1932, %v1995
    %v1998 = vtanh.pop %v1997
    %v1999 = vsub.f32 1.0, %v1986
    %2001 = vrot.lane.b32.xlu0 %v1998, 96
    %v2002 = vpop.permute.xlu0 %2001
    %v2004 = vmul.f32 %v1999, %v2002
    %v2005 = vmul.f32 %v1986, %v1924
    %v2006 = vadd.f32 %v2004, %v2005
    %2008 = vrot.lane.b32.xlu0 %v2006, 96
    %v2009 = vpop.permute.xlu0 %2008
    %s2011 = scalar_lea.vmem [#allocation3], 88
    %2012 = vst.msk [vmem:[%s2011] sm:$0xff] %vm872, %v2009
    %s2013 = scalar_lea.vmem [#allocation2], 96
    %v2014 = vld [vmem:[%s2013] sm:$0xff]
    %v2015 = vpack.c.bf16 %v2006, %v2006
    %2017 = vrot.lane.b32.xlu0 %v2015, 96
    %v2018 = vpop.permute.xlu0 %2017
    %v2020 = vsel %vm872, %v2018, 0
    %2022 = vmatprep.subr.bf16.mxu0 0
    %2023 = vmatpush1.bf16.msra.mxu0 0
    %2024 = vmatprep.subr.bf16.mxu0 0
    %2025 = vmatpush1.bf16.msra.mxu0 0
    %2026 = vmatprep.subr.bf16.mxu0 0
    %2027 = vmatpush1.bf16.msra.mxu0 0
    %2028 = vmatprep.subr.bf16.mxu0 0
    %2029 = vmatpush1.bf16.msra.mxu0 0
    %2030 = vmatprep.subr.bf16.mxu0 0
    %2031 = vmatpush1.bf16.msra.mxu0 0
    %2032 = vmatprep.subr.bf16.mxu0 0
    %2033 = vmatpush1.bf16.msra.mxu0 0
    %2034 = vmatprep.subr.bf16.mxu0 0
    %2035 = vmatpush1.bf16.msra.mxu0 %v1026
    %2036 = vmatprep.subr.bf16.mxu0 0
    %2037 = vmatpush1.bf16.msra.mxu0 %v1025
    %2038 = vmatprep.subr.bf16.mxu0 0
    %2039 = vmatpush2.bf16.msra.mxu0 0
    %2040 = vmatprep.subr.bf16.mxu0 0
    %2041 = vmatpush2.bf16.msra.mxu0 0
    %2042 = vmatprep.subr.bf16.mxu0 0
    %2043 = vmatpush2.bf16.msra.mxu0 0
    %2044 = vmatprep.subr.bf16.mxu0 0
    %2045 = vmatpush2.bf16.msra.mxu0 0
    %2046 = vmatprep.subr.bf16.mxu0 0
    %2047 = vmatpush2.bf16.msra.mxu0 0
    %2048 = vmatprep.subr.bf16.mxu0 0
    %2049 = vmatpush2.bf16.msra.mxu0 0
    %2050 = vmatprep.subr.bf16.mxu0 0
    %2051 = vmatpush2.bf16.msra.mxu0 0
    %2052 = vmatprep.subr.bf16.mxu0 0
    %2053 = vmatpush2.bf16.msra.mxu0 0
    %2054 = vmatprep.mubr.bf16.mxu0 0
    %2055 = vmatmul.mubr.bf16.gmra.mxu0 %v2020
    %v2056 = vpop.f32.mrf.mxu0
    %v2057 = vadd.f32 0.0, %v2056
    %v2058 = vpop.f32.mrf.mxu0
    %v2059 = vpop.f32.mrf.mxu0
    %v2060 = vpop.f32.mrf.mxu0
    %2061 = vdwg.mxu0
    %v2062 = vadd.f32 %v2014, %v2057
    %v2063 = vxor.u32 %v2062, 2147483648
    %v2064 = vmul.f32 %v2063, 1.442695
    %v2065 = vpow.pop %v2064
    %v2066 = vadd.f32 %v2065, 1.0
    %v2067 = vrcp.pop %v2066
    %v2068 = vmul.f32 1.0, %v2067
    %v2069 = vadd.f32 %v2057, %v1084
    %2071 = vrot.lane.b32.xlu0 %v2069, 64
    %v2072 = vpop.permute.xlu0 %2071
    %v2074 = vmul.f32 %v2068, %v2072
    %2076 = vrot.lane.b32.xlu0 %v2074, 64
    %v2077 = vpop.permute.xlu0 %2076
    %v2079 = vadd.f32 %v2014, %v2077
    %v2080 = vtanh.pop %v2079
    %v2081 = vsub.f32 1.0, %v2068
    %2083 = vrot.lane.b32.xlu0 %v2080, 96
    %v2084 = vpop.permute.xlu0 %2083
    %v2086 = vmul.f32 %v2081, %v2084
    %v2087 = vmul.f32 %v2068, %v2006
    %v2088 = vadd.f32 %v2086, %v2087
    %2090 = vrot.lane.b32.xlu0 %v2088, 96
    %v2091 = vpop.permute.xlu0 %2090
    %s2093 = scalar_lea.vmem [#allocation3], 96
    %2094 = vst.msk [vmem:[%s2093] sm:$0xff] %vm872, %v2091
    %s2095 = scalar_lea.vmem [#allocation2], 104
    %v2096 = vld [vmem:[%s2095] sm:$0xff]
    %v2097 = vpack.c.bf16 %v2088, %v2088
    %2099 = vrot.lane.b32.xlu0 %v2097, 96
    %v2100 = vpop.permute.xlu0 %2099
    %v2102 = vsel %vm872, %v2100, 0
    %2104 = vmatprep.subr.bf16.mxu0 0
    %2105 = vmatpush1.bf16.msra.mxu0 0
    %2106 = vmatprep.subr.bf16.mxu0 0
    %2107 = vmatpush1.bf16.msra.mxu0 0
    %2108 = vmatprep.subr.bf16.mxu0 0
    %2109 = vmatpush1.bf16.msra.mxu0 0
    %2110 = vmatprep.subr.bf16.mxu0 0
    %2111 = vmatpush1.bf16.msra.mxu0 0
    %2112 = vmatprep.subr.bf16.mxu0 0
    %2113 = vmatpush1.bf16.msra.mxu0 0
    %2114 = vmatprep.subr.bf16.mxu0 0
    %2115 = vmatpush1.bf16.msra.mxu0 0
    %2116 = vmatprep.subr.bf16.mxu0 0
    %2117 = vmatpush1.bf16.msra.mxu0 %v1026
    %2118 = vmatprep.subr.bf16.mxu0 0
    %2119 = vmatpush1.bf16.msra.mxu0 %v1025
    %2120 = vmatprep.subr.bf16.mxu0 0
    %2121 = vmatpush2.bf16.msra.mxu0 0
    %2122 = vmatprep.subr.bf16.mxu0 0
    %2123 = vmatpush2.bf16.msra.mxu0 0
    %2124 = vmatprep.subr.bf16.mxu0 0
    %2125 = vmatpush2.bf16.msra.mxu0 0
    %2126 = vmatprep.subr.bf16.mxu0 0
    %2127 = vmatpush2.bf16.msra.mxu0 0
    %2128 = vmatprep.subr.bf16.mxu0 0
    %2129 = vmatpush2.bf16.msra.mxu0 0
    %2130 = vmatprep.subr.bf16.mxu0 0
    %2131 = vmatpush2.bf16.msra.mxu0 0
    %2132 = vmatprep.subr.bf16.mxu0 0
    %2133 = vmatpush2.bf16.msra.mxu0 0
    %2134 = vmatprep.subr.bf16.mxu0 0
    %2135 = vmatpush2.bf16.msra.mxu0 0
    %2136 = vmatprep.mubr.bf16.mxu0 0
    %2137 = vmatmul.mubr.bf16.gmra.mxu0 %v2102
    %v2138 = vpop.f32.mrf.mxu0
    %v2139 = vadd.f32 0.0, %v2138
    %v2140 = vpop.f32.mrf.mxu0
    %v2141 = vpop.f32.mrf.mxu0
    %v2142 = vpop.f32.mrf.mxu0
    %2143 = vdwg.mxu0
    %v2144 = vadd.f32 %v2096, %v2139
    %v2145 = vxor.u32 %v2144, 2147483648
    %v2146 = vmul.f32 %v2145, 1.442695
    %v2147 = vpow.pop %v2146
    %v2148 = vadd.f32 %v2147, 1.0
    %v2149 = vrcp.pop %v2148
    %v2150 = vmul.f32 1.0, %v2149
    %v2151 = vadd.f32 %v2139, %v1084
    %2153 = vrot.lane.b32.xlu0 %v2151, 64
    %v2154 = vpop.permute.xlu0 %2153
    %v2156 = vmul.f32 %v2150, %v2154
    %2158 = vrot.lane.b32.xlu0 %v2156, 64
    %v2159 = vpop.permute.xlu0 %2158
    %v2161 = vadd.f32 %v2096, %v2159
    %v2162 = vtanh.pop %v2161
    %v2163 = vsub.f32 1.0, %v2150
    %2165 = vrot.lane.b32.xlu0 %v2162, 96
    %v2166 = vpop.permute.xlu0 %2165
    %v2168 = vmul.f32 %v2163, %v2166
    %v2169 = vmul.f32 %v2150, %v2088
    %v2170 = vadd.f32 %v2168, %v2169
    %2172 = vrot.lane.b32.xlu0 %v2170, 96
    %v2173 = vpop.permute.xlu0 %2172
    %s2175 = scalar_lea.vmem [#allocation3], 104
    %2176 = vst.msk [vmem:[%s2175] sm:$0xff] %vm872, %v2173
    %s2177 = scalar_lea.vmem [#allocation2], 112
    %v2178 = vld [vmem:[%s2177] sm:$0xff]
    %v2179 = vpack.c.bf16 %v2170, %v2170
    %2181 = vrot.lane.b32.xlu0 %v2179, 96
    %v2182 = vpop.permute.xlu0 %2181
    %v2184 = vsel %vm872, %v2182, 0
    %2186 = vmatprep.subr.bf16.mxu0 0
    %2187 = vmatpush1.bf16.msra.mxu0 0
    %2188 = vmatprep.subr.bf16.mxu0 0
    %2189 = vmatpush1.bf16.msra.mxu0 0
    %2190 = vmatprep.subr.bf16.mxu0 0
    %2191 = vmatpush1.bf16.msra.mxu0 0
    %2192 = vmatprep.subr.bf16.mxu0 0
    %2193 = vmatpush1.bf16.msra.mxu0 0
    %2194 = vmatprep.subr.bf16.mxu0 0
    %2195 = vmatpush1.bf16.msra.mxu0 0
    %2196 = vmatprep.subr.bf16.mxu0 0
    %2197 = vmatpush1.bf16.msra.mxu0 0
    %2198 = vmatprep.subr.bf16.mxu0 0
    %2199 = vmatpush1.bf16.msra.mxu0 %v1026
    %2200 = vmatprep.subr.bf16.mxu0 0
    %2201 = vmatpush1.bf16.msra.mxu0 %v1025
    %2202 = vmatprep.subr.bf16.mxu0 0
    %2203 = vmatpush2.bf16.msra.mxu0 0
    %2204 = vmatprep.subr.bf16.mxu0 0
    %2205 = vmatpush2.bf16.msra.mxu0 0
    %2206 = vmatprep.subr.bf16.mxu0 0
    %2207 = vmatpush2.bf16.msra.mxu0 0
    %2208 = vmatprep.subr.bf16.mxu0 0
    %2209 = vmatpush2.bf16.msra.mxu0 0
    %2210 = vmatprep.subr.bf16.mxu0 0
    %2211 = vmatpush2.bf16.msra.mxu0 0
    %2212 = vmatprep.subr.bf16.mxu0 0
    %2213 = vmatpush2.bf16.msra.mxu0 0
    %2214 = vmatprep.subr.bf16.mxu0 0
    %2215 = vmatpush2.bf16.msra.mxu0 0
    %2216 = vmatprep.subr.bf16.mxu0 0
    %2217 = vmatpush2.bf16.msra.mxu0 0
    %2218 = vmatprep.mubr.bf16.mxu0 0
    %2219 = vmatmul.mubr.bf16.gmra.mxu0 %v2184
    %v2220 = vpop.f32.mrf.mxu0
    %v2221 = vadd.f32 0.0, %v2220
    %v2222 = vpop.f32.mrf.mxu0
    %v2223 = vpop.f32.mrf.mxu0
    %v2224 = vpop.f32.mrf.mxu0
    %2225 = vdwg.mxu0
    %v2226 = vadd.f32 %v2178, %v2221
    %v2227 = vxor.u32 %v2226, 2147483648
    %v2228 = vmul.f32 %v2227, 1.442695
    %v2229 = vpow.pop %v2228
    %v2230 = vadd.f32 %v2229, 1.0
    %v2231 = vrcp.pop %v2230
    %v2232 = vmul.f32 1.0, %v2231
    %v2233 = vadd.f32 %v2221, %v1084
    %2235 = vrot.lane.b32.xlu0 %v2233, 64
    %v2236 = vpop.permute.xlu0 %2235
    %v2238 = vmul.f32 %v2232, %v2236
    %2240 = vrot.lane.b32.xlu0 %v2238, 64
    %v2241 = vpop.permute.xlu0 %2240
    %v2243 = vadd.f32 %v2178, %v2241
    %v2244 = vtanh.pop %v2243
    %v2245 = vsub.f32 1.0, %v2232
    %2247 = vrot.lane.b32.xlu0 %v2244, 96
    %v2248 = vpop.permute.xlu0 %2247
    %v2250 = vmul.f32 %v2245, %v2248
    %v2251 = vmul.f32 %v2232, %v2170
    %v2252 = vadd.f32 %v2250, %v2251
    %2254 = vrot.lane.b32.xlu0 %v2252, 96
    %v2255 = vpop.permute.xlu0 %2254
    %s2257 = scalar_lea.vmem [#allocation3], 112
    %2258 = vst.msk [vmem:[%s2257] sm:$0xff] %vm872, %v2255
    %s2259 = scalar_lea.vmem [#allocation2], 120
    %v2260 = vld [vmem:[%s2259] sm:$0xff]
    %v2261 = vpack.c.bf16 %v2252, %v2252
    %2263 = vrot.lane.b32.xlu0 %v2261, 96
    %v2264 = vpop.permute.xlu0 %2263
    %v2266 = vsel %vm872, %v2264, 0
    %2268 = vmatprep.subr.bf16.mxu0 0
    %2269 = vmatpush1.bf16.msra.mxu0 0
    %2270 = vmatprep.subr.bf16.mxu0 0
    %2271 = vmatpush1.bf16.msra.mxu0 0
    %2272 = vmatprep.subr.bf16.mxu0 0
    %2273 = vmatpush1.bf16.msra.mxu0 0
    %2274 = vmatprep.subr.bf16.mxu0 0
    %2275 = vmatpush1.bf16.msra.mxu0 0
    %2276 = vmatprep.subr.bf16.mxu0 0
    %2277 = vmatpush1.bf16.msra.mxu0 0
    %2278 = vmatprep.subr.bf16.mxu0 0
    %2279 = vmatpush1.bf16.msra.mxu0 0
    %2280 = vmatprep.subr.bf16.mxu0 0
    %2281 = vmatpush1.bf16.msra.mxu0 %v1026
    %2282 = vmatprep.subr.bf16.mxu0 0
    %2283 = vmatpush1.bf16.msra.mxu0 %v1025
    %2284 = vmatprep.subr.bf16.mxu0 0
    %2285 = vmatpush2.bf16.msra.mxu0 0
    %2286 = vmatprep.subr.bf16.mxu0 0
    %2287 = vmatpush2.bf16.msra.mxu0 0
    %2288 = vmatprep.subr.bf16.mxu0 0
    %2289 = vmatpush2.bf16.msra.mxu0 0
    %2290 = vmatprep.subr.bf16.mxu0 0
    %2291 = vmatpush2.bf16.msra.mxu0 0
    %2292 = vmatprep.subr.bf16.mxu0 0
    %2293 = vmatpush2.bf16.msra.mxu0 0
    %2294 = vmatprep.subr.bf16.mxu0 0
    %2295 = vmatpush2.bf16.msra.mxu0 0
    %2296 = vmatprep.subr.bf16.mxu0 0
    %2297 = vmatpush2.bf16.msra.mxu0 0
    %2298 = vmatprep.subr.bf16.mxu0 0
    %2299 = vmatpush2.bf16.msra.mxu0 0
    %2300 = vmatprep.mubr.bf16.mxu0 0
    %2301 = vmatmul.mubr.bf16.gmra.mxu0 %v2266
    %v2302 = vpop.f32.mrf.mxu0
    %v2303 = vadd.f32 0.0, %v2302
    %v2304 = vpop.f32.mrf.mxu0
    %v2305 = vpop.f32.mrf.mxu0
    %v2306 = vpop.f32.mrf.mxu0
    %2307 = vdwg.mxu0
    %v2308 = vadd.f32 %v2260, %v2303
    %v2309 = vxor.u32 %v2308, 2147483648
    %v2310 = vmul.f32 %v2309, 1.442695
    %v2311 = vpow.pop %v2310
    %v2312 = vadd.f32 %v2311, 1.0
    %v2313 = vrcp.pop %v2312
    %v2314 = vmul.f32 1.0, %v2313
    %v2315 = vadd.f32 %v2303, %v1084
    %2317 = vrot.lane.b32.xlu0 %v2315, 64
    %v2318 = vpop.permute.xlu0 %2317
    %v2320 = vmul.f32 %v2314, %v2318
    %2322 = vrot.lane.b32.xlu0 %v2320, 64
    %v2323 = vpop.permute.xlu0 %2322
    %v2325 = vadd.f32 %v2260, %v2323
    %v2326 = vtanh.pop %v2325
    %v2327 = vsub.f32 1.0, %v2314
    %2329 = vrot.lane.b32.xlu0 %v2326, 96
    %v2330 = vpop.permute.xlu0 %2329
    %v2332 = vmul.f32 %v2327, %v2330
    %v2333 = vmul.f32 %v2314, %v2252
    %v2334 = vadd.f32 %v2332, %v2333
    %2336 = vrot.lane.b32.xlu0 %v2334, 96
    %v2337 = vpop.permute.xlu0 %2336
    %s2339 = scalar_lea.vmem [#allocation3], 120
    %2340 = vst.msk [vmem:[%s2339] sm:$0xff] %vm872, %v2337
    %v2341 = vld [vmem:[#allocation3] sm:$0xff]
    %v2342 = vld [vmem:[#allocation3 + $0x8] sm:$0xff]
    %v2343 = vld [vmem:[#allocation3 + $0x10] sm:$0xff]
    %v2344 = vld [vmem:[#allocation3 + $0x18] sm:$0xff]
    %v2345 = vld [vmem:[#allocation3 + $0x20] sm:$0xff]
    %v2346 = vld [vmem:[#allocation3 + $0x28] sm:$0xff]
    %v2347 = vld [vmem:[#allocation3 + $0x30] sm:$0xff]
    %v2348 = vld [vmem:[#allocation3 + $0x38] sm:$0xff]
    %v2349 = vld [vmem:[#allocation3 + $0x40] sm:$0xff]
    %v2350 = vld [vmem:[#allocation3 + $0x48] sm:$0xff]
    %v2351 = vld [vmem:[#allocation3 + $0x50] sm:$0xff]
    %v2352 = vld [vmem:[#allocation3 + $0x58] sm:$0xff]
    %v2353 = vld [vmem:[#allocation3 + $0x60] sm:$0xff]
    %v2354 = vld [vmem:[#allocation3 + $0x68] sm:$0xff]
    %v2355 = vld [vmem:[#allocation3 + $0x70] sm:$0xff]
    %v2356 = vld [vmem:[#allocation3 + $0x78] sm:$0xff]
    %v2357 = vpack.c.bf16 %v2342, %v2341
    %v2358 = vpack.c.bf16 %v2344, %v2343
    %v2359 = vpack.c.bf16 %v2346, %v2345
    %v2360 = vpack.c.bf16 %v2348, %v2347
    %v2361 = vpack.c.bf16 %v2350, %v2349
    %v2362 = vpack.c.bf16 %v2352, %v2351
    %v2363 = vpack.c.bf16 %v2354, %v2353
    %v2364 = vpack.c.bf16 %v2356, %v2355
    %v2365 = vld [vmem:[%s9] sm:$0xf]
    %v2366 = vld [vmem:[%s9 + $0x4] sm:$0xf]
    %v2367 = vld [vmem:[%s9 + $0x8] sm:$0xf]
    %v2368 = vld [vmem:[%s9 + $0xc] sm:$0xf]
    %v2369 = vld [vmem:[%s10] sm:$0x1]
    %v2371 = vlaneseq
    %v2372 = vshrl.u32 %v2371, 7
    %v2373 = vsub.s32 0, %v2372
    %v2374 = vrot.slane %v2369, %v2373
    %v2380 = vunpack.c.l.b16 %v2365
    %v2381 = vunpack.c.l.b16 %v2366
    %v2382 = vunpack.c.l.b16 %v2367
    %v2383 = vunpack.c.l.b16 %v2368
    %v2384 = vpack.c.b16 %v2381, %v2380
    %v2385 = vpack.c.b16 %v2383, %v2382
    %v2389 = vsel %vm872, %v2357, 0
    %v2392 = vsel %vm872, %v2358, 0
    %v2395 = vsel %vm872, %v2359, 0
    %v2398 = vsel %vm872, %v2360, 0
    %v2401 = vsel %vm872, %v2361, 0
    %v2404 = vsel %vm872, %v2362, 0
    %v2407 = vsel %vm872, %v2363, 0
    %v2410 = vsel %vm872, %v2364, 0
    %2412 = vmatprep.subr.bf16.mxu0 0
    %2413 = vmatpush1.bf16.msra.mxu0 0
    %2414 = vmatprep.subr.bf16.mxu0 0
    %2415 = vmatpush1.bf16.msra.mxu0 0
    %2416 = vmatprep.subr.bf16.mxu0 0
    %2417 = vmatpush1.bf16.msra.mxu0 0
    %2418 = vmatprep.subr.bf16.mxu0 0
    %2419 = vmatpush1.bf16.msra.mxu0 0
    %2420 = vmatprep.subr.bf16.mxu0 0
    %2421 = vmatpush1.bf16.msra.mxu0 0
    %2422 = vmatprep.subr.bf16.mxu0 0
    %2423 = vmatpush1.bf16.msra.mxu0 0
    %2424 = vmatprep.subr.bf16.mxu0 0
    %2425 = vmatpush1.bf16.msra.mxu0 %v2385
    %2426 = vmatprep.subr.bf16.mxu0 0
    %2427 = vmatpush1.bf16.msra.mxu0 %v2384
    %2428 = vmatprep.subr.bf16.mxu0 0
    %2429 = vmatpush2.bf16.msra.mxu0 0
    %2430 = vmatprep.subr.bf16.mxu0 0
    %2431 = vmatpush2.bf16.msra.mxu0 0
    %2432 = vmatprep.subr.bf16.mxu0 0
    %2433 = vmatpush2.bf16.msra.mxu0 0
    %2434 = vmatprep.subr.bf16.mxu0 0
    %2435 = vmatpush2.bf16.msra.mxu0 0
    %2436 = vmatprep.subr.bf16.mxu0 0
    %2437 = vmatpush2.bf16.msra.mxu0 0
    %2438 = vmatprep.subr.bf16.mxu0 0
    %2439 = vmatpush2.bf16.msra.mxu0 0
    %2440 = vmatprep.subr.bf16.mxu0 0
    %2441 = vmatpush2.bf16.msra.mxu0 0
    %2442 = vmatprep.subr.bf16.mxu0 0
    %2443 = vmatpush2.bf16.msra.mxu0 0
    %2444 = vmatprep.mubr.bf16.mxu0 0
    %2445 = vmatmul.mubr.bf16.gmra.mxu0 %v2389
    %v2446 = vpop.f32.mrf.mxu0
    %v2447 = vadd.f32 %v2374, %v2446
    %v2448 = vpop.f32.mrf.mxu0
    %v2449 = vpop.f32.mrf.mxu0
    %v2450 = vadd.f32 %v2374, %v2449
    %v2451 = vpop.f32.mrf.mxu0
    %2452 = vmatprep.mubr.bf16.mxu0 0
    %2453 = vmatmul.mubr.bf16.gmra.mxu0 %v2392
    %v2454 = vpop.f32.mrf.mxu0
    %v2455 = vadd.f32 %v2374, %v2454
    %v2456 = vpop.f32.mrf.mxu0
    %v2457 = vpop.f32.mrf.mxu0
    %v2458 = vadd.f32 %v2374, %v2457
    %v2459 = vpop.f32.mrf.mxu0
    %2460 = vmatprep.mubr.bf16.mxu0 0
    %2461 = vmatmul.mubr.bf16.gmra.mxu0 %v2395
    %v2462 = vpop.f32.mrf.mxu0
    %v2463 = vadd.f32 %v2374, %v2462
    %v2464 = vpop.f32.mrf.mxu0
    %v2465 = vpop.f32.mrf.mxu0
    %v2466 = vadd.f32 %v2374, %v2465
    %v2467 = vpop.f32.mrf.mxu0
    %2468 = vmatprep.mubr.bf16.mxu0 0
    %2469 = vmatmul.mubr.bf16.gmra.mxu0 %v2398
    %v2470 = vpop.f32.mrf.mxu0
    %v2471 = vadd.f32 %v2374, %v2470
    %v2472 = vpop.f32.mrf.mxu0
    %v2473 = vpop.f32.mrf.mxu0
    %v2474 = vadd.f32 %v2374, %v2473
    %v2475 = vpop.f32.mrf.mxu0
    %2476 = vmatprep.mubr.bf16.mxu0 0
    %2477 = vmatmul.mubr.bf16.gmra.mxu0 %v2401
    %v2478 = vpop.f32.mrf.mxu0
    %v2479 = vadd.f32 %v2374, %v2478
    %v2480 = vpop.f32.mrf.mxu0
    %v2481 = vpop.f32.mrf.mxu0
    %v2482 = vadd.f32 %v2374, %v2481
    %v2483 = vpop.f32.mrf.mxu0
    %2484 = vmatprep.mubr.bf16.mxu0 0
    %2485 = vmatmul.mubr.bf16.gmra.mxu0 %v2404
    %v2486 = vpop.f32.mrf.mxu0
    %v2487 = vadd.f32 %v2374, %v2486
    %v2488 = vpop.f32.mrf.mxu0
    %v2489 = vpop.f32.mrf.mxu0
    %v2490 = vadd.f32 %v2374, %v2489
    %v2491 = vpop.f32.mrf.mxu0
    %2492 = vmatprep.mubr.bf16.mxu0 0
    %2493 = vmatmul.mubr.bf16.gmra.mxu0 %v2407
    %v2494 = vpop.f32.mrf.mxu0
    %v2495 = vadd.f32 %v2374, %v2494
    %v2496 = vpop.f32.mrf.mxu0
    %v2497 = vpop.f32.mrf.mxu0
    %v2498 = vadd.f32 %v2374, %v2497
    %v2499 = vpop.f32.mrf.mxu0
    %2500 = vmatprep.mubr.bf16.mxu0 0
    %2501 = vmatmul.mubr.bf16.gmra.mxu0 %v2410
    %v2502 = vpop.f32.mrf.mxu0
    %v2503 = vadd.f32 %v2374, %v2502
    %v2504 = vpop.f32.mrf.mxu0
    %v2505 = vpop.f32.mrf.mxu0
    %v2506 = vadd.f32 %v2374, %v2505
    %v2507 = vpop.f32.mrf.mxu0
    %2508 = vdwg.mxu0
    %v2509 = vld [vmem:[%s11] sm:$0x1]
    %v2511 = vlaneseq
    %v2512 = vshrl.u32 %v2511, 7
    %v2513 = vsub.s32 0, %v2512
    %v2514 = vrot.slane %v2509, %v2513
    %v2516 = vmul.f32 %v2447, %v2514
    %v2517 = vmul.f32 %v2450, %v2514
    %v2518 = vmul.f32 %v2455, %v2514
    %v2519 = vmul.f32 %v2458, %v2514
    %v2520 = vmul.f32 %v2463, %v2514
    %v2521 = vmul.f32 %v2466, %v2514
    %v2522 = vmul.f32 %v2471, %v2514
    %v2523 = vmul.f32 %v2474, %v2514
    %v2524 = vmul.f32 %v2479, %v2514
    %v2525 = vmul.f32 %v2482, %v2514
    %v2526 = vmul.f32 %v2487, %v2514
    %v2527 = vmul.f32 %v2490, %v2514
    %v2528 = vmul.f32 %v2495, %v2514
    %v2529 = vmul.f32 %v2498, %v2514
    %v2530 = vmul.f32 %v2503, %v2514
    %v2531 = vmul.f32 %v2506, %v2514
    %v2532 = vsel %vm872, %v2516, 0.0
    %2533 = vadd.xlane.f32.xlu0 %v2532
    %v2534 = vpop.xlane.xlu0 %2533
    %v2535 = vsel %vm872, %v2517, 0.0
    %2536 = vadd.xlane.f32.xlu0 %v2535
    %v2537 = vpop.xlane.xlu0 %2536
    %v2538 = vsel %vm872, %v2518, 0.0
    %2539 = vadd.xlane.f32.xlu0 %v2538
    %v2540 = vpop.xlane.xlu0 %2539
    %v2541 = vsel %vm872, %v2519, 0.0
    %2542 = vadd.xlane.f32.xlu0 %v2541
    %v2543 = vpop.xlane.xlu0 %2542
    %v2544 = vsel %vm872, %v2520, 0.0
    %2545 = vadd.xlane.f32.xlu0 %v2544
    %v2546 = vpop.xlane.xlu0 %2545
    %v2547 = vsel %vm872, %v2521, 0.0
    %2548 = vadd.xlane.f32.xlu0 %v2547
    %v2549 = vpop.xlane.xlu0 %2548
    %v2550 = vsel %vm872, %v2522, 0.0
    %2551 = vadd.xlane.f32.xlu0 %v2550
    %v2552 = vpop.xlane.xlu0 %2551
    %v2553 = vsel %vm872, %v2523, 0.0
    %2554 = vadd.xlane.f32.xlu0 %v2553
    %v2555 = vpop.xlane.xlu0 %2554
    %v2556 = vsel %vm872, %v2524, 0.0
    %2557 = vadd.xlane.f32.xlu0 %v2556
    %v2558 = vpop.xlane.xlu0 %2557
    %v2559 = vsel %vm872, %v2525, 0.0
    %2560 = vadd.xlane.f32.xlu0 %v2559
    %v2561 = vpop.xlane.xlu0 %2560
    %v2562 = vsel %vm872, %v2526, 0.0
    %2563 = vadd.xlane.f32.xlu0 %v2562
    %v2564 = vpop.xlane.xlu0 %2563
    %v2565 = vsel %vm872, %v2527, 0.0
    %2566 = vadd.xlane.f32.xlu0 %v2565
    %v2567 = vpop.xlane.xlu0 %2566
    %v2568 = vsel %vm872, %v2528, 0.0
    %2569 = vadd.xlane.f32.xlu0 %v2568
    %v2570 = vpop.xlane.xlu0 %2569
    %v2571 = vsel %vm872, %v2529, 0.0
    %2572 = vadd.xlane.f32.xlu0 %v2571
    %v2573 = vpop.xlane.xlu0 %2572
    %v2574 = vsel %vm872, %v2530, 0.0
    %2575 = vadd.xlane.f32.xlu0 %v2574
    %v2576 = vpop.xlane.xlu0 %2575
    %v2577 = vsel %vm872, %v2531, 0.0
    %2578 = vadd.xlane.f32.xlu0 %v2577
    %v2579 = vpop.xlane.xlu0 %2578
    %v2580 = vld [vmem:[#allocation4] sm:$0x1]
    %v2582 = vlaneseq
    %v2583 = vshrl.u32 %v2582, 7
    %v2584 = vsub.s32 0, %v2583
    %v2585 = vrot.slane %v2580, %v2584
    %2586 = vset.pattern.permute.xlu0 0
    %2587 = vperm.xlu0 %2586, %v2585
    %v2588 = vpop.permute.xlu0 %2587
    %v2590 = vadd.f32 %v2534, %v2588
    %v2591 = vadd.f32 %v2537, %v2588
    %v2592 = vadd.f32 %v2540, %v2588
    %v2593 = vadd.f32 %v2543, %v2588
    %v2594 = vadd.f32 %v2546, %v2588
    %v2595 = vadd.f32 %v2549, %v2588
    %v2596 = vadd.f32 %v2552, %v2588
    %v2597 = vadd.f32 %v2555, %v2588
    %v2598 = vadd.f32 %v2558, %v2588
    %v2599 = vadd.f32 %v2561, %v2588
    %v2600 = vadd.f32 %v2564, %v2588
    %v2601 = vadd.f32 %v2567, %v2588
    %v2602 = vadd.f32 %v2570, %v2588
    %v2603 = vadd.f32 %v2573, %v2588
    %v2604 = vadd.f32 %v2576, %v2588
    %v2605 = vadd.f32 %v2579, %v2588
    %v2622 = vlaneseq
    %v2623 = vand.u32 %v2622, 127
    %v2624 = vlaneseq
    %v2625 = vshrl.u32 %v2624, 7
    %v2626 = vsub.s32 %v2623, %v2625
    %v2627 = vrot.slane %v2590, %v2626
    %v2628 = vlaneseq
    %v2629 = vshrl.u32 %v2628, 7
    %v2630 = vsub.s32 %v2623, %v2629
    %v2631 = vrot.slane %v2591, %v2630
    %v2632 = vlaneseq
    %v2633 = vshrl.u32 %v2632, 7
    %v2634 = vsub.s32 %v2623, %v2633
    %v2635 = vrot.slane %v2592, %v2634
    %v2636 = vlaneseq
    %v2637 = vshrl.u32 %v2636, 7
    %v2638 = vsub.s32 %v2623, %v2637
    %v2639 = vrot.slane %v2593, %v2638
    %v2640 = vlaneseq
    %v2641 = vshrl.u32 %v2640, 7
    %v2642 = vsub.s32 %v2623, %v2641
    %v2643 = vrot.slane %v2594, %v2642
    %v2644 = vlaneseq
    %v2645 = vshrl.u32 %v2644, 7
    %v2646 = vsub.s32 %v2623, %v2645
    %v2647 = vrot.slane %v2595, %v2646
    %v2648 = vlaneseq
    %v2649 = vshrl.u32 %v2648, 7
    %v2650 = vsub.s32 %v2623, %v2649
    %v2651 = vrot.slane %v2596, %v2650
    %v2652 = vlaneseq
    %v2653 = vshrl.u32 %v2652, 7
    %v2654 = vsub.s32 %v2623, %v2653
    %v2655 = vrot.slane %v2597, %v2654
    %v2656 = vlaneseq
    %v2657 = vshrl.u32 %v2656, 7
    %v2658 = vsub.s32 %v2623, %v2657
    %v2659 = vrot.slane %v2598, %v2658
    %v2660 = vlaneseq
    %v2661 = vshrl.u32 %v2660, 7
    %v2662 = vsub.s32 %v2623, %v2661
    %v2663 = vrot.slane %v2599, %v2662
    %v2664 = vlaneseq
    %v2665 = vshrl.u32 %v2664, 7
    %v2666 = vsub.s32 %v2623, %v2665
    %v2667 = vrot.slane %v2600, %v2666
    %v2668 = vlaneseq
    %v2669 = vshrl.u32 %v2668, 7
    %v2670 = vsub.s32 %v2623, %v2669
    %v2671 = vrot.slane %v2601, %v2670
    %v2672 = vlaneseq
    %v2673 = vshrl.u32 %v2672, 7
    %v2674 = vsub.s32 %v2623, %v2673
    %v2675 = vrot.slane %v2602, %v2674
    %v2676 = vlaneseq
    %v2677 = vshrl.u32 %v2676, 7
    %v2678 = vsub.s32 %v2623, %v2677
    %v2679 = vrot.slane %v2603, %v2678
    %v2680 = vlaneseq
    %v2681 = vshrl.u32 %v2680, 7
    %v2682 = vsub.s32 %v2623, %v2681
    %v2683 = vrot.slane %v2604, %v2682
    %v2684 = vlaneseq
    %v2685 = vshrl.u32 %v2684, 7
    %v2686 = vsub.s32 %v2623, %v2685
    %v2687 = vrot.slane %v2605, %v2686
    %vm2688 = vcmask 1041409
    %v2689 = vsel %vm2688, %v2631, %v2627
    %vm2690 = vcmask 1042434
    %v2691 = vsel %vm2690, %v2635, %v2689
    %vm2692 = vcmask 1043459
    %v2693 = vsel %vm2692, %v2639, %v2691
    %vm2694 = vcmask 1044484
    %v2695 = vsel %vm2694, %v2643, %v2693
    %vm2696 = vcmask 1045509
    %v2697 = vsel %vm2696, %v2647, %v2695
    %vm2698 = vcmask 1046534
    %v2699 = vsel %vm2698, %v2651, %v2697
    %vm2700 = vcmask 1047559
    %v2701 = vsel %vm2700, %v2655, %v2699
    %v2702 = vsel %vm2688, %v2663, %v2659
    %v2703 = vsel %vm2690, %v2667, %v2702
    %v2704 = vsel %vm2692, %v2671, %v2703
    %v2705 = vsel %vm2694, %v2675, %v2704
    %v2706 = vsel %vm2696, %v2679, %v2705
    %v2707 = vsel %vm2698, %v2683, %v2706
    %v2708 = vsel %vm2700, %v2687, %v2707
    %2711 = vxpose.xlu0.b32.start [1/16] %v2701, 128
    %2712 = vxpose.xlu0.b32.cont [2/16] %v2708, 128
    %2713 = vxpose.xlu0.b32.cont [3/16] 0.0, 128
    %2714 = vxpose.xlu0.b32.cont [4/16] 0.0, 128
    %2715 = vxpose.xlu0.b32.cont [5/16] 0.0, 128
    %2716 = vxpose.xlu0.b32.cont [6/16] 0.0, 128
    %2717 = vxpose.xlu0.b32.cont [7/16] 0.0, 128
    %2718 = vxpose.xlu0.b32.cont [8/16] 0.0, 128
    %2719 = vxpose.xlu0.b32.cont [9/16] 0.0, 128
    %2720 = vxpose.xlu0.b32.cont [10/16] 0.0, 128
    %2721 = vxpose.xlu0.b32.cont [11/16] 0.0, 128
    %2722 = vxpose.xlu0.b32.cont [12/16] 0.0, 128
    %2723 = vxpose.xlu0.b32.cont [13/16] 0.0, 128
    %2724 = vxpose.xlu0.b32.cont [14/16] 0.0, 128
    %2725 = vxpose.xlu0.b32.cont [15/16] 0.0, 128
    %2726 = vxpose.xlu0.b32.end [16/16] 0.0, 128
    %v2727 = vpop.trf.xlu0
    %v2728 = vpop.trf.xlu0
    %v2729 = vpop.trf.xlu0
    %v2730 = vpop.trf.xlu0
    %v2731 = vpop.trf.xlu0
    %v2732 = vpop.trf.xlu0
    %v2733 = vpop.trf.xlu0
    %v2734 = vpop.trf.xlu0
    %v2735 = vpop.trf.xlu0
    %v2736 = vpop.trf.xlu0
    %v2737 = vpop.trf.xlu0
    %v2738 = vpop.trf.xlu0
    %v2739 = vpop.trf.xlu0
    %v2740 = vpop.trf.xlu0
    %v2741 = vpop.trf.xlu0
    %v2742 = vpop.trf.xlu0
    %vm2743 = vcmask 130048
    %v2744 = vsel %vm2743, %v2727, -inf
    %2745 = vmax.xlane.f32.xlu0 %v2744
    %v2746 = vpop.xlane.xlu0 %2745
    %v2747 = vsub.f32 %v2727, %v2746
    %v2748 = vmul.f32 %v2747, 1.442695
    %v2749 = vpow.pop %v2748
    %v2750 = vsel %vm2743, %v2749, 0.0
    %2751 = vadd.xlane.f32.xlu0 %v2750
    %v2752 = vpop.xlane.xlu0 %2751
    %v2753 = vrcp.pop %v2752
    %v2754 = vmul.f32 %v2749, %v2753
    %2755 = vxpose.xlu0.b32.start [1/16] %v2754, 128
    %2756 = vxpose.xlu0.b32.cont [2/16] 0.0, 128
    %2757 = vxpose.xlu0.b32.cont [3/16] 0.0, 128
    %2758 = vxpose.xlu0.b32.cont [4/16] 0.0, 128
    %2759 = vxpose.xlu0.b32.cont [5/16] 0.0, 128
    %2760 = vxpose.xlu0.b32.cont [6/16] 0.0, 128
    %2761 = vxpose.xlu0.b32.cont [7/16] 0.0, 128
    %2762 = vxpose.xlu0.b32.cont [8/16] 0.0, 128
    %2763 = vxpose.xlu0.b32.cont [9/16] 0.0, 128
    %2764 = vxpose.xlu0.b32.cont [10/16] 0.0, 128
    %2765 = vxpose.xlu0.b32.cont [11/16] 0.0, 128
    %2766 = vxpose.xlu0.b32.cont [12/16] 0.0, 128
    %2767 = vxpose.xlu0.b32.cont [13/16] 0.0, 128
    %2768 = vxpose.xlu0.b32.cont [14/16] 0.0, 128
    %2769 = vxpose.xlu0.b32.cont [15/16] 0.0, 128
    %2770 = vxpose.xlu0.b32.end [16/16] 0.0, 128
    %v2771 = vpop.trf.xlu0
    %v2772 = vpop.trf.xlu0
    %v2773 = vpop.trf.xlu0
    %v2774 = vpop.trf.xlu0
    %v2775 = vpop.trf.xlu0
    %v2776 = vpop.trf.xlu0
    %v2777 = vpop.trf.xlu0
    %v2778 = vpop.trf.xlu0
    %v2779 = vpop.trf.xlu0
    %v2780 = vpop.trf.xlu0
    %v2781 = vpop.trf.xlu0
    %v2782 = vpop.trf.xlu0
    %v2783 = vpop.trf.xlu0
    %v2784 = vpop.trf.xlu0
    %v2785 = vpop.trf.xlu0
    %v2786 = vpop.trf.xlu0
    %v2787 = vlaneseq
    %v2788 = vshrl.u32 %v2787, 7
    %v2789 = vsub.s32 0, %v2788
    %v2790 = vrot.slane %v2771, %v2789
    %2792 = vbcast.lane.b32.xlu0 %v2790, 256
    %v2793 = vpop.permute.xlu0 %2792
    %v2794 = vlaneseq
    %v2795 = vshrl.u32 %v2794, 7
    %v2796 = vsub.s32 1, %v2795
    %v2797 = vrot.slane %v2771, %v2796
    %2799 = vbcast.lane.b32.xlu0 %v2797, 256
    %v2800 = vpop.permute.xlu0 %2799
    %v2801 = vlaneseq
    %v2802 = vshrl.u32 %v2801, 7
    %v2803 = vsub.s32 2, %v2802
    %v2804 = vrot.slane %v2771, %v2803
    %2806 = vbcast.lane.b32.xlu0 %v2804, 256
    %v2807 = vpop.permute.xlu0 %2806
    %v2808 = vlaneseq
    %v2809 = vshrl.u32 %v2808, 7
    %v2810 = vsub.s32 3, %v2809
    %v2811 = vrot.slane %v2771, %v2810
    %2813 = vbcast.lane.b32.xlu0 %v2811, 256
    %v2814 = vpop.permute.xlu0 %2813
    %v2815 = vlaneseq
    %v2816 = vshrl.u32 %v2815, 7
    %v2817 = vsub.s32 4, %v2816
    %v2818 = vrot.slane %v2771, %v2817
    %2820 = vbcast.lane.b32.xlu0 %v2818, 256
    %v2821 = vpop.permute.xlu0 %2820
    %v2822 = vlaneseq
    %v2823 = vshrl.u32 %v2822, 7
    %v2824 = vsub.s32 5, %v2823
    %v2825 = vrot.slane %v2771, %v2824
    %2827 = vbcast.lane.b32.xlu0 %v2825, 256
    %v2828 = vpop.permute.xlu0 %2827
    %v2829 = vlaneseq
    %v2830 = vshrl.u32 %v2829, 7
    %v2831 = vsub.s32 6, %v2830
    %v2832 = vrot.slane %v2771, %v2831
    %2834 = vbcast.lane.b32.xlu0 %v2832, 256
    %v2835 = vpop.permute.xlu0 %2834
    %v2836 = vlaneseq
    %v2837 = vshrl.u32 %v2836, 7
    %v2838 = vsub.s32 7, %v2837
    %v2839 = vrot.slane %v2771, %v2838
    %2841 = vbcast.lane.b32.xlu0 %v2839, 256
    %v2842 = vpop.permute.xlu0 %2841
    %v2843 = vlaneseq
    %v2844 = vshrl.u32 %v2843, 7
    %v2845 = vsub.s32 0, %v2844
    %v2846 = vrot.slane %v2772, %v2845
    %2848 = vbcast.lane.b32.xlu0 %v2846, 256
    %v2849 = vpop.permute.xlu0 %2848
    %v2850 = vlaneseq
    %v2851 = vshrl.u32 %v2850, 7
    %v2852 = vsub.s32 1, %v2851
    %v2853 = vrot.slane %v2772, %v2852
    %2855 = vbcast.lane.b32.xlu0 %v2853, 256
    %v2856 = vpop.permute.xlu0 %2855
    %v2857 = vlaneseq
    %v2858 = vshrl.u32 %v2857, 7
    %v2859 = vsub.s32 2, %v2858
    %v2860 = vrot.slane %v2772, %v2859
    %2862 = vbcast.lane.b32.xlu0 %v2860, 256
    %v2863 = vpop.permute.xlu0 %2862
    %v2864 = vlaneseq
    %v2865 = vshrl.u32 %v2864, 7
    %v2866 = vsub.s32 3, %v2865
    %v2867 = vrot.slane %v2772, %v2866
    %2869 = vbcast.lane.b32.xlu0 %v2867, 256
    %v2870 = vpop.permute.xlu0 %2869
    %v2871 = vlaneseq
    %v2872 = vshrl.u32 %v2871, 7
    %v2873 = vsub.s32 4, %v2872
    %v2874 = vrot.slane %v2772, %v2873
    %2876 = vbcast.lane.b32.xlu0 %v2874, 256
    %v2877 = vpop.permute.xlu0 %2876
    %v2878 = vlaneseq
    %v2879 = vshrl.u32 %v2878, 7
    %v2880 = vsub.s32 5, %v2879
    %v2881 = vrot.slane %v2772, %v2880
    %2883 = vbcast.lane.b32.xlu0 %v2881, 256
    %v2884 = vpop.permute.xlu0 %2883
    %v2885 = vlaneseq
    %v2886 = vshrl.u32 %v2885, 7
    %v2887 = vsub.s32 6, %v2886
    %v2888 = vrot.slane %v2772, %v2887
    %2890 = vbcast.lane.b32.xlu0 %v2888, 256
    %v2891 = vpop.permute.xlu0 %2890
    %v2892 = vlaneseq
    %v2893 = vshrl.u32 %v2892, 7
    %v2894 = vsub.s32 7, %v2893
    %v2895 = vrot.slane %v2772, %v2894
    %2897 = vbcast.lane.b32.xlu0 %v2895, 256
    %v2898 = vpop.permute.xlu0 %2897
    %v2899 = vmul.f32 %v2793, %v2447
    %v2900 = vmul.f32 %v2800, %v2450
    %v2901 = vmul.f32 %v2807, %v2455
    %v2902 = vmul.f32 %v2814, %v2458
    %v2903 = vmul.f32 %v2821, %v2463
    %v2904 = vmul.f32 %v2828, %v2466
    %v2905 = vmul.f32 %v2835, %v2471
    %v2906 = vmul.f32 %v2842, %v2474
    %v2907 = vmul.f32 %v2849, %v2479
    %v2908 = vmul.f32 %v2856, %v2482
    %v2909 = vmul.f32 %v2863, %v2487
    %v2910 = vmul.f32 %v2870, %v2490
    %v2911 = vmul.f32 %v2877, %v2495
    %v2912 = vmul.f32 %v2884, %v2498
    %v2913 = vmul.f32 %v2891, %v2503
    %v2914 = vmul.f32 %v2898, %v2506
    %v2915 = vsel %vm872, %v2899, 0.0
    %v2916 = vsel %vm872, %v2900, 0.0
    %v2917 = vadd.f32 %v2915, %v2916
    %v2918 = vsel %vm872, %v2901, 0.0
    %v2919 = vadd.f32 %v2917, %v2918
    %v2920 = vsel %vm872, %v2902, 0.0
    %v2921 = vadd.f32 %v2919, %v2920
    %v2922 = vsel %vm872, %v2903, 0.0
    %v2923 = vadd.f32 %v2921, %v2922
    %v2924 = vsel %vm872, %v2904, 0.0
    %v2925 = vadd.f32 %v2923, %v2924
    %v2926 = vsel %vm872, %v2905, 0.0
    %v2927 = vadd.f32 %v2925, %v2926
    %v2928 = vsel %vm872, %v2906, 0.0
    %v2929 = vadd.f32 %v2927, %v2928
    %v2930 = vsel %vm872, %v2907, 0.0
    %v2931 = vadd.f32 %v2929, %v2930
    %v2932 = vsel %vm872, %v2908, 0.0
    %v2933 = vadd.f32 %v2931, %v2932
    %v2934 = vsel %vm872, %v2909, 0.0
    %v2935 = vadd.f32 %v2933, %v2934
    %v2936 = vsel %vm872, %v2910, 0.0
    %v2937 = vadd.f32 %v2935, %v2936
    %v2938 = vsel %vm872, %v2911, 0.0
    %v2939 = vadd.f32 %v2937, %v2938
    %v2940 = vsel %vm872, %v2912, 0.0
    %v2941 = vadd.f32 %v2939, %v2940
    %v2942 = vsel %vm872, %v2913, 0.0
    %v2943 = vadd.f32 %v2941, %v2942
    %v2944 = vsel %vm872, %v2914, 0.0
    %v2945 = vadd.f32 %v2943, %v2944
    %v2946 = vpack.c.bf16 %v2945, %v2945
    %v2947 = vld [vmem:[#allocation14] sm:$0xf]
    %v2948 = vld [vmem:[#allocation14 + $0x4] sm:$0xf]
    %v2949 = vld [vmem:[#allocation14 + $0x8] sm:$0xf]
    %v2950 = vld [vmem:[#allocation14 + $0xc] sm:$0xf]
    %v2951 = vld [vmem:[%s14] sm:$0x1]
    %v2953 = vlaneseq
    %v2954 = vshrl.u32 %v2953, 7
    %v2955 = vsub.s32 0, %v2954
    %v2956 = vrot.slane %v2951, %v2955
    %v2962 = vunpack.c.l.b16 %v2947
    %v2963 = vunpack.c.l.b16 %v2948
    %v2964 = vunpack.c.l.b16 %v2949
    %v2965 = vunpack.c.l.b16 %v2950
    %v2966 = vpack.c.b16 %v2963, %v2962
    %v2967 = vpack.c.b16 %v2965, %v2964
    %v2971 = vsel %vm872, %v2946, 0
    %2973 = vmatprep.subr.bf16.mxu0 0
    %2974 = vmatpush1.bf16.msra.mxu0 0
    %2975 = vmatprep.subr.bf16.mxu0 0
    %2976 = vmatpush1.bf16.msra.mxu0 0
    %2977 = vmatprep.subr.bf16.mxu0 0
    %2978 = vmatpush1.bf16.msra.mxu0 0
    %2979 = vmatprep.subr.bf16.mxu0 0
    %2980 = vmatpush1.bf16.msra.mxu0 0
    %2981 = vmatprep.subr.bf16.mxu0 0
    %2982 = vmatpush1.bf16.msra.mxu0 0
    %2983 = vmatprep.subr.bf16.mxu0 0
    %2984 = vmatpush1.bf16.msra.mxu0 0
    %2985 = vmatprep.subr.bf16.mxu0 0
    %2986 = vmatpush1.bf16.msra.mxu0 %v2967
    %2987 = vmatprep.subr.bf16.mxu0 0
    %2988 = vmatpush1.bf16.msra.mxu0 %v2966
    %2989 = vmatprep.subr.bf16.mxu0 0
    %2990 = vmatpush2.bf16.msra.mxu0 0
    %2991 = vmatprep.subr.bf16.mxu0 0
    %2992 = vmatpush2.bf16.msra.mxu0 0
    %2993 = vmatprep.subr.bf16.mxu0 0
    %2994 = vmatpush2.bf16.msra.mxu0 0
    %2995 = vmatprep.subr.bf16.mxu0 0
    %2996 = vmatpush2.bf16.msra.mxu0 0
    %2997 = vmatprep.subr.bf16.mxu0 0
    %2998 = vmatpush2.bf16.msra.mxu0 0
    %2999 = vmatprep.subr.bf16.mxu0 0
    %3000 = vmatpush2.bf16.msra.mxu0 0
    %3001 = vmatprep.subr.bf16.mxu0 0
    %3002 = vmatpush2.bf16.msra.mxu0 0
    %3003 = vmatprep.subr.bf16.mxu0 0
    %3004 = vmatpush2.bf16.msra.mxu0 0
    %3005 = vmatprep.mubr.bf16.mxu0 0
    %3006 = vmatmul.mubr.bf16.gmra.mxu0 %v2971
    %v3007 = vpop.f32.mrf.mxu0
    %v3008 = vadd.f32 %v2956, %v3007
    %v3009 = vpop.f32.mrf.mxu0
    %v3010 = vpop.f32.mrf.mxu0
    %v3011 = vpop.f32.mrf.mxu0
    %3012 = vdwg.mxu0
    %3013 = vst [vmem:[#allocation16] sm:$0xff] %v3008
    // Predicated region
    $region86: #{tpu_custom_call.1} parent=1 // pred_check
      _
    $region87: #{tpu_custom_call.1} parent=1 // pred_check_branch
      %3015 = sbr.rel (0) target = $region89
    $region88: #{tpu_custom_call.1} parent=1 // pred_region
      %s3017 = ssub.s32 128, 128
      %3018 = vsyncadd [#allocation7], %s3017
      %s3020 = sshll.u32 [#allocation16], 4
      %s3021 = int_to_ptr.vmem [resolvable:$true] %s3020
      %3023 = dma.vmem_to_hbm [thread:$0]  %s3021, 128, %s15, [#allocation7]
    $region89: #{tpu_custom_call.1} parent=1 // pred_fallthru
      _
    // Predicated region
    $region90: #{tpu_custom_call.1} parent=1 // pred_check
      _
    $region91: #{tpu_custom_call.1} parent=1 // pred_check_branch
      %3025 = sbr.rel (0) target = $region93
    $region92: #{tpu_custom_call.1} parent=1 // pred_region
      %3026 = dma.done [#allocation7], 128
    $region93: #{tpu_custom_call.1} parent=1 // pred_fallthru
      _
    %3027 = vsyncpa [#allocation6], 1
    %3028 = vsyncpa [#allocation9], 1
    %3029 = vsyncpa [#allocation12], 1
    %3030 = vsyncpa [#allocation15], 1
    %3031 = vsyncpa [#allocation7], 1

</llo_original>
